<compile_context>
chip_gen: v6e
topology: v6e:2x2x1
jax: 0.10.0
libtpu: 0.0.40
codegen_flags: <defaults>
</compile_context>

<pallas_src>
import functools

import jax
import jax.numpy as jnp
import numpy as np
from jax.experimental import pallas as pl
from jax.experimental.pallas import tpu as pltpu


def _round_up(n, m):
    return ((n + m - 1) // m) * m


def _relu(v):
    return jnp.maximum(v, 0.0)


# --------------------------------------------------------------------------- kernel
def fsnet_kernel(x_ref, xsel_ref, ww_ref, wn_ref, b_ref, out_ref, *,
                 meta, dims, compute_dtype, act_dtype):
    f32 = jnp.float32
    cd = compute_dtype
    ad = act_dtype
    wrefs = (ww_ref, wn_ref)        # 0 = wide (fused) slab, 1 = narrow slab

    def gdot(lhs, name):
        # one fused MXU dot per group; f32 accumulate + f32 bias, then act dtype
        g = meta[name]
        w = wrefs[g['slab']][g['row']:g['row'] + g['kp'], 0:g['npad']]
        r = (jnp.dot(lhs, w, preferred_element_type=f32)
             + b_ref[g['brow']:g['brow'] + 1, 0:g['npad']])
        return r.astype(ad)

    def col(res, name, j):
        # lane-aligned (128-multiple) column window of a fused-group result
        off, w = meta[name]['cols'][j]
        return res[:, off:off + w]

    def store(section, val):
        # unmasked, lane-aligned, 128-multiple-wide store (early, shortens liveness)
        off, w = dims[section]
        out_ref[:, off:off + w] = val.astype(f32)

    x = x_ref[...]            # compute_dtype, lane-padded in the wrapper
    xsel = xsel_ref[...]      # compute_dtype, lane-padded in the wrapper

    # ---- fused x-group: [AE enc layer 1 | FSlayer representation] -------------
    gx = gdot(x, 'g_x')
    store('sec_fs', col(gx, 'g_x', 1))                 # fs_rep (no activation)
    h = _relu(col(gx, 'g_x', 0))

    # ---- AE encoder ------------------------------------------------------------
    h = _relu(gdot(h.astype(cd), 'g_e2'))
    ae = _relu(gdot(h.astype(cd), 'g_e3'))
    store('sec_ae', ae)                                # ae_rep
    ae_c = ae.astype(cd)

    # fused ae_rep-group: [dec layer 1 | resblock1 main (top) | resblock1 skip (top)]
    gae = gdot(ae_c, 'g_ae')
    # fused fs_feature-group: [resblock1 main (bottom) | resblock1 skip (bottom)]
    gfs = gdot(xsel, 'g_fs')

    # ---- AE decoder ------------------------------------------------------------
    d = _relu(col(gae, 'g_ae', 0))
    d = _relu(gdot(d.astype(cd), 'g_d2'))
    # TODO(synk): decoder output activation unknown; linear used.
    store('sec_rec', gdot(d.astype(cd), 'g_d3'))       # recon_x

    # ---- DenseResnet (2 blocks; BN/Dropout = identity, eval mode) ---------------
    b1 = _relu(col(gae, 'g_ae', 1) + col(gfs, 'g_fs', 0))
    b1 = gdot(b1.astype(cd), 'g_r1b')
    r1 = _relu(b1 + col(gae, 'g_ae', 2) + col(gfs, 'g_fs', 1))
    b2 = _relu(gdot(r1.astype(cd), 'g_r2a'))
    b2 = gdot(b2.astype(cd), 'g_r2b')
    r2 = _relu(b2 + r1)

    # ---- classifier (MLP -> pre_logits) ------------------------------------------
    store('sec_lg', gdot(r2.astype(cd), 'g_c'))


# --------------------------------------------------------------------------- params
def _xavier_uniform(key, shape):
    fan_in, fan_out = shape
    bound = (6.0 / (fan_in + fan_out)) ** 0.5
    return jax.random.uniform(key, shape, jnp.float32, -bound, bound)


def init_params(key, input_dim, ae_hidden, fs_rep_hidden, num_features):
    lat = ae_hidden // 4
    cat = lat + num_features
    half = cat // 2
    dims = dict(
        we1=(input_dim, ae_hidden), we2=(ae_hidden, ae_hidden // 2), we3=(ae_hidden // 2, lat),
        wd1=(lat, ae_hidden // 2), wd2=(ae_hidden // 2, ae_hidden), wd3=(ae_hidden, input_dim),
        wfs=(input_dim, fs_rep_hidden),
        wr1a=(cat, half), wr1b=(half, half), wr1s=(cat, half),
        wr2a=(half, half), wr2b=(half, half),
        wc=(half, half),
    )
    params = {}
    names = sorted(dims)
    keys = jax.random.split(key, len(names))
    for k_, name in zip(keys, names):
        params[name] = _xavier_uniform(k_, dims[name])
    for name, shp in dims.items():
        params['b' + name[1:]] = jnp.zeros((1, shp[1]), jnp.float32)
    params['bfs'] = jnp.full((1, fs_rep_hidden), 0.1, jnp.float32)   # FSlayer bias_1 init
    return params


def select_features(wfs, num_features):
    # NOTE: jax.lax.top_k tie-breaking may differ from torch.topk on exact ties.
    scores = jnp.sum(jnp.abs(wfs), axis=1)
    _, f_index = jax.lax.top_k(scores, num_features)
    return f_index


def prepare_fsnet(params, num_features, compute_dtype=jnp.bfloat16,
                  act_dtype=jnp.float32):
    """Parameter-only preprocessing, run ONCE: feature selection + slab packing.

    act_dtype: keep f32 on v5e (no bf16 VPU); jnp.bfloat16 may be used on v6e/v7x
    to halve live-activation vreg footprint.
    """
    D = params['we1'].shape[0]
    ah = params['we1'].shape[1]
    lat = params['we3'].shape[1]
    fsh = params['wfs'].shape[1]
    half = params['wc'].shape[1]

    f_index = select_features(params['wfs'], num_features)

    # pre-split the concat-consuming weights: cat([ae, fs]) @ W == ae@W_top + fs@W_bot
    wr1a_top, wr1a_bot = params['wr1a'][:lat], params['wr1a'][lat:]
    wr1s_top, wr1s_bot = params['wr1s'][:lat], params['wr1s'][lat:]

    # fused groups: one MXU dot per group; (weight, bias-or-None) per sub-block.
    groups = [
        ('g_x',   [(params['we1'], params['be1']), (params['wfs'], params['bfs'])]),
        ('g_e2',  [(params['we2'], params['be2'])]),
        ('g_e3',  [(params['we3'], params['be3'])]),
        ('g_ae',  [(params['wd1'], params['bd1']),
                   (wr1a_top,      params['br1a']),
                   (wr1s_top,      params['br1s'])]),
        ('g_fs',  [(wr1a_bot, None), (wr1s_bot, None)]),   # biases already in g_ae row
        ('g_d2',  [(params['wd2'], params['bd2'])]),
        ('g_d3',  [(params['wd3'], params['bd3'])]),
        ('g_r1b', [(params['wr1b'], params['br1b'])]),
        ('g_r2a', [(params['wr2a'], params['br2a'])]),
        ('g_r2b', [(params['wr2b'], params['br2b'])]),
        ('g_c',   [(params['wc'], params['bc'])]),
    ]

    # geometry: K padded to 128 (matches lane-padded activations), each sub-output
    # lane-aligned to a 128-multiple column window inside its group.
    geo = []
    for name, subs in groups:
        n_in = subs[0][0].shape[0]
        kp = _round_up(n_in, 128)
        cols, coff = [], 0
        for w, _ in subs:
            wpad = _round_up(w.shape[1], 128)
            cols.append((coff, wpad))
            coff += wpad
        geo.append((name, subs, n_in, kp, coff, cols))

    wide_npads = [npad for (_, _, _, _, npad, _) in geo if npad > 128]
    wide_width = max(wide_npads) if wide_npads else 128
    narrow_width = 128
    bias_width = max(npad for (_, _, _, _, npad, _) in geo)

    n_groups = len(geo)
    b_np = np.zeros((_round_up(n_groups, 8), bias_width), np.float32)

    meta = {}
    slab_blocks = {0: [], 1: []}
    rows = {0: 0, 1: 0}
    for brow, (name, subs, n_in, kp, npad, cols) in enumerate(geo):
        slab = 0 if npad > 128 else 1
        width = wide_width if slab == 0 else narrow_width
        blk = np.zeros((kp, width), np.float32)
        for (coff, _), (w, b) in zip(cols, subs):
            w = np.asarray(w, np.float32)
            blk[:w.shape[0], coff:coff + w.shape[1]] = w
            if b is not None:
                bb = np.asarray(b, np.float32).reshape(-1)
                b_np[brow, coff:coff + bb.shape[0]] = bb
        meta[name] = dict(slab=slab, row=rows[slab], kp=kp, npad=npad, brow=brow,
                          cols=tuple(cols))
        rows[slab] += kp
        slab_blocks[slab].append(blk)

    w_wide = jnp.asarray(np.concatenate(slab_blocks[0], axis=0), compute_dtype)
    w_nar = jnp.asarray(np.concatenate(slab_blocks[1], axis=0), compute_dtype)
    b_slab = jnp.asarray(b_np, jnp.float32)

    # lane-aligned output slab: each logical output gets its own 128-multiple region.
    w_lg, w_ae = _round_up(half, 128), _round_up(lat, 128)
    w_rec, w_fs = _round_up(D, 128), _round_up(fsh, 128)
    dims = dict(
        D=D, lat=lat, half=half, fs_hidden=fsh, nf=num_features,
        D_pad=_round_up(D, 128), nf_pad=_round_up(num_features, 128),
        sec_lg=(0, w_lg), sec_ae=(w_lg, w_ae),
        sec_rec=(w_lg + w_ae, w_rec), sec_fs=(w_lg + w_ae + w_rec, w_fs),
        out_pad=w_lg + w_ae + w_rec + w_fs)

    return dict(w_wide=w_wide, w_nar=w_nar, b_slab=b_slab, meta=meta, dims=dims,
                f_index=f_index, compute_dtype=compute_dtype, act_dtype=act_dtype)


# --------------------------------------------------------------------------- forward
def fs_inbance_net(x, state, *, bm=None):
    dims = state['dims']
    B, D = x.shape
    assert D == dims['D']
    cd = state['compute_dtype']
    f_index = state['f_index']

    # FSlayer feature gather in the wrapper (XLA gather, not an in-kernel op)
    x_sel = jnp.take(x, f_index, axis=1)

    # >= 2 grid steps when B allows (both v7x TensorCores busy); cap at 256.
    if bm is None:
        bm = min(256, _round_up(max(pl.cdiv(B, 2), 1), 16))
    bm = max(16, _round_up(bm, 16))
    B_pad = _round_up(B, bm)

    D_pad, nf_pad, out_pad = dims['D_pad'], dims['nf_pad'], dims['out_pad']
    # Single materialisation each: bf16 cast (halves streamed DMA bytes) fused with
    # the batch/lane padding needed for aligned tiles.
    x_in = jnp.zeros((B_pad, D_pad), cd).at[:B, :D].set(x.astype(cd))
    xsel_in = jnp.zeros((B_pad, nf_pad), cd).at[:B, :dims['nf']].set(x_sel.astype(cd))

    w_wide, w_nar, b_slab = state['w_wide'], state['w_nar'], state['b_slab']
    kernel = functools.partial(fsnet_kernel, meta=state['meta'], dims=dims,
                               compute_dtype=cd, act_dtype=state['act_dtype'])

    # explicit VMEM budget: double-buffered streamed tiles + single-buffered slabs
    itemsize = jnp.dtype(cd).itemsize
    resident = (w_wide.size + w_nar.size) * itemsize + b_slab.size * 4
    streamed = 2 * bm * (D_pad * itemsize + nf_pad * itemsize + out_pad * 4)
    vmem_limit = int(min(max(2 * (resident + streamed) + (4 << 20), 16 << 20), 64 << 20))

    def _call(single_buffer):
        res_kw = dict(pipeline_mode=pl.Buffered(1)) if single_buffer else {}
        in_specs = [
            pl.BlockSpec((bm, D_pad), lambda i: (i, 0)),
            pl.BlockSpec((bm, nf_pad), lambda i: (i, 0)),
            pl.BlockSpec(w_wide.shape, lambda i: (0, 0), **res_kw),  # resident slab
            pl.BlockSpec(w_nar.shape, lambda i: (0, 0), **res_kw),   # resident slab
            pl.BlockSpec(b_slab.shape, lambda i: (0, 0), **res_kw),  # resident slab
        ]
        return pl.pallas_call(
            kernel,
            out_shape=jax.ShapeDtypeStruct((B_pad, out_pad), jnp.float32),
            grid=(B_pad // bm,),
            in_specs=in_specs,
            out_specs=pl.BlockSpec((bm, out_pad), lambda i: (i, 0)),
            compiler_params=pltpu.CompilerParams(
                dimension_semantics=("parallel",),
                vmem_limit_bytes=vmem_limit),
        )(x_in, xsel_in, w_wide, w_nar, b_slab)

    try:
        out = _call(True)
    except Exception:
        # Fallback for jax versions without BlockSpec pipeline_mode / Buffered(1).
        out = _call(False)

    o, _ = dims['sec_lg']
    pre_logits = out[:B, o:o + dims['half']]
    o, _ = dims['sec_ae']
    ae_rep = out[:B, o:o + dims['lat']]
    o, _ = dims['sec_rec']
    recon_x = out[:B, o:o + dims['D']]
    o, _ = dims['sec_fs']
    fs_rep = out[:B, o:o + dims['fs_hidden']]
    mu = logvar = None   # non-variational AE
    return pre_logits, (x, ae_rep, recon_x, fs_rep, f_index, mu, logvar)


# --------------------------------------------------------------------------- reference
def fsnet_reference(x, params, f_index, compute_dtype):
    cd = compute_dtype
    f32 = jnp.float32

    def lin(h, w, b):
        return jnp.dot(h.astype(cd), w.astype(cd), preferred_element_type=f32) + b

    h = _relu(lin(x, params['we1'], params['be1']))
    h = _relu(lin(h, params['we2'], params['be2']))
    ae_rep = _relu(lin(h, params['we3'], params['be3']))
    d = _relu(lin(ae_rep, params['wd1'], params['bd1']))
    d = _relu(lin(d, params['wd2'], params['bd2']))
    recon = lin(d, params['wd3'], params['bd3'])
    fs_rep = lin(x, params['wfs'], params['bfs'])
    fs_feature = x[:, f_index]
    cat = jnp.concatenate([ae_rep, fs_feature], axis=-1)
    b1 = _relu(lin(cat, params['wr1a'], params['br1a']))
    b1 = lin(b1, params['wr1b'], params['br1b'])
    r1 = _relu(b1 + lin(cat, params['wr1s'], params['br1s']))
    b2 = _relu(lin(r1, params['wr2a'], params['br2a']))
    b2 = lin(b2, params['wr2b'], params['br2b'])
    r2 = _relu(b2 + r1)
    logits = lin(r2, params['wc'], params['bc'])
    return logits, ae_rep, recon, fs_rep


if __name__ == "__main__":
    input_dim, ae_hidden, fs_rep_hidden, num_features = 16, 32, 8, 8
    B = 20   # deliberately NOT a multiple of the batch tile -> exercises the padding path
    key = jax.random.PRNGKey(0)
    k_x, k_p = jax.random.split(key)
    x = jax.random.normal(k_x, (B, input_dim), jnp.float32)
    params = init_params(k_p, input_dim, ae_hidden, fs_rep_hidden, num_features)

    state = prepare_fsnet(params, num_features)       # parameter-only glue, run once
    pre_logits, (x_out, ae_rep, recon_x, fs_rep, f_index, mu, logvar) = fs_inbance_net(x, state)
    jax.block_until_ready((pre_logits, ae_rep, recon_x, fs_rep, f_index))

    lat = ae_hidden // 4
    half = (lat + num_features) // 2
    assert pre_logits.shape == (B, half)
    assert ae_rep.shape == (B, lat)
    assert recon_x.shape == (B, input_dim)
    assert fs_rep.shape == (B, fs_rep_hidden)
    assert f_index.shape == (num_features,)
    assert mu is None and logvar is None

    ref_logits, ref_ae, ref_recon, ref_fs = fsnet_reference(
        x, params, f_index, state['compute_dtype'])
    for got, want in ((pre_logits, ref_logits), (ae_rep, ref_ae),
                      (recon_x, ref_recon), (fs_rep, ref_fs)):
        np.testing.assert_allclose(np.asarray(got), np.asarray(want), atol=2e-2, rtol=2e-2)

    print("KERNEL_OK")
</pallas_src>

<mosaic_0001>
module attributes {stable_mosaic.version = 11 : i64} {
  func.func @fsnet_kernel(%arg0: i32, %arg1: memref<16x128xbf16, #tpu.memory_space<vmem>>, %arg2: memref<16x128xbf16, #tpu.memory_space<vmem>>, %arg3: memref<384x384xbf16, #tpu.memory_space<vmem>>, %arg4: memref<1024x128xbf16, #tpu.memory_space<vmem>>, %arg5: memref<16x384xf32, #tpu.memory_space<vmem>>, %arg6: memref<16x512xf32, #tpu.memory_space<vmem>>) attributes {dimension_semantics = [#tpu.dimension_semantics<parallel>], iteration_bounds = array<i64: 2>, scalar_prefetch = 0 : i64, scratch_operands = 0 : i64, tpu.core_type = #tpu.core_type<tc>, window_params = [{transform_indices = @transform_0, window_bounds = array<i64: 16, 128>}, {transform_indices = @transform_1, window_bounds = array<i64: 16, 128>}, {pipeline_mode = #tpu.pipeline_mode<synchronous>, transform_indices = @transform_2, window_bounds = array<i64: 384, 384>}, {pipeline_mode = #tpu.pipeline_mode<synchronous>, transform_indices = @transform_3, window_bounds = array<i64: 1024, 128>}, {pipeline_mode = #tpu.pipeline_mode<synchronous>, transform_indices = @transform_4, window_bounds = array<i64: 16, 384>}, {transform_indices = @transform_5, window_bounds = array<i64: 16, 512>}]} {
    %c0 = arith.constant 0 : index
    %c0_0 = arith.constant 0 : index
    %0 = vector.load %arg1[%c0, %c0_0] : memref<16x128xbf16, #tpu.memory_space<vmem>>, vector<16x128xbf16>
    %c0_1 = arith.constant 0 : index
    %c0_2 = arith.constant 0 : index
    %1 = vector.load %arg2[%c0_1, %c0_2] : memref<16x128xbf16, #tpu.memory_space<vmem>>, vector<16x128xbf16>
    %c0_3 = arith.constant 0 : index
    %c0_4 = arith.constant 0 : index
    %2 = vector.load %arg3[%c0_3, %c0_4] : memref<384x384xbf16, #tpu.memory_space<vmem>>, vector<128x256xbf16>
    %cst = arith.constant dense<0.000000e+00> : vector<16x256xf32>
    %3 = tpu.matmul %0, %2, %cst {dimension_numbers = #tpu.dot_dimension_numbers<[1], [0], [0], [1], [0, 0, 1, 1], [], []>} : vector<16x128xbf16>, vector<128x256xbf16>, vector<16x256xf32> -> vector<16x256xf32>
    %c0_5 = arith.constant 0 : index
    %c0_6 = arith.constant 0 : index
    %4 = vector.load %arg5[%c0_5, %c0_6] : memref<16x384xf32, #tpu.memory_space<vmem>>, vector<1x256xf32>
    %5 = vector.broadcast %4 : vector<1x256xf32> to vector<16x256xf32>
    %6 = arith.addf %3, %5 : vector<16x256xf32>
    %7 = vector.extract_strided_slice %6 {offsets = [0, 128], sizes = [16, 128], strides = [1, 1]} : vector<16x256xf32> to vector<16x128xf32>
    %c0_7 = arith.constant 0 : index
    %c384 = arith.constant 384 : index
    %8 = vector.load %arg6[%c0_7, %c384] : memref<16x512xf32, #tpu.memory_space<vmem>>, vector<16x128xf32>
    tpu.vector_store %arg6[%c0_7, %c384], %7 {strides = array<i32>} : memref<16x512xf32, #tpu.memory_space<vmem>>, vector<16x128xf32>,
    %9 = vector.extract_strided_slice %6 {offsets = [0, 0], sizes = [16, 128], strides = [1, 1]} : vector<16x256xf32> to vector<16x128xf32>
    %cst_8 = arith.constant 0.000000e+00 : f32
    %10 = vector.broadcast %cst_8 : f32 to vector<16x128xf32>
    %11 = arith.maximumf %9, %10 : vector<16x128xf32>
    %12 = arith.truncf %11 : vector<16x128xf32> to vector<16x128xbf16>
    %c0_9 = arith.constant 0 : index
    %c0_10 = arith.constant 0 : index
    %13 = vector.load %arg4[%c0_9, %c0_10] : memref<1024x128xbf16, #tpu.memory_space<vmem>>, vector<128x128xbf16>
    %cst_11 = arith.constant dense<0.000000e+00> : vector<16x128xf32>
    %14 = tpu.matmul %12, %13, %cst_11 {dimension_numbers = #tpu.dot_dimension_numbers<[1], [0], [0], [1], [0, 0, 1, 1], [], []>} : vector<16x128xbf16>, vector<128x128xbf16>, vector<16x128xf32> -> vector<16x128xf32>
    %c1 = arith.constant 1 : index
    %c0_12 = arith.constant 0 : index
    %15 = vector.load %arg5[%c1, %c0_12] : memref<16x384xf32, #tpu.memory_space<vmem>>, vector<1x128xf32>
    %16 = vector.broadcast %15 : vector<1x128xf32> to vector<16x128xf32>
    %17 = arith.addf %14, %16 : vector<16x128xf32>
    %cst_13 = arith.constant 0.000000e+00 : f32
    %18 = vector.broadcast %cst_13 : f32 to vector<16x128xf32>
    %19 = arith.maximumf %17, %18 : vector<16x128xf32>
    %20 = arith.truncf %19 : vector<16x128xf32> to vector<16x128xbf16>
    %c128 = arith.constant 128 : index
    %c0_14 = arith.constant 0 : index
    %21 = vector.load %arg4[%c128, %c0_14] : memref<1024x128xbf16, #tpu.memory_space<vmem>>, vector<128x128xbf16>
    %cst_15 = arith.constant dense<0.000000e+00> : vector<16x128xf32>
    %22 = tpu.matmul %20, %21, %cst_15 {dimension_numbers = #tpu.dot_dimension_numbers<[1], [0], [0], [1], [0, 0, 1, 1], [], []>} : vector<16x128xbf16>, vector<128x128xbf16>, vector<16x128xf32> -> vector<16x128xf32>
    %c2 = arith.constant 2 : index
    %c0_16 = arith.constant 0 : index
    %23 = vector.load %arg5[%c2, %c0_16] : memref<16x384xf32, #tpu.memory_space<vmem>>, vector<1x128xf32>
    %24 = vector.broadcast %23 : vector<1x128xf32> to vector<16x128xf32>
    %25 = arith.addf %22, %24 : vector<16x128xf32>
    %cst_17 = arith.constant 0.000000e+00 : f32
    %26 = vector.broadcast %cst_17 : f32 to vector<16x128xf32>
    %27 = arith.maximumf %25, %26 : vector<16x128xf32>
    %c0_18 = arith.constant 0 : index
    %c128_19 = arith.constant 128 : index
    %28 = vector.load %arg6[%c0_18, %c128_19] : memref<16x512xf32, #tpu.memory_space<vmem>>, vector<16x128xf32>
    tpu.vector_store %arg6[%c0_18, %c128_19], %27 {strides = array<i32>} : memref<16x512xf32, #tpu.memory_space<vmem>>, vector<16x128xf32>,
    %29 = arith.truncf %27 : vector<16x128xf32> to vector<16x128xbf16>
    %c128_20 = arith.constant 128 : index
    %c0_21 = arith.constant 0 : index
    %30 = vector.load %arg3[%c128_20, %c0_21] : memref<384x384xbf16, #tpu.memory_space<vmem>>, vector<128x384xbf16>
    %cst_22 = arith.constant dense<0.000000e+00> : vector<16x384xf32>
    %31 = tpu.matmul %29, %30, %cst_22 {dimension_numbers = #tpu.dot_dimension_numbers<[1], [0], [0], [1], [0, 0, 1, 1], [], []>} : vector<16x128xbf16>, vector<128x384xbf16>, vector<16x384xf32> -> vector<16x384xf32>
    %c3 = arith.constant 3 : index
    %c0_23 = arith.constant 0 : index
    %32 = vector.load %arg5[%c3, %c0_23] : memref<16x384xf32, #tpu.memory_space<vmem>>, vector<1x384xf32>
    %33 = vector.broadcast %32 : vector<1x384xf32> to vector<16x384xf32>
    %34 = arith.addf %31, %33 : vector<16x384xf32>
    %c256 = arith.constant 256 : index
    %c0_24 = arith.constant 0 : index
    %35 = vector.load %arg3[%c256, %c0_24] : memref<384x384xbf16, #tpu.memory_space<vmem>>, vector<128x256xbf16>
    %cst_25 = arith.constant dense<0.000000e+00> : vector<16x256xf32>
    %36 = tpu.matmul %1, %35, %cst_25 {dimension_numbers = #tpu.dot_dimension_numbers<[1], [0], [0], [1], [0, 0, 1, 1], [], []>} : vector<16x128xbf16>, vector<128x256xbf16>, vector<16x256xf32> -> vector<16x256xf32>
    %c4 = arith.constant 4 : index
    %c0_26 = arith.constant 0 : index
    %37 = vector.load %arg5[%c4, %c0_26] : memref<16x384xf32, #tpu.memory_space<vmem>>, vector<1x256xf32>
    %38 = vector.broadcast %37 : vector<1x256xf32> to vector<16x256xf32>
    %39 = arith.addf %36, %38 : vector<16x256xf32>
    %40 = vector.extract_strided_slice %34 {offsets = [0, 0], sizes = [16, 128], strides = [1, 1]} : vector<16x384xf32> to vector<16x128xf32>
    %cst_27 = arith.constant 0.000000e+00 : f32
    %41 = vector.broadcast %cst_27 : f32 to vector<16x128xf32>
    %42 = arith.maximumf %40, %41 : vector<16x128xf32>
    %43 = arith.truncf %42 : vector<16x128xf32> to vector<16x128xbf16>
    %c256_28 = arith.constant 256 : index
    %c0_29 = arith.constant 0 : index
    %44 = vector.load %arg4[%c256_28, %c0_29] : memref<1024x128xbf16, #tpu.memory_space<vmem>>, vector<128x128xbf16>
    %cst_30 = arith.constant dense<0.000000e+00> : vector<16x128xf32>
    %45 = tpu.matmul %43, %44, %cst_30 {dimension_numbers = #tpu.dot_dimension_numbers<[1], [0], [0], [1], [0, 0, 1, 1], [], []>} : vector<16x128xbf16>, vector<128x128xbf16>, vector<16x128xf32> -> vector<16x128xf32>
    %c5 = arith.constant 5 : index
    %c0_31 = arith.constant 0 : index
    %46 = vector.load %arg5[%c5, %c0_31] : memref<16x384xf32, #tpu.memory_space<vmem>>, vector<1x128xf32>
    %47 = vector.broadcast %46 : vector<1x128xf32> to vector<16x128xf32>
    %48 = arith.addf %45, %47 : vector<16x128xf32>
    %cst_32 = arith.constant 0.000000e+00 : f32
    %49 = vector.broadcast %cst_32 : f32 to vector<16x128xf32>
    %50 = arith.maximumf %48, %49 : vector<16x128xf32>
    %51 = arith.truncf %50 : vector<16x128xf32> to vector<16x128xbf16>
    %c384_33 = arith.constant 384 : index
    %c0_34 = arith.constant 0 : index
    %52 = vector.load %arg4[%c384_33, %c0_34] : memref<1024x128xbf16, #tpu.memory_space<vmem>>, vector<128x128xbf16>
    %cst_35 = arith.constant dense<0.000000e+00> : vector<16x128xf32>
    %53 = tpu.matmul %51, %52, %cst_35 {dimension_numbers = #tpu.dot_dimension_numbers<[1], [0], [0], [1], [0, 0, 1, 1], [], []>} : vector<16x128xbf16>, vector<128x128xbf16>, vector<16x128xf32> -> vector<16x128xf32>
    %c6 = arith.constant 6 : index
    %c0_36 = arith.constant 0 : index
    %54 = vector.load %arg5[%c6, %c0_36] : memref<16x384xf32, #tpu.memory_space<vmem>>, vector<1x128xf32>
    %55 = vector.broadcast %54 : vector<1x128xf32> to vector<16x128xf32>
    %56 = arith.addf %53, %55 : vector<16x128xf32>
    %c0_37 = arith.constant 0 : index
    %c256_38 = arith.constant 256 : index
    %57 = vector.load %arg6[%c0_37, %c256_38] : memref<16x512xf32, #tpu.memory_space<vmem>>, vector<16x128xf32>
    tpu.vector_store %arg6[%c0_37, %c256_38], %56 {strides = array<i32>} : memref<16x512xf32, #tpu.memory_space<vmem>>, vector<16x128xf32>,
    %58 = vector.extract_strided_slice %34 {offsets = [0, 128], sizes = [16, 128], strides = [1, 1]} : vector<16x384xf32> to vector<16x128xf32>
    %59 = vector.extract_strided_slice %39 {offsets = [0, 0], sizes = [16, 128], strides = [1, 1]} : vector<16x256xf32> to vector<16x128xf32>
    %60 = arith.addf %58, %59 : vector<16x128xf32>
    %cst_39 = arith.constant 0.000000e+00 : f32
    %61 = vector.broadcast %cst_39 : f32 to vector<16x128xf32>
    %62 = arith.maximumf %60, %61 : vector<16x128xf32>
    %63 = arith.truncf %62 : vector<16x128xf32> to vector<16x128xbf16>
    %c512 = arith.constant 512 : index
    %c0_40 = arith.constant 0 : index
    %64 = vector.load %arg4[%c512, %c0_40] : memref<1024x128xbf16, #tpu.memory_space<vmem>>, vector<128x128xbf16>
    %cst_41 = arith.constant dense<0.000000e+00> : vector<16x128xf32>
    %65 = tpu.matmul %63, %64, %cst_41 {dimension_numbers = #tpu.dot_dimension_numbers<[1], [0], [0], [1], [0, 0, 1, 1], [], []>} : vector<16x128xbf16>, vector<128x128xbf16>, vector<16x128xf32> -> vector<16x128xf32>
    %c7 = arith.constant 7 : index
    %c0_42 = arith.constant 0 : index
    %66 = vector.load %arg5[%c7, %c0_42] : memref<16x384xf32, #tpu.memory_space<vmem>>, vector<1x128xf32>
    %67 = vector.broadcast %66 : vector<1x128xf32> to vector<16x128xf32>
    %68 = arith.addf %65, %67 : vector<16x128xf32>
    %69 = vector.extract_strided_slice %34 {offsets = [0, 256], sizes = [16, 128], strides = [1, 1]} : vector<16x384xf32> to vector<16x128xf32>
    %70 = arith.addf %68, %69 : vector<16x128xf32>
    %71 = vector.extract_strided_slice %39 {offsets = [0, 128], sizes = [16, 128], strides = [1, 1]} : vector<16x256xf32> to vector<16x128xf32>
    %72 = arith.addf %70, %71 : vector<16x128xf32>
    %cst_43 = arith.constant 0.000000e+00 : f32
    %73 = vector.broadcast %cst_43 : f32 to vector<16x128xf32>
    %74 = arith.maximumf %72, %73 : vector<16x128xf32>
    %75 = arith.truncf %74 : vector<16x128xf32> to vector<16x128xbf16>
    %c640 = arith.constant 640 : index
    %c0_44 = arith.constant 0 : index
    %76 = vector.load %arg4[%c640, %c0_44] : memref<1024x128xbf16, #tpu.memory_space<vmem>>, vector<128x128xbf16>
    %cst_45 = arith.constant dense<0.000000e+00> : vector<16x128xf32>
    %77 = tpu.matmul %75, %76, %cst_45 {dimension_numbers = #tpu.dot_dimension_numbers<[1], [0], [0], [1], [0, 0, 1, 1], [], []>} : vector<16x128xbf16>, vector<128x128xbf16>, vector<16x128xf32> -> vector<16x128xf32>
    %c8 = arith.constant 8 : index
    %c0_46 = arith.constant 0 : index
    %78 = vector.load %arg5[%c8, %c0_46] : memref<16x384xf32, #tpu.memory_space<vmem>>, vector<1x128xf32>
    %79 = vector.broadcast %78 : vector<1x128xf32> to vector<16x128xf32>
    %80 = arith.addf %77, %79 : vector<16x128xf32>
    %cst_47 = arith.constant 0.000000e+00 : f32
    %81 = vector.broadcast %cst_47 : f32 to vector<16x128xf32>
    %82 = arith.maximumf %80, %81 : vector<16x128xf32>
    %83 = arith.truncf %82 : vector<16x128xf32> to vector<16x128xbf16>
    %c768 = arith.constant 768 : index
    %c0_48 = arith.constant 0 : index
    %84 = vector.load %arg4[%c768, %c0_48] : memref<1024x128xbf16, #tpu.memory_space<vmem>>, vector<128x128xbf16>
    %cst_49 = arith.constant dense<0.000000e+00> : vector<16x128xf32>
    %85 = tpu.matmul %83, %84, %cst_49 {dimension_numbers = #tpu.dot_dimension_numbers<[1], [0], [0], [1], [0, 0, 1, 1], [], []>} : vector<16x128xbf16>, vector<128x128xbf16>, vector<16x128xf32> -> vector<16x128xf32>
    %c9 = arith.constant 9 : index
    %c0_50 = arith.constant 0 : index
    %86 = vector.load %arg5[%c9, %c0_50] : memref<16x384xf32, #tpu.memory_space<vmem>>, vector<1x128xf32>
    %87 = vector.broadcast %86 : vector<1x128xf32> to vector<16x128xf32>
    %88 = arith.addf %85, %87 : vector<16x128xf32>
    %89 = arith.addf %88, %74 : vector<16x128xf32>
    %cst_51 = arith.constant 0.000000e+00 : f32
    %90 = vector.broadcast %cst_51 : f32 to vector<16x128xf32>
    %91 = arith.maximumf %89, %90 : vector<16x128xf32>
    %92 = arith.truncf %91 : vector<16x128xf32> to vector<16x128xbf16>
    %c896 = arith.constant 896 : index
    %c0_52 = arith.constant 0 : index
    %93 = vector.load %arg4[%c896, %c0_52] : memref<1024x128xbf16, #tpu.memory_space<vmem>>, vector<128x128xbf16>
    %cst_53 = arith.constant dense<0.000000e+00> : vector<16x128xf32>
    %94 = tpu.matmul %92, %93, %cst_53 {dimension_numbers = #tpu.dot_dimension_numbers<[1], [0], [0], [1], [0, 0, 1, 1], [], []>} : vector<16x128xbf16>, vector<128x128xbf16>, vector<16x128xf32> -> vector<16x128xf32>
    %c10 = arith.constant 10 : index
    %c0_54 = arith.constant 0 : index
    %95 = vector.load %arg5[%c10, %c0_54] : memref<16x384xf32, #tpu.memory_space<vmem>>, vector<1x128xf32>
    %96 = vector.broadcast %95 : vector<1x128xf32> to vector<16x128xf32>
    %97 = arith.addf %94, %96 : vector<16x128xf32>
    %c0_55 = arith.constant 0 : index
    %c0_56 = arith.constant 0 : index
    %98 = vector.load %arg6[%c0_55, %c0_56] : memref<16x512xf32, #tpu.memory_space<vmem>>, vector<16x128xf32>
    tpu.vector_store %arg6[%c0_55, %c0_56], %97 {strides = array<i32>} : memref<16x512xf32, #tpu.memory_space<vmem>>, vector<16x128xf32>,
    return
  }
  func.func @transform_0(%arg0: i32) -> (i32, i32) {
    %c0_i32 = arith.constant 0 : i32
    %c0_i32_0 = arith.constant 0 : i32
    return %arg0, %c0_i32 : i32, i32
  }
  func.func @transform_1(%arg0: i32) -> (i32, i32) {
    %c0_i32 = arith.constant 0 : i32
    %c0_i32_0 = arith.constant 0 : i32
    return %arg0, %c0_i32 : i32, i32
  }
  func.func @transform_2(%arg0: i32) -> (i32, i32) {
    %c0_i32 = arith.constant 0 : i32
    %c0_i32_0 = arith.constant 0 : i32
    %c0_i32_1 = arith.constant 0 : i32
    return %c0_i32, %c0_i32_0 : i32, i32
  }
  func.func @transform_3(%arg0: i32) -> (i32, i32) {
    %c0_i32 = arith.constant 0 : i32
    %c0_i32_0 = arith.constant 0 : i32
    %c0_i32_1 = arith.constant 0 : i32
    return %c0_i32, %c0_i32_0 : i32, i32
  }
  func.func @transform_4(%arg0: i32) -> (i32, i32) {
    %c0_i32 = arith.constant 0 : i32
    %c0_i32_0 = arith.constant 0 : i32
    %c0_i32_1 = arith.constant 0 : i32
    return %c0_i32, %c0_i32_0 : i32, i32
  }
  func.func @transform_5(%arg0: i32) -> (i32, i32) {
    %c0_i32 = arith.constant 0 : i32
    %c0_i32_0 = arith.constant 0 : i32
    return %arg0, %c0_i32 : i32, i32
  }
}

module attributes {stable_mosaic.version = 11 : i64} {
  func.func @fsnet_kernel(%arg0: i32, %arg1: memref<16x128xbf16, #tpu.memory_space<vmem>>, %arg2: memref<16x128xbf16, #tpu.memory_space<vmem>>, %arg3: memref<384x384xbf16, #tpu.memory_space<vmem>>, %arg4: memref<1024x128xbf16, #tpu.memory_space<vmem>>, %arg5: memref<16x384xf32, #tpu.memory_space<vmem>>, %arg6: memref<16x512xf32, #tpu.memory_space<vmem>>) attributes {dimension_semantics = [#tpu.dimension_semantics<parallel>], iteration_bounds = array<i64: 2>, scalar_prefetch = 0 : i64, scratch_operands = 0 : i64, tpu.core_type = #tpu.core_type<tc>, window_params = [{transform_indices = @transform_0, window_bounds = array<i64: 16, 128>}, {transform_indices = @transform_1, window_bounds = array<i64: 16, 128>}, {pipeline_mode = #tpu.pipeline_mode<synchronous>, transform_indices = @transform_2, window_bounds = array<i64: 384, 384>}, {pipeline_mode = #tpu.pipeline_mode<synchronous>, transform_indices = @transform_3, window_bounds = array<i64: 1024, 128>}, {pipeline_mode = #tpu.pipeline_mode<synchronous>, transform_indices = @transform_4, window_bounds = array<i64: 16, 384>}, {transform_indices = @transform_5, window_bounds = array<i64: 16, 512>}]} {
    %c0 = arith.constant 0 : index
    %c0_0 = arith.constant 0 : index
    %0 = vector.load %arg1[%c0, %c0_0] : memref<16x128xbf16, #tpu.memory_space<vmem>>, vector<16x128xbf16>
    %c0_1 = arith.constant 0 : index
    %c0_2 = arith.constant 0 : index
    %1 = vector.load %arg2[%c0_1, %c0_2] : memref<16x128xbf16, #tpu.memory_space<vmem>>, vector<16x128xbf16>
    %c0_3 = arith.constant 0 : index
    %c0_4 = arith.constant 0 : index
    %2 = vector.load %arg3[%c0_3, %c0_4] : memref<384x384xbf16, #tpu.memory_space<vmem>>, vector<128x256xbf16>
    %cst = arith.constant dense<0.000000e+00> : vector<16x256xf32>
    %3 = tpu.matmul %0, %2, %cst {dimension_numbers = #tpu.dot_dimension_numbers<[1], [0], [0], [1], [0, 0, 1, 1], [], []>} : vector<16x128xbf16>, vector<128x256xbf16>, vector<16x256xf32> -> vector<16x256xf32>
    %c0_5 = arith.constant 0 : index
    %c0_6 = arith.constant 0 : index
    %4 = vector.load %arg5[%c0_5, %c0_6] : memref<16x384xf32, #tpu.memory_space<vmem>>, vector<1x256xf32>
    %5 = vector.broadcast %4 : vector<1x256xf32> to vector<16x256xf32>
    %6 = arith.addf %3, %5 : vector<16x256xf32>
    %7 = vector.extract_strided_slice %6 {offsets = [0, 128], sizes = [16, 128], strides = [1, 1]} : vector<16x256xf32> to vector<16x128xf32>
    %c0_7 = arith.constant 0 : index
    %c384 = arith.constant 384 : index
    %8 = vector.load %arg6[%c0_7, %c384] : memref<16x512xf32, #tpu.memory_space<vmem>>, vector<16x128xf32>
    tpu.vector_store %arg6[%c0_7, %c384], %7 {strides = array<i32>} : memref<16x512xf32, #tpu.memory_space<vmem>>, vector<16x128xf32>,
    %9 = vector.extract_strided_slice %6 {offsets = [0, 0], sizes = [16, 128], strides = [1, 1]} : vector<16x256xf32> to vector<16x128xf32>
    %cst_8 = arith.constant 0.000000e+00 : f32
    %10 = vector.broadcast %cst_8 : f32 to vector<16x128xf32>
    %11 = arith.maximumf %9, %10 : vector<16x128xf32>
    %12 = arith.truncf %11 : vector<16x128xf32> to vector<16x128xbf16>
    %c0_9 = arith.constant 0 : index
    %c0_10 = arith.constant 0 : index
    %13 = vector.load %arg4[%c0_9, %c0_10] : memref<1024x128xbf16, #tpu.memory_space<vmem>>, vector<128x128xbf16>
    %cst_11 = arith.constant dense<0.000000e+00> : vector<16x128xf32>
    %14 = tpu.matmul %12, %13, %cst_11 {dimension_numbers = #tpu.dot_dimension_numbers<[1], [0], [0], [1], [0, 0, 1, 1], [], []>} : vector<16x128xbf16>, vector<128x128xbf16>, vector<16x128xf32> -> vector<16x128xf32>
    %c1 = arith.constant 1 : index
    %c0_12 = arith.constant 0 : index
    %15 = vector.load %arg5[%c1, %c0_12] : memref<16x384xf32, #tpu.memory_space<vmem>>, vector<1x128xf32>
    %16 = vector.broadcast %15 : vector<1x128xf32> to vector<16x128xf32>
    %17 = arith.addf %14, %16 : vector<16x128xf32>
    %cst_13 = arith.constant 0.000000e+00 : f32
    %18 = vector.broadcast %cst_13 : f32 to vector<16x128xf32>
    %19 = arith.maximumf %17, %18 : vector<16x128xf32>
    %20 = arith.truncf %19 : vector<16x128xf32> to vector<16x128xbf16>
    %c128 = arith.constant 128 : index
    %c0_14 = arith.constant 0 : index
    %21 = vector.load %arg4[%c128, %c0_14] : memref<1024x128xbf16, #tpu.memory_space<vmem>>, vector<128x128xbf16>
    %cst_15 = arith.constant dense<0.000000e+00> : vector<16x128xf32>
    %22 = tpu.matmul %20, %21, %cst_15 {dimension_numbers = #tpu.dot_dimension_numbers<[1], [0], [0], [1], [0, 0, 1, 1], [], []>} : vector<16x128xbf16>, vector<128x128xbf16>, vector<16x128xf32> -> vector<16x128xf32>
    %c2 = arith.constant 2 : index
    %c0_16 = arith.constant 0 : index
    %23 = vector.load %arg5[%c2, %c0_16] : memref<16x384xf32, #tpu.memory_space<vmem>>, vector<1x128xf32>
    %24 = vector.broadcast %23 : vector<1x128xf32> to vector<16x128xf32>
    %25 = arith.addf %22, %24 : vector<16x128xf32>
    %cst_17 = arith.constant 0.000000e+00 : f32
    %26 = vector.broadcast %cst_17 : f32 to vector<16x128xf32>
    %27 = arith.maximumf %25, %26 : vector<16x128xf32>
    %c0_18 = arith.constant 0 : index
    %c128_19 = arith.constant 128 : index
    %28 = vector.load %arg6[%c0_18, %c128_19] : memref<16x512xf32, #tpu.memory_space<vmem>>, vector<16x128xf32>
    tpu.vector_store %arg6[%c0_18, %c128_19], %27 {strides = array<i32>} : memref<16x512xf32, #tpu.memory_space<vmem>>, vector<16x128xf32>,
    %29 = arith.truncf %27 : vector<16x128xf32> to vector<16x128xbf16>
    %c128_20 = arith.constant 128 : index
    %c0_21 = arith.constant 0 : index
    %30 = vector.load %arg3[%c128_20, %c0_21] : memref<384x384xbf16, #tpu.memory_space<vmem>>, vector<128x384xbf16>
    %cst_22 = arith.constant dense<0.000000e+00> : vector<16x384xf32>
    %31 = tpu.matmul %29, %30, %cst_22 {dimension_numbers = #tpu.dot_dimension_numbers<[1], [0], [0], [1], [0, 0, 1, 1], [], []>} : vector<16x128xbf16>, vector<128x384xbf16>, vector<16x384xf32> -> vector<16x384xf32>
    %c3 = arith.constant 3 : index
    %c0_23 = arith.constant 0 : index
    %32 = vector.load %arg5[%c3, %c0_23] : memref<16x384xf32, #tpu.memory_space<vmem>>, vector<1x384xf32>
    %33 = vector.broadcast %32 : vector<1x384xf32> to vector<16x384xf32>
    %34 = arith.addf %31, %33 : vector<16x384xf32>
    %c256 = arith.constant 256 : index
    %c0_24 = arith.constant 0 : index
    %35 = vector.load %arg3[%c256, %c0_24] : memref<384x384xbf16, #tpu.memory_space<vmem>>, vector<128x256xbf16>
    %cst_25 = arith.constant dense<0.000000e+00> : vector<16x256xf32>
    %36 = tpu.matmul %1, %35, %cst_25 {dimension_numbers = #tpu.dot_dimension_numbers<[1], [0], [0], [1], [0, 0, 1, 1], [], []>} : vector<16x128xbf16>, vector<128x256xbf16>, vector<16x256xf32> -> vector<16x256xf32>
    %c4 = arith.constant 4 : index
    %c0_26 = arith.constant 0 : index
    %37 = vector.load %arg5[%c4, %c0_26] : memref<16x384xf32, #tpu.memory_space<vmem>>, vector<1x256xf32>
    %38 = vector.broadcast %37 : vector<1x256xf32> to vector<16x256xf32>
    %39 = arith.addf %36, %38 : vector<16x256xf32>
    %40 = vector.extract_strided_slice %34 {offsets = [0, 0], sizes = [16, 128], strides = [1, 1]} : vector<16x384xf32> to vector<16x128xf32>
    %cst_27 = arith.constant 0.000000e+00 : f32
    %41 = vector.broadcast %cst_27 : f32 to vector<16x128xf32>
    %42 = arith.maximumf %40, %41 : vector<16x128xf32>
    %43 = arith.truncf %42 : vector<16x128xf32> to vector<16x128xbf16>
    %c256_28 = arith.constant 256 : index
    %c0_29 = arith.constant 0 : index
    %44 = vector.load %arg4[%c256_28, %c0_29] : memref<1024x128xbf16, #tpu.memory_space<vmem>>, vector<128x128xbf16>
    %cst_30 = arith.constant dense<0.000000e+00> : vector<16x128xf32>
    %45 = tpu.matmul %43, %44, %cst_30 {dimension_numbers = #tpu.dot_dimension_numbers<[1], [0], [0], [1], [0, 0, 1, 1], [], []>} : vector<16x128xbf16>, vector<128x128xbf16>, vector<16x128xf32> -> vector<16x128xf32>
    %c5 = arith.constant 5 : index
    %c0_31 = arith.constant 0 : index
    %46 = vector.load %arg5[%c5, %c0_31] : memref<16x384xf32, #tpu.memory_space<vmem>>, vector<1x128xf32>
    %47 = vector.broadcast %46 : vector<1x128xf32> to vector<16x128xf32>
    %48 = arith.addf %45, %47 : vector<16x128xf32>
    %cst_32 = arith.constant 0.000000e+00 : f32
    %49 = vector.broadcast %cst_32 : f32 to vector<16x128xf32>
    %50 = arith.maximumf %48, %49 : vector<16x128xf32>
    %51 = arith.truncf %50 : vector<16x128xf32> to vector<16x128xbf16>
    %c384_33 = arith.constant 384 : index
    %c0_34 = arith.constant 0 : index
    %52 = vector.load %arg4[%c384_33, %c0_34] : memref<1024x128xbf16, #tpu.memory_space<vmem>>, vector<128x128xbf16>
    %cst_35 = arith.constant dense<0.000000e+00> : vector<16x128xf32>
    %53 = tpu.matmul %51, %52, %cst_35 {dimension_numbers = #tpu.dot_dimension_numbers<[1], [0], [0], [1], [0, 0, 1, 1], [], []>} : vector<16x128xbf16>, vector<128x128xbf16>, vector<16x128xf32> -> vector<16x128xf32>
    %c6 = arith.constant 6 : index
    %c0_36 = arith.constant 0 : index
    %54 = vector.load %arg5[%c6, %c0_36] : memref<16x384xf32, #tpu.memory_space<vmem>>, vector<1x128xf32>
    %55 = vector.broadcast %54 : vector<1x128xf32> to vector<16x128xf32>
    %56 = arith.addf %53, %55 : vector<16x128xf32>
    %c0_37 = arith.constant 0 : index
    %c256_38 = arith.constant 256 : index
    %57 = vector.load %arg6[%c0_37, %c256_38] : memref<16x512xf32, #tpu.memory_space<vmem>>, vector<16x128xf32>
    tpu.vector_store %arg6[%c0_37, %c256_38], %56 {strides = array<i32>} : memref<16x512xf32, #tpu.memory_space<vmem>>, vector<16x128xf32>,
    %58 = vector.extract_strided_slice %34 {offsets = [0, 128], sizes = [16, 128], strides = [1, 1]} : vector<16x384xf32> to vector<16x128xf32>
    %59 = vector.extract_strided_slice %39 {offsets = [0, 0], sizes = [16, 128], strides = [1, 1]} : vector<16x256xf32> to vector<16x128xf32>
    %60 = arith.addf %58, %59 : vector<16x128xf32>
    %cst_39 = arith.constant 0.000000e+00 : f32
    %61 = vector.broadcast %cst_39 : f32 to vector<16x128xf32>
    %62 = arith.maximumf %60, %61 : vector<16x128xf32>
    %63 = arith.truncf %62 : vector<16x128xf32> to vector<16x128xbf16>
    %c512 = arith.constant 512 : index
    %c0_40 = arith.constant 0 : index
    %64 = vector.load %arg4[%c512, %c0_40] : memref<1024x128xbf16, #tpu.memory_space<vmem>>, vector<128x128xbf16>
    %cst_41 = arith.constant dense<0.000000e+00> : vector<16x128xf32>
    %65 = tpu.matmul %63, %64, %cst_41 {dimension_numbers = #tpu.dot_dimension_numbers<[1], [0], [0], [1], [0, 0, 1, 1], [], []>} : vector<16x128xbf16>, vector<128x128xbf16>, vector<16x128xf32> -> vector<16x128xf32>
    %c7 = arith.constant 7 : index
    %c0_42 = arith.constant 0 : index
    %66 = vector.load %arg5[%c7, %c0_42] : memref<16x384xf32, #tpu.memory_space<vmem>>, vector<1x128xf32>
    %67 = vector.broadcast %66 : vector<1x128xf32> to vector<16x128xf32>
    %68 = arith.addf %65, %67 : vector<16x128xf32>
    %69 = vector.extract_strided_slice %34 {offsets = [0, 256], sizes = [16, 128], strides = [1, 1]} : vector<16x384xf32> to vector<16x128xf32>
    %70 = arith.addf %68, %69 : vector<16x128xf32>
    %71 = vector.extract_strided_slice %39 {offsets = [0, 128], sizes = [16, 128], strides = [1, 1]} : vector<16x256xf32> to vector<16x128xf32>
    %72 = arith.addf %70, %71 : vector<16x128xf32>
    %cst_43 = arith.constant 0.000000e+00 : f32
    %73 = vector.broadcast %cst_43 : f32 to vector<16x128xf32>
    %74 = arith.maximumf %72, %73 : vector<16x128xf32>
    %75 = arith.truncf %74 : vector<16x128xf32> to vector<16x128xbf16>
    %c640 = arith.constant 640 : index
    %c0_44 = arith.constant 0 : index
    %76 = vector.load %arg4[%c640, %c0_44] : memref<1024x128xbf16, #tpu.memory_space<vmem>>, vector<128x128xbf16>
    %cst_45 = arith.constant dense<0.000000e+00> : vector<16x128xf32>
    %77 = tpu.matmul %75, %76, %cst_45 {dimension_numbers = #tpu.dot_dimension_numbers<[1], [0], [0], [1], [0, 0, 1, 1], [], []>} : vector<16x128xbf16>, vector<128x128xbf16>, vector<16x128xf32> -> vector<16x128xf32>
    %c8 = arith.constant 8 : index
    %c0_46 = arith.constant 0 : index
    %78 = vector.load %arg5[%c8, %c0_46] : memref<16x384xf32, #tpu.memory_space<vmem>>, vector<1x128xf32>
    %79 = vector.broadcast %78 : vector<1x128xf32> to vector<16x128xf32>
    %80 = arith.addf %77, %79 : vector<16x128xf32>
    %cst_47 = arith.constant 0.000000e+00 : f32
    %81 = vector.broadcast %cst_47 : f32 to vector<16x128xf32>
    %82 = arith.maximumf %80, %81 : vector<16x128xf32>
    %83 = arith.truncf %82 : vector<16x128xf32> to vector<16x128xbf16>
    %c768 = arith.constant 768 : index
    %c0_48 = arith.constant 0 : index
    %84 = vector.load %arg4[%c768, %c0_48] : memref<1024x128xbf16, #tpu.memory_space<vmem>>, vector<128x128xbf16>
    %cst_49 = arith.constant dense<0.000000e+00> : vector<16x128xf32>
    %85 = tpu.matmul %83, %84, %cst_49 {dimension_numbers = #tpu.dot_dimension_numbers<[1], [0], [0], [1], [0, 0, 1, 1], [], []>} : vector<16x128xbf16>, vector<128x128xbf16>, vector<16x128xf32> -> vector<16x128xf32>
    %c9 = arith.constant 9 : index
    %c0_50 = arith.constant 0 : index
    %86 = vector.load %arg5[%c9, %c0_50] : memref<16x384xf32, #tpu.memory_space<vmem>>, vector<1x128xf32>
    %87 = vector.broadcast %86 : vector<1x128xf32> to vector<16x128xf32>
    %88 = arith.addf %85, %87 : vector<16x128xf32>
    %89 = arith.addf %88, %74 : vector<16x128xf32>
    %cst_51 = arith.constant 0.000000e+00 : f32
    %90 = vector.broadcast %cst_51 : f32 to vector<16x128xf32>
    %91 = arith.maximumf %89, %90 : vector<16x128xf32>
    %92 = arith.truncf %91 : vector<16x128xf32> to vector<16x128xbf16>
    %c896 = arith.constant 896 : index
    %c0_52 = arith.constant 0 : index
    %93 = vector.load %arg4[%c896, %c0_52] : memref<1024x128xbf16, #tpu.memory_space<vmem>>, vector<128x128xbf16>
    %cst_53 = arith.constant dense<0.000000e+00> : vector<16x128xf32>
    %94 = tpu.matmul %92, %93, %cst_53 {dimension_numbers = #tpu.dot_dimension_numbers<[1], [0], [0], [1], [0, 0, 1, 1], [], []>} : vector<16x128xbf16>, vector<128x128xbf16>, vector<16x128xf32> -> vector<16x128xf32>
    %c10 = arith.constant 10 : index
    %c0_54 = arith.constant 0 : index
    %95 = vector.load %arg5[%c10, %c0_54] : memref<16x384xf32, #tpu.memory_space<vmem>>, vector<1x128xf32>
    %96 = vector.broadcast %95 : vector<1x128xf32> to vector<16x128xf32>
    %97 = arith.addf %94, %96 : vector<16x128xf32>
    %c0_55 = arith.constant 0 : index
    %c0_56 = arith.constant 0 : index
    %98 = vector.load %arg6[%c0_55, %c0_56] : memref<16x512xf32, #tpu.memory_space<vmem>>, vector<16x128xf32>
    tpu.vector_store %arg6[%c0_55, %c0_56], %97 {strides = array<i32>} : memref<16x512xf32, #tpu.memory_space<vmem>>, vector<16x128xf32>,
    return
  }
  func.func @transform_0(%arg0: i32) -> (i32, i32) {
    %c0_i32 = arith.constant 0 : i32
    %c0_i32_0 = arith.constant 0 : i32
    return %arg0, %c0_i32 : i32, i32
  }
  func.func @transform_1(%arg0: i32) -> (i32, i32) {
    %c0_i32 = arith.constant 0 : i32
    %c0_i32_0 = arith.constant 0 : i32
    return %arg0, %c0_i32 : i32, i32
  }
  func.func @transform_2(%arg0: i32) -> (i32, i32) {
    %c0_i32 = arith.constant 0 : i32
    %c0_i32_0 = arith.constant 0 : i32
    %c0_i32_1 = arith.constant 0 : i32
    return %c0_i32, %c0_i32_0 : i32, i32
  }
  func.func @transform_3(%arg0: i32) -> (i32, i32) {
    %c0_i32 = arith.constant 0 : i32
    %c0_i32_0 = arith.constant 0 : i32
    %c0_i32_1 = arith.constant 0 : i32
    return %c0_i32, %c0_i32_0 : i32, i32
  }
  func.func @transform_4(%arg0: i32) -> (i32, i32) {
    %c0_i32 = arith.constant 0 : i32
    %c0_i32_0 = arith.constant 0 : i32
    %c0_i32_1 = arith.constant 0 : i32
    return %c0_i32, %c0_i32_0 : i32, i32
  }
  func.func @transform_5(%arg0: i32) -> (i32, i32) {
    %c0_i32 = arith.constant 0 : i32
    %c0_i32_0 = arith.constant 0 : i32
    return %arg0, %c0_i32 : i32, i32
  }
}

</mosaic_0001>

<llo_original>
// kernel: tpu_custom_call.1
$region0: #{tpu_custom_call.1}
  #allocation0 [shape = 'u32[]', space=smem, size = 0x4, offset = 0x4, fixed_abs, tag = 'smem constant byte address 0x4 - core index']
  #allocation1 [shape = 'u32[144,128]{1,0:T(1,128)}', space=vmem, size = 0x12000, scoped, tag = 'internal scratch']
  %s0 = inlined_call_operand.hbm [shape: bf16[32,128], index: 0, kind: input, shape index: {}]
  %s1 = inlined_call_operand.hbm [shape: bf16[32,128], index: 1, kind: input, shape index: {}]
  %s2 = inlined_call_operand.hbm [shape: bf16[384,384], index: 2, kind: input, shape index: {}]
  %s3 = inlined_call_operand.hbm [shape: bf16[1024,128], index: 3, kind: input, shape index: {}]
  %s4 = inlined_call_operand.hbm [shape: f32[16,384], index: 4, kind: input, shape index: {}]
  %s5 = inlined_call_operand.hbm [shape: f32[32,512], index: 5, kind: output, shape index: {}]
  %s6 = sld [smem:[#allocation0]]
  $region73: #{tpu_custom_call.1} parent=0
    _
  %s8 = ssub.s32 1, %s6
  %s9 = scalar_select 0, %s8, %s6
  $region1: #{tpu_custom_call.1} parent=0
    #allocation2 [shape = 'u8[8192]{0}', space=vmem, size = 0x2000, scoped, tag = 'input window, operand 0']
    #allocation3 [shape = 's32[2]{0}', space=sflag, size = 0x8, scoped, tag = 'scoped memory for tpu_custom_call.1']
    #allocation4 [shape = 's32[2]{0}', space=sflag, size = 0x8, scoped, tag = 'scoped memory for tpu_custom_call.1']
    #allocation5 [shape = 'u8[8192]{0}', space=vmem, size = 0x2000, scoped, tag = 'input window, operand 1']
    #allocation6 [shape = 's32[2]{0}', space=sflag, size = 0x8, scoped, tag = 'scoped memory for tpu_custom_call.1']
    #allocation7 [shape = 'u8[294912]{0}', space=vmem, size = 0x48000, scoped, tag = 'input window, operand 2, single buffered']
    #allocation8 [shape = 'u8[262144]{0}', space=vmem, size = 0x40000, scoped, tag = 'input window, operand 3, single buffered']
    #allocation9 [shape = 's32[1]{0}', space=sflag, size = 0x4, scoped, tag = 'scoped memory for tpu_custom_call.1']
    #allocation10 [shape = 'u8[24576]{0}', space=vmem, size = 0x6000, scoped, tag = 'input window, operand 4, single buffered']
    #allocation11 [shape = 'u8[65536]{0}', space=vmem, size = 0x10000, scoped, tag = 'output window, operand 0']
    %10 = vsyncpa [#allocation3], 0
    %s11 = scalar_lea.sflag [#allocation3], 1
    %12 = vsyncpa %s11, 0
    %13 = vsyncpa [#allocation6], 0
    %s14 = scalar_lea.sflag [#allocation6], 1
    %15 = vsyncpa %s14, 0
    %16 = vsyncpa [#allocation9], 0
    %17 = vsyncpa [#allocation4], 0
    %s18 = scalar_lea.sflag [#allocation4], 1
    %19 = vsyncpa %s18, 0
    loop: start=0, step=1, limit=4
    $region2: #{tpu_custom_call.1} parent=1 // loop_pre_header
      _
    $region3: #{tpu_custom_call.1} parent=1 // loop_header
      %s21 = sphi 0, %s25
      %p22 = scmp.ge.s32.totalorder %s21, 4
      %s31 = sphi 0, %s33
      %s34 = sphi 0, %s31
      %s35 = sphi 0, %s34
      %s51 = sphi 0, %s35
      %s57 = sphi 0, %s59
      %s60 = sphi 0, %s57
      %s61 = sphi 0, %s60
      %s77 = sphi 0, %s61
      %s81 = sphi 0, %s81
      %s83 = sphi 0, %s81
      %s84 = sphi 0, %s83
      %s98 = sphi 0, %s84
      %s102 = sphi 0, %s102
      %s104 = sphi 0, %s102
      %s105 = sphi 0, %s104
      %s119 = sphi 0, %s105
      %s123 = sphi 0, %s123
      %s125 = sphi 0, %s123
      %s126 = sphi 0, %s125
      %s140 = sphi 0, %s126
      %s146 = sphi 0, %s148
      %s149 = sphi 0, %s146
      %s150 = sphi 0, %s149
      %s166 = sphi 0, %s150
    $region4: #{tpu_custom_call.1} parent=1 // loop_header_branch
      %24 = sbr.rel (%p22) target = $region8
    $region5: #{tpu_custom_call.1} parent=1 // loop_body
      %s26 = ssub.s32 %s21, 1
      %s27 = ssub.s32 %s21, 2
      %s28 = sadd.s32 %s21, 1
      %s29 = ssub.s32 %s21, %s28
      %p30 = scmp.eq.s32.totalorder %s29, 0
      %s32 = sadd.s32 %s31, 1
      %s33 = scalar_select %p30, %s31, %s32
      %p36 = pneg %p30
      %p37 = scmp.eq.s32.totalorder %s21, 1
      %p38 = por %p36, %p37
      %p39 = scmp.ne.s32.totalorder %s31, %s34
      %p40 = scmp.eq.s32.totalorder %s21, 0
      %p41 = por %p39, %p40
      %p42 = scmp.ne.s32.totalorder %s31, %s34
      %p43 = scmp.eq.s32.totalorder %s26, 1
      %p44 = por %p42, %p43
      %p45 = scmp.ne.s32.totalorder %s34, %s35
      %p46 = scmp.eq.s32.totalorder %s26, 0
      %p47 = por %p45, %p46
      %p48 = scmp.ne.s32.totalorder %s34, %s35
      %p49 = scmp.eq.s32.totalorder %s27, 1
      %p50 = por %p48, %p49
      %p52 = scmp.ne.s32.totalorder %s35, %s51
      %p53 = scmp.eq.s32.totalorder %s27, 0
      %p54 = por %p52, %p53
      %s55 = ssub.s32 %s21, %s28
      %p56 = scmp.eq.s32.totalorder %s55, 0
      %s58 = sadd.s32 %s57, 1
      %s59 = scalar_select %p56, %s57, %s58
      %p62 = pneg %p56
      %p63 = scmp.eq.s32.totalorder %s21, 1
      %p64 = por %p62, %p63
      %p65 = scmp.ne.s32.totalorder %s57, %s60
      %p66 = scmp.eq.s32.totalorder %s21, 0
      %p67 = por %p65, %p66
      %p68 = scmp.ne.s32.totalorder %s57, %s60
      %p69 = scmp.eq.s32.totalorder %s26, 1
      %p70 = por %p68, %p69
      %p71 = scmp.ne.s32.totalorder %s60, %s61
      %p72 = scmp.eq.s32.totalorder %s26, 0
      %p73 = por %p71, %p72
      %p74 = scmp.ne.s32.totalorder %s60, %s61
      %p75 = scmp.eq.s32.totalorder %s27, 1
      %p76 = por %p74, %p75
      %p78 = scmp.ne.s32.totalorder %s61, %s77
      %p79 = scmp.eq.s32.totalorder %s27, 0
      %p80 = por %p78, %p79
      %s82 = sadd.s32 %s81, 1
      %p85 = scmp.eq.s32.totalorder %s21, 1
      %p86 = scmp.ne.s32.totalorder %s81, %s83
      %p87 = scmp.eq.s32.totalorder %s21, 0
      %p88 = por %p86, %p87
      %p89 = scmp.ne.s32.totalorder %s81, %s83
      %p90 = scmp.eq.s32.totalorder %s26, 1
      %p91 = por %p89, %p90
      %p92 = scmp.ne.s32.totalorder %s83, %s84
      %p93 = scmp.eq.s32.totalorder %s26, 0
      %p94 = por %p92, %p93
      %p95 = scmp.ne.s32.totalorder %s83, %s84
      %p96 = scmp.eq.s32.totalorder %s27, 1
      %p97 = por %p95, %p96
      %p99 = scmp.ne.s32.totalorder %s84, %s98
      %p100 = scmp.eq.s32.totalorder %s27, 0
      %p101 = por %p99, %p100
      %s103 = sadd.s32 %s102, 1
      %p106 = scmp.eq.s32.totalorder %s21, 1
      %p107 = scmp.ne.s32.totalorder %s102, %s104
      %p108 = scmp.eq.s32.totalorder %s21, 0
      %p109 = por %p107, %p108
      %p110 = scmp.ne.s32.totalorder %s102, %s104
      %p111 = scmp.eq.s32.totalorder %s26, 1
      %p112 = por %p110, %p111
      %p113 = scmp.ne.s32.totalorder %s104, %s105
      %p114 = scmp.eq.s32.totalorder %s26, 0
      %p115 = por %p113, %p114
      %p116 = scmp.ne.s32.totalorder %s104, %s105
      %p117 = scmp.eq.s32.totalorder %s27, 1
      %p118 = por %p116, %p117
      %p120 = scmp.ne.s32.totalorder %s105, %s119
      %p121 = scmp.eq.s32.totalorder %s27, 0
      %p122 = por %p120, %p121
      %s124 = sadd.s32 %s123, 1
      %p127 = scmp.eq.s32.totalorder %s21, 1
      %p128 = scmp.ne.s32.totalorder %s123, %s125
      %p129 = scmp.eq.s32.totalorder %s21, 0
      %p130 = por %p128, %p129
      %p131 = scmp.ne.s32.totalorder %s123, %s125
      %p132 = scmp.eq.s32.totalorder %s26, 1
      %p133 = por %p131, %p132
      %p134 = scmp.ne.s32.totalorder %s125, %s126
      %p135 = scmp.eq.s32.totalorder %s26, 0
      %p136 = por %p134, %p135
      %p137 = scmp.ne.s32.totalorder %s125, %s126
      %p138 = scmp.eq.s32.totalorder %s27, 1
      %p139 = por %p137, %p138
      %p141 = scmp.ne.s32.totalorder %s126, %s140
      %p142 = scmp.eq.s32.totalorder %s27, 0
      %p143 = por %p141, %p142
      %s144 = ssub.s32 %s21, %s28
      %p145 = scmp.eq.s32.totalorder %s144, 0
      %s147 = sadd.s32 %s146, 1
      %s148 = scalar_select %p145, %s146, %s147
      %p151 = pneg %p145
      %p152 = scmp.eq.s32.totalorder %s21, 1
      %p153 = por %p151, %p152
      %p154 = scmp.ne.s32.totalorder %s146, %s149
      %p155 = scmp.eq.s32.totalorder %s21, 0
      %p156 = por %p154, %p155
      %p157 = scmp.ne.s32.totalorder %s146, %s149
      %p158 = scmp.eq.s32.totalorder %s26, 1
      %p159 = por %p157, %p158
      %p160 = scmp.ne.s32.totalorder %s149, %s150
      %p161 = scmp.eq.s32.totalorder %s26, 0
      %p162 = por %p160, %p161
      %p163 = scmp.ne.s32.totalorder %s149, %s150
      %p164 = scmp.eq.s32.totalorder %s27, 1
      %p165 = por %p163, %p164
      %p167 = scmp.ne.s32.totalorder %s150, %s166
      %p168 = scmp.eq.s32.totalorder %s27, 0
      %p169 = por %p167, %p168
      %p170 = scmp.le.s32.totalorder 1, %s21
      %p171 = scmp.lt.s32.totalorder %s21, 3
      %p172 = pnand %p170, %p171
      %p173 = pneg %p172
      // Predicated region
      $region9: #{tpu_custom_call.1} parent=5 // pred_check
        _
      $region10: #{tpu_custom_call.1} parent=5 // pred_check_branch
        %175 = sbr.rel (%p172) target = $region12
      $region11: #{tpu_custom_call.1} parent=5 // pred_region
        %s176 = ssub.s32 %s21, 1
        // Predicated region
        $region13: #{tpu_custom_call.1} parent=11 // pred_check
          %p177 = pneg %p94
        $region14: #{tpu_custom_call.1} parent=11 // pred_check_branch
          %179 = sbr.rel (%p177) target = $region16
        $region15: #{tpu_custom_call.1} parent=11 // pred_region
          %s181 = ssub.s32 9216, 9216
          %182 = vsyncadd [#allocation6], %s181
          %s183 = sshll.u32 [#allocation7], 4
          %s184 = int_to_ptr.vmem [resolvable:$true] %s183
          %189 = dma.hbm_to_vmem [thread:$0]  %s2, 9216, %s184, [#allocation6], 192, 192, 12
        $region16: #{tpu_custom_call.1} parent=11 // pred_fallthru
          _
        // Predicated region
        $region17: #{tpu_custom_call.1} parent=11 // pred_check
          %p190 = pneg %p115
        $region18: #{tpu_custom_call.1} parent=11 // pred_check_branch
          %192 = sbr.rel (%p190) target = $region20
        $region19: #{tpu_custom_call.1} parent=11 // pred_region
          %s194 = ssub.s32 8192, 8192
          %195 = vsyncadd [#allocation9], %s194
          %s196 = sshll.u32 [#allocation8], 4
          %s197 = int_to_ptr.vmem [resolvable:$true] %s196
          %202 = dma.hbm_to_vmem [thread:$0]  %s3, 8192, %s197, [#allocation9], 64, 64, 4
        $region20: #{tpu_custom_call.1} parent=11 // pred_fallthru
          _
        // Predicated region
        $region21: #{tpu_custom_call.1} parent=11 // pred_check
          %p203 = pneg %p136
        $region22: #{tpu_custom_call.1} parent=11 // pred_check_branch
          %205 = sbr.rel (%p203) target = $region24
        $region23: #{tpu_custom_call.1} parent=11 // pred_region
          %s207 = ssub.s32 768, 768
          %208 = vsyncadd [#allocation9], %s207
          %s209 = sshll.u32 [#allocation10], 4
          %s210 = int_to_ptr.vmem [resolvable:$true] %s209
          %215 = dma.hbm_to_vmem [thread:$0]  %s4, 768, %s210, [#allocation9], 384, 384, 24
        $region24: #{tpu_custom_call.1} parent=11 // pred_fallthru
          _
      $region12: #{tpu_custom_call.1} parent=5 // pred_fallthru
        _
      %p216 = scmp.lt.s32.totalorder %s21, 2
      // Predicated region
      $region25: #{tpu_custom_call.1} parent=5 // pred_check
        %p217 = pneg %p216
      $region26: #{tpu_custom_call.1} parent=5 // pred_check_branch
        %219 = sbr.rel (%p217) target = $region28
      $region27: #{tpu_custom_call.1} parent=5 // pred_region
        // Predicated region
        $region29: #{tpu_custom_call.1} parent=27 // pred_check
          %p220 = pneg %p41
        $region30: #{tpu_custom_call.1} parent=27 // pred_check_branch
          %222 = sbr.rel (%p220) target = $region32
        $region31: #{tpu_custom_call.1} parent=27 // pred_region
          %s223 = sand.u32 %s31, 1
          %s224 = scalar_lea.sflag [#allocation3], %s223
          %s225 = sand.u32 %s31, 1
          %s226 = smul.addr %s225, 8
          %s227 = scalar_lea.vmem [#allocation2], %s226
          %s228 = smul.u32 2, %s21
          %s230 = ssub.s32 128, 128
          %231 = vsyncadd %s224, %s230
          %s232 = smul.addr %s228, 64
          %s233 = scalar_lea.hbm %s0, %s232
          %s234 = sshll.u32 %s227, 4
          %s235 = int_to_ptr.vmem [resolvable:$true] %s234
          %240 = dma.hbm_to_vmem [thread:$0]  %s233, 128, %s235, %s224, 64, 64, 4
        $region32: #{tpu_custom_call.1} parent=27 // pred_fallthru
          _
        // Predicated region
        $region33: #{tpu_custom_call.1} parent=27 // pred_check
          %p241 = pneg %p67
        $region34: #{tpu_custom_call.1} parent=27 // pred_check_branch
          %243 = sbr.rel (%p241) target = $region36
        $region35: #{tpu_custom_call.1} parent=27 // pred_region
          %s244 = sand.u32 %s21, 1
          %s245 = scalar_lea.sflag [#allocation6], %s244
          %s246 = sand.u32 %s57, 1
          %s247 = smul.addr %s246, 8
          %s248 = scalar_lea.vmem [#allocation5], %s247
          %s249 = smul.u32 2, %s21
          %s251 = ssub.s32 128, 128
          %252 = vsyncadd %s245, %s251
          %s253 = smul.addr %s249, 64
          %s254 = scalar_lea.hbm %s1, %s253
          %s255 = sshll.u32 %s248, 4
          %s256 = int_to_ptr.vmem [resolvable:$true] %s255
          %261 = dma.hbm_to_vmem [thread:$0]  %s254, 128, %s256, %s245, 64, 64, 4
        $region36: #{tpu_custom_call.1} parent=27 // pred_fallthru
          _
      $region28: #{tpu_custom_call.1} parent=5 // pred_fallthru
        _
      %p262 = scmp.le.s32.totalorder 1, %s21
      %p263 = scmp.lt.s32.totalorder %s21, 3
      %p264 = pnand %p262, %p263
      %p265 = pneg %p264
      // Predicated region
      $region37: #{tpu_custom_call.1} parent=5 // pred_check
        _
      $region38: #{tpu_custom_call.1} parent=5 // pred_check_branch
        %267 = sbr.rel (%p264) target = $region40
      $region39: #{tpu_custom_call.1} parent=5 // pred_region
        %s268 = ssub.s32 %s21, 1
        %s269 = sand.u32 %s34, 1
        %s270 = scalar_lea.sflag [#allocation3], %s269
        %s271 = sand.u32 %s34, 1
        %s272 = smul.addr %s271, 8
        %s273 = scalar_lea.vmem [#allocation2], %s272
        // Predicated region
        $region41: #{tpu_custom_call.1} parent=39 // pred_check
          %p274 = pneg %p47
        $region42: #{tpu_custom_call.1} parent=39 // pred_check_branch
          %276 = sbr.rel (%p274) target = $region44
        $region43: #{tpu_custom_call.1} parent=39 // pred_region
          %277 = dma.done %s270, 128
        $region44: #{tpu_custom_call.1} parent=39 // pred_fallthru
          _
        %s278 = sand.u32 %s26, 1
        %s279 = scalar_lea.sflag [#allocation6], %s278
        %s280 = sand.u32 %s60, 1
        %s281 = smul.addr %s280, 8
        %s282 = scalar_lea.vmem [#allocation5], %s281
        // Predicated region
        $region45: #{tpu_custom_call.1} parent=39 // pred_check
          %p283 = pneg %p73
        $region46: #{tpu_custom_call.1} parent=39 // pred_check_branch
          %285 = sbr.rel (%p283) target = $region48
        $region47: #{tpu_custom_call.1} parent=39 // pred_region
          %286 = dma.done %s279, 128
        $region48: #{tpu_custom_call.1} parent=39 // pred_fallthru
          _
        // Predicated region
        $region49: #{tpu_custom_call.1} parent=39 // pred_check
          %p287 = pneg %p94
        $region50: #{tpu_custom_call.1} parent=39 // pred_check_branch
          %289 = sbr.rel (%p287) target = $region52
        $region51: #{tpu_custom_call.1} parent=39 // pred_region
          %290 = dma.done [#allocation6], 9216
        $region52: #{tpu_custom_call.1} parent=39 // pred_fallthru
          _
        // Predicated region
        $region53: #{tpu_custom_call.1} parent=39 // pred_check
          %p291 = pneg %p115
        $region54: #{tpu_custom_call.1} parent=39 // pred_check_branch
          %293 = sbr.rel (%p291) target = $region56
        $region55: #{tpu_custom_call.1} parent=39 // pred_region
          %294 = dma.done [#allocation9], 8192
        $region56: #{tpu_custom_call.1} parent=39 // pred_fallthru
          _
        // Predicated region
        $region57: #{tpu_custom_call.1} parent=39 // pred_check
          %p295 = pneg %p136
        $region58: #{tpu_custom_call.1} parent=39 // pred_check_branch
          %297 = sbr.rel (%p295) target = $region60
        $region59: #{tpu_custom_call.1} parent=39 // pred_region
          %298 = dma.done [#allocation9], 768
        $region60: #{tpu_custom_call.1} parent=39 // pred_fallthru
          _
        %s299 = sand.u32 %s34, 1
        %s300 = scalar_lea.sflag [#allocation3], %s299
        %s301 = sand.u32 %s34, 1
        %s302 = smul.addr %s301, 8
        %s303 = scalar_lea.vmem [#allocation2], %s302
        %p304 = pneg %p47
        %p305 = pneg %p44
        %s306 = sand.u32 %s26, 1
        %s307 = scalar_lea.sflag [#allocation6], %s306
        %s308 = sand.u32 %s60, 1
        %s309 = smul.addr %s308, 8
        %s310 = scalar_lea.vmem [#allocation5], %s309
        %p311 = pneg %p73
        %p312 = pneg %p70
        %p313 = pneg %p94
        %p314 = pneg %p91
        %p315 = pneg %p115
        %p316 = pneg %p112
        %p317 = pneg %p136
        %p318 = pneg %p133
        %p319 = pneg %p162
        %p320 = pneg %p159
        %s321 = sand.u32 %s149, 1
        %s322 = scalar_lea.sflag [#allocation4], %s321
        %s323 = sand.u32 %s149, 1
        %s324 = smul.addr %s323, 64
        %s325 = scalar_lea.vmem [#allocation11], %s324
        %s326 = smul.u32 2, %s26
        %s327 = smul.u32 2, %s26
        %s328 = smul.u32 2, %s26
        %v330 = vld [vmem:[%s273] sm:$0xf]
        %v331 = vld [vmem:[%s273 + $0x4] sm:$0xf]
        %v332 = vld [vmem:[%s282] sm:$0xf]
        %v333 = vld [vmem:[%s282 + $0x4] sm:$0xf]
        %v334 = vld [vmem:[#allocation7] sm:$0xff]
        %v335 = vld [vmem:[#allocation7 + $0xc] sm:$0xff]
        %v336 = vld [vmem:[#allocation7 + $0x18] sm:$0xff]
        %v337 = vld [vmem:[#allocation7 + $0x24] sm:$0xff]
        %v338 = vld [vmem:[#allocation7 + $0x30] sm:$0xff]
        %v339 = vld [vmem:[#allocation7 + $0x3c] sm:$0xff]
        %v340 = vld [vmem:[#allocation7 + $0x48] sm:$0xff]
        %v341 = vld [vmem:[#allocation7 + $0x54] sm:$0xff]
        %v342 = vld [vmem:[#allocation7 + $0x60] sm:$0xff]
        %v343 = vld [vmem:[#allocation7 + $0x6c] sm:$0xff]
        %v344 = vld [vmem:[#allocation7 + $0x78] sm:$0xff]
        %v345 = vld [vmem:[#allocation7 + $0x84] sm:$0xff]
        %v346 = vld [vmem:[#allocation7 + $0x90] sm:$0xff]
        %v347 = vld [vmem:[#allocation7 + $0x9c] sm:$0xff]
        %v348 = vld [vmem:[#allocation7 + $0xa8] sm:$0xff]
        %v349 = vld [vmem:[#allocation7 + $0xb4] sm:$0xff]
        %v350 = vld [vmem:[#allocation10] ss:$8 sm:$0x3]
        %v352 = vlaneseq
        %v353 = vshrl.u32 %v352, 7
        %v354 = vsub.s32 0, %v353
        %v355 = vrot.slane %v350, %v354
        %v356 = vlaneseq
        %v357 = vshrl.u32 %v356, 7
        %v358 = vsub.s32 1, %v357
        %v359 = vrot.slane %v350, %v358
        %v364 = vunpack.c.l.b16 %v330
        %v365 = vunpack.c.l.b16 %v331
        %v366 = vpack.c.b16 %v365, %v364
        %v384 = vunpack.c.l.b16 %v334
        %v385 = vunpack.c.h.b16 %v334
        %v386 = vunpack.c.l.b16 %v335
        %v387 = vunpack.c.h.b16 %v335
        %v388 = vunpack.c.l.b16 %v336
        %v389 = vunpack.c.h.b16 %v336
        %v390 = vunpack.c.l.b16 %v337
        %v391 = vunpack.c.h.b16 %v337
        %v392 = vunpack.c.l.b16 %v338
        %v393 = vunpack.c.h.b16 %v338
        %v394 = vunpack.c.l.b16 %v339
        %v395 = vunpack.c.h.b16 %v339
        %v396 = vunpack.c.l.b16 %v340
        %v397 = vunpack.c.h.b16 %v340
        %v398 = vunpack.c.l.b16 %v341
        %v399 = vunpack.c.h.b16 %v341
        %v400 = vunpack.c.l.b16 %v342
        %v401 = vunpack.c.h.b16 %v342
        %v402 = vunpack.c.l.b16 %v343
        %v403 = vunpack.c.h.b16 %v343
        %v404 = vunpack.c.l.b16 %v344
        %v405 = vunpack.c.h.b16 %v344
        %v406 = vunpack.c.l.b16 %v345
        %v407 = vunpack.c.h.b16 %v345
        %v408 = vunpack.c.l.b16 %v346
        %v409 = vunpack.c.h.b16 %v346
        %v410 = vunpack.c.l.b16 %v347
        %v411 = vunpack.c.h.b16 %v347
        %v412 = vunpack.c.l.b16 %v348
        %v413 = vunpack.c.h.b16 %v348
        %v414 = vunpack.c.l.b16 %v349
        %v415 = vunpack.c.h.b16 %v349
        %v416 = vpack.c.b16 %v386, %v384
        %v417 = vpack.c.b16 %v387, %v385
        %v418 = vpack.c.b16 %v390, %v388
        %v419 = vpack.c.b16 %v391, %v389
        %v420 = vpack.c.b16 %v394, %v392
        %v421 = vpack.c.b16 %v395, %v393
        %v422 = vpack.c.b16 %v398, %v396
        %v423 = vpack.c.b16 %v399, %v397
        %v424 = vpack.c.b16 %v402, %v400
        %v425 = vpack.c.b16 %v403, %v401
        %v426 = vpack.c.b16 %v406, %v404
        %v427 = vpack.c.b16 %v407, %v405
        %v428 = vpack.c.b16 %v410, %v408
        %v429 = vpack.c.b16 %v411, %v409
        %v430 = vpack.c.b16 %v414, %v412
        %v431 = vpack.c.b16 %v415, %v413
        %448 = vmatprep.subr.bf16.mxu0 %v431
        %449 = vmatpush1.bf16.msra.mxu0 %v430
        %450 = vmatprep.subr.bf16.mxu0 %v429
        %451 = vmatpush1.bf16.msra.mxu0 %v428
        %452 = vmatprep.subr.bf16.mxu0 %v427
        %453 = vmatpush1.bf16.msra.mxu0 %v426
        %454 = vmatprep.subr.bf16.mxu0 %v425
        %455 = vmatpush1.bf16.msra.mxu0 %v424
        %456 = vmatprep.subr.bf16.mxu0 %v423
        %457 = vmatpush1.bf16.msra.mxu0 %v422
        %458 = vmatprep.subr.bf16.mxu0 %v421
        %459 = vmatpush1.bf16.msra.mxu0 %v420
        %460 = vmatprep.subr.bf16.mxu0 %v419
        %461 = vmatpush1.bf16.msra.mxu0 %v418
        %462 = vmatprep.subr.bf16.mxu0 %v417
        %463 = vmatpush1.bf16.msra.mxu0 %v416
        %464 = vmatprep.subr.bf16.mxu0 0
        %465 = vmatpush2.bf16.msra.mxu0 0
        %466 = vmatprep.subr.bf16.mxu0 0
        %467 = vmatpush2.bf16.msra.mxu0 0
        %468 = vmatprep.subr.bf16.mxu0 0
        %469 = vmatpush2.bf16.msra.mxu0 0
        %470 = vmatprep.subr.bf16.mxu0 0
        %471 = vmatpush2.bf16.msra.mxu0 0
        %472 = vmatprep.subr.bf16.mxu0 0
        %473 = vmatpush2.bf16.msra.mxu0 0
        %474 = vmatprep.subr.bf16.mxu0 0
        %475 = vmatpush2.bf16.msra.mxu0 0
        %476 = vmatprep.subr.bf16.mxu0 0
        %477 = vmatpush2.bf16.msra.mxu0 0
        %478 = vmatprep.subr.bf16.mxu0 0
        %479 = vmatpush2.bf16.msra.mxu0 0
        %480 = vmatprep.mubr.bf16.mxu0 0
        %481 = vmatmul.mubr.bf16.gmra.mxu0 %v366
        %v482 = vpop.f32.mrf.mxu0
        %v483 = vadd.f32 %v355, %v482
        %v484 = vpop.f32.mrf.mxu0
        %v485 = vadd.f32 %v359, %v484
        %v486 = vpop.f32.mrf.mxu0
        %v487 = vadd.f32 %v355, %v486
        %v488 = vpop.f32.mrf.mxu0
        %v489 = vadd.f32 %v359, %v488
        %490 = vdwg.mxu0
        %491 = vst [vmem:[%s325 + $0x18] sm:$0xff] %v485
        %492 = vst [vmem:[%s325 + $0x38] sm:$0xff] %v489
        %v493 = vmax.f32 %v483, 0.0
        %v494 = vmax.f32 %v487, 0.0
        %v495 = vpack.c.bf16 %v494, %v493
        %v496 = vld [vmem:[#allocation8] sm:$0xf]
        %v497 = vld [vmem:[#allocation8 + $0x4] sm:$0xf]
        %v498 = vld [vmem:[#allocation8 + $0x8] sm:$0xf]
        %v499 = vld [vmem:[#allocation8 + $0xc] sm:$0xf]
        %v500 = vld [vmem:[#allocation8 + $0x10] sm:$0xf]
        %v501 = vld [vmem:[#allocation8 + $0x14] sm:$0xf]
        %v502 = vld [vmem:[#allocation8 + $0x18] sm:$0xf]
        %v503 = vld [vmem:[#allocation8 + $0x1c] sm:$0xf]
        %v504 = vld [vmem:[#allocation8 + $0x20] sm:$0xf]
        %v505 = vld [vmem:[#allocation8 + $0x24] sm:$0xf]
        %v506 = vld [vmem:[#allocation8 + $0x28] sm:$0xf]
        %v507 = vld [vmem:[#allocation8 + $0x2c] sm:$0xf]
        %v508 = vld [vmem:[#allocation8 + $0x30] sm:$0xf]
        %v509 = vld [vmem:[#allocation8 + $0x34] sm:$0xf]
        %v510 = vld [vmem:[#allocation8 + $0x38] sm:$0xf]
        %v511 = vld [vmem:[#allocation8 + $0x3c] sm:$0xf]
        %v512 = vld [vmem:[#allocation10 + $0x1] ss:$0 sm:$0xff]
        %v529 = vunpack.c.l.b16 %v496
        %v530 = vunpack.c.l.b16 %v497
        %v531 = vunpack.c.l.b16 %v498
        %v532 = vunpack.c.l.b16 %v499
        %v533 = vunpack.c.l.b16 %v500
        %v534 = vunpack.c.l.b16 %v501
        %v535 = vunpack.c.l.b16 %v502
        %v536 = vunpack.c.l.b16 %v503
        %v537 = vunpack.c.l.b16 %v504
        %v538 = vunpack.c.l.b16 %v505
        %v539 = vunpack.c.l.b16 %v506
        %v540 = vunpack.c.l.b16 %v507
        %v541 = vunpack.c.l.b16 %v508
        %v542 = vunpack.c.l.b16 %v509
        %v543 = vunpack.c.l.b16 %v510
        %v544 = vunpack.c.l.b16 %v511
        %v545 = vpack.c.b16 %v530, %v529
        %v546 = vpack.c.b16 %v532, %v531
        %v547 = vpack.c.b16 %v534, %v533
        %v548 = vpack.c.b16 %v536, %v535
        %v549 = vpack.c.b16 %v538, %v537
        %v550 = vpack.c.b16 %v540, %v539
        %v551 = vpack.c.b16 %v542, %v541
        %v552 = vpack.c.b16 %v544, %v543
        %561 = vmatprep.subr.bf16.mxu0 0
        %562 = vmatpush1.bf16.msra.mxu0 %v552
        %563 = vmatprep.subr.bf16.mxu0 0
        %564 = vmatpush1.bf16.msra.mxu0 %v551
        %565 = vmatprep.subr.bf16.mxu0 0
        %566 = vmatpush1.bf16.msra.mxu0 %v550
        %567 = vmatprep.subr.bf16.mxu0 0
        %568 = vmatpush1.bf16.msra.mxu0 %v549
        %569 = vmatprep.subr.bf16.mxu0 0
        %570 = vmatpush1.bf16.msra.mxu0 %v548
        %571 = vmatprep.subr.bf16.mxu0 0
        %572 = vmatpush1.bf16.msra.mxu0 %v547
        %573 = vmatprep.subr.bf16.mxu0 0
        %574 = vmatpush1.bf16.msra.mxu0 %v546
        %575 = vmatprep.subr.bf16.mxu0 0
        %576 = vmatpush1.bf16.msra.mxu0 %v545
        %577 = vmatprep.subr.bf16.mxu0 0
        %578 = vmatpush2.bf16.msra.mxu0 0
        %579 = vmatprep.subr.bf16.mxu0 0
        %580 = vmatpush2.bf16.msra.mxu0 0
        %581 = vmatprep.subr.bf16.mxu0 0
        %582 = vmatpush2.bf16.msra.mxu0 0
        %583 = vmatprep.subr.bf16.mxu0 0
        %584 = vmatpush2.bf16.msra.mxu0 0
        %585 = vmatprep.subr.bf16.mxu0 0
        %586 = vmatpush2.bf16.msra.mxu0 0
        %587 = vmatprep.subr.bf16.mxu0 0
        %588 = vmatpush2.bf16.msra.mxu0 0
        %589 = vmatprep.subr.bf16.mxu0 0
        %590 = vmatpush2.bf16.msra.mxu0 0
        %591 = vmatprep.subr.bf16.mxu0 0
        %592 = vmatpush2.bf16.msra.mxu0 0
        %593 = vmatprep.mubr.bf16.mxu0 0
        %594 = vmatmul.mubr.bf16.gmra.mxu0 %v495
        %v595 = vpop.f32.mrf.mxu0
        %v596 = vadd.f32 %v512, %v595
        %v597 = vpop.f32.mrf.mxu0
        %v598 = vpop.f32.mrf.mxu0
        %v599 = vadd.f32 %v512, %v598
        %v600 = vpop.f32.mrf.mxu0
        %601 = vdwg.mxu0
        %v602 = vmax.f32 %v596, 0.0
        %v603 = vmax.f32 %v599, 0.0
        %v604 = vpack.c.bf16 %v603, %v602
        %v605 = vld [vmem:[#allocation8 + $0x40] sm:$0xf]
        %v606 = vld [vmem:[#allocation8 + $0x44] sm:$0xf]
        %v607 = vld [vmem:[#allocation8 + $0x48] sm:$0xf]
        %v608 = vld [vmem:[#allocation8 + $0x4c] sm:$0xf]
        %v609 = vld [vmem:[#allocation8 + $0x50] sm:$0xf]
        %v610 = vld [vmem:[#allocation8 + $0x54] sm:$0xf]
        %v611 = vld [vmem:[#allocation8 + $0x58] sm:$0xf]
        %v612 = vld [vmem:[#allocation8 + $0x5c] sm:$0xf]
        %v613 = vld [vmem:[#allocation8 + $0x60] sm:$0xf]
        %v614 = vld [vmem:[#allocation8 + $0x64] sm:$0xf]
        %v615 = vld [vmem:[#allocation8 + $0x68] sm:$0xf]
        %v616 = vld [vmem:[#allocation8 + $0x6c] sm:$0xf]
        %v617 = vld [vmem:[#allocation8 + $0x70] sm:$0xf]
        %v618 = vld [vmem:[#allocation8 + $0x74] sm:$0xf]
        %v619 = vld [vmem:[#allocation8 + $0x78] sm:$0xf]
        %v620 = vld [vmem:[#allocation8 + $0x7c] sm:$0xf]
        %v621 = vld [vmem:[#allocation10 + $0x2] ss:$0 sm:$0xff]
        %v638 = vunpack.c.l.b16 %v605
        %v639 = vunpack.c.l.b16 %v606
        %v640 = vunpack.c.l.b16 %v607
        %v641 = vunpack.c.l.b16 %v608
        %v642 = vunpack.c.l.b16 %v609
        %v643 = vunpack.c.l.b16 %v610
        %v644 = vunpack.c.l.b16 %v611
        %v645 = vunpack.c.l.b16 %v612
        %v646 = vunpack.c.l.b16 %v613
        %v647 = vunpack.c.l.b16 %v614
        %v648 = vunpack.c.l.b16 %v615
        %v649 = vunpack.c.l.b16 %v616
        %v650 = vunpack.c.l.b16 %v617
        %v651 = vunpack.c.l.b16 %v618
        %v652 = vunpack.c.l.b16 %v619
        %v653 = vunpack.c.l.b16 %v620
        %v654 = vpack.c.b16 %v639, %v638
        %v655 = vpack.c.b16 %v641, %v640
        %v656 = vpack.c.b16 %v643, %v642
        %v657 = vpack.c.b16 %v645, %v644
        %v658 = vpack.c.b16 %v647, %v646
        %v659 = vpack.c.b16 %v649, %v648
        %v660 = vpack.c.b16 %v651, %v650
        %v661 = vpack.c.b16 %v653, %v652
        %670 = vmatprep.subr.bf16.mxu0 0
        %671 = vmatpush1.bf16.msra.mxu0 %v661
        %672 = vmatprep.subr.bf16.mxu0 0
        %673 = vmatpush1.bf16.msra.mxu0 %v660
        %674 = vmatprep.subr.bf16.mxu0 0
        %675 = vmatpush1.bf16.msra.mxu0 %v659
        %676 = vmatprep.subr.bf16.mxu0 0
        %677 = vmatpush1.bf16.msra.mxu0 %v658
        %678 = vmatprep.subr.bf16.mxu0 0
        %679 = vmatpush1.bf16.msra.mxu0 %v657
        %680 = vmatprep.subr.bf16.mxu0 0
        %681 = vmatpush1.bf16.msra.mxu0 %v656
        %682 = vmatprep.subr.bf16.mxu0 0
        %683 = vmatpush1.bf16.msra.mxu0 %v655
        %684 = vmatprep.subr.bf16.mxu0 0
        %685 = vmatpush1.bf16.msra.mxu0 %v654
        %686 = vmatprep.subr.bf16.mxu0 0
        %687 = vmatpush2.bf16.msra.mxu0 0
        %688 = vmatprep.subr.bf16.mxu0 0
        %689 = vmatpush2.bf16.msra.mxu0 0
        %690 = vmatprep.subr.bf16.mxu0 0
        %691 = vmatpush2.bf16.msra.mxu0 0
        %692 = vmatprep.subr.bf16.mxu0 0
        %693 = vmatpush2.bf16.msra.mxu0 0
        %694 = vmatprep.subr.bf16.mxu0 0
        %695 = vmatpush2.bf16.msra.mxu0 0
        %696 = vmatprep.subr.bf16.mxu0 0
        %697 = vmatpush2.bf16.msra.mxu0 0
        %698 = vmatprep.subr.bf16.mxu0 0
        %699 = vmatpush2.bf16.msra.mxu0 0
        %700 = vmatprep.subr.bf16.mxu0 0
        %701 = vmatpush2.bf16.msra.mxu0 0
        %702 = vmatprep.mubr.bf16.mxu0 0
        %703 = vmatmul.mubr.bf16.gmra.mxu0 %v604
        %v704 = vpop.f32.mrf.mxu0
        %v705 = vadd.f32 %v621, %v704
        %v706 = vpop.f32.mrf.mxu0
        %v707 = vpop.f32.mrf.mxu0
        %v708 = vadd.f32 %v621, %v707
        %v709 = vpop.f32.mrf.mxu0
        %710 = vdwg.mxu0
        %v711 = vmax.f32 %v705, 0.0
        %v712 = vmax.f32 %v708, 0.0
        %713 = vst [vmem:[%s325 + $0x8] sm:$0xff] %v711
        %714 = vst [vmem:[%s325 + $0x28] sm:$0xff] %v712
        %v715 = vpack.c.bf16 %v712, %v711
        %v716 = vld [vmem:[#allocation7 + $0xc0] sm:$0xff]
        %v717 = vld [vmem:[#allocation7 + $0xc8] sm:$0xf]
        %v718 = vld [vmem:[#allocation7 + $0xcc] sm:$0xff]
        %v719 = vld [vmem:[#allocation7 + $0xd4] sm:$0xf]
        %v720 = vld [vmem:[#allocation7 + $0xd8] sm:$0xff]
        %v721 = vld [vmem:[#allocation7 + $0xe0] sm:$0xf]
        %v722 = vld [vmem:[#allocation7 + $0xe4] sm:$0xff]
        %v723 = vld [vmem:[#allocation7 + $0xec] sm:$0xf]
        %v724 = vld [vmem:[#allocation7 + $0xf0] sm:$0xff]
        %v725 = vld [vmem:[#allocation7 + $0xf8] sm:$0xf]
        %v726 = vld [vmem:[#allocation7 + $0xfc] sm:$0xff]
        %v727 = vld [vmem:[#allocation7 + $0x104] sm:$0xf]
        %v728 = vld [vmem:[#allocation7 + $0x108] sm:$0xff]
        %v729 = vld [vmem:[#allocation7 + $0x110] sm:$0xf]
        %v730 = vld [vmem:[#allocation7 + $0x114] sm:$0xff]
        %v731 = vld [vmem:[#allocation7 + $0x11c] sm:$0xf]
        %v732 = vld [vmem:[#allocation7 + $0x120] sm:$0xff]
        %v733 = vld [vmem:[#allocation7 + $0x128] sm:$0xf]
        %v734 = vld [vmem:[#allocation7 + $0x12c] sm:$0xff]
        %v735 = vld [vmem:[#allocation7 + $0x134] sm:$0xf]
        %v736 = vld [vmem:[#allocation7 + $0x138] sm:$0xff]
        %v737 = vld [vmem:[#allocation7 + $0x140] sm:$0xf]
        %v738 = vld [vmem:[#allocation7 + $0x144] sm:$0xff]
        %v739 = vld [vmem:[#allocation7 + $0x14c] sm:$0xf]
        %v740 = vld [vmem:[#allocation7 + $0x150] sm:$0xff]
        %v741 = vld [vmem:[#allocation7 + $0x158] sm:$0xf]
        %v742 = vld [vmem:[#allocation7 + $0x15c] sm:$0xff]
        %v743 = vld [vmem:[#allocation7 + $0x164] sm:$0xf]
        %v744 = vld [vmem:[#allocation7 + $0x168] sm:$0xff]
        %v745 = vld [vmem:[#allocation7 + $0x170] sm:$0xf]
        %v746 = vld [vmem:[#allocation7 + $0x174] sm:$0xff]
        %v747 = vld [vmem:[#allocation7 + $0x17c] sm:$0xf]
        %s748 = scalar_lea.vmem [#allocation10], 3
        %v749 = vld [vmem:[%s748] ss:$8 sm:$0x7]
        %v751 = vlaneseq
        %v752 = vshrl.u32 %v751, 7
        %v753 = vsub.s32 0, %v752
        %v754 = vrot.slane %v749, %v753
        %v755 = vlaneseq
        %v756 = vshrl.u32 %v755, 7
        %v757 = vsub.s32 1, %v756
        %v758 = vrot.slane %v749, %v757
        %v759 = vlaneseq
        %v760 = vshrl.u32 %v759, 7
        %v761 = vsub.s32 2, %v760
        %v762 = vrot.slane %v749, %v761
        %v798 = vunpack.c.l.b16 %v716
        %v799 = vunpack.c.h.b16 %v716
        %v800 = vunpack.c.l.b16 %v717
        %v801 = vunpack.c.l.b16 %v718
        %v802 = vunpack.c.h.b16 %v718
        %v803 = vunpack.c.l.b16 %v719
        %v804 = vunpack.c.l.b16 %v720
        %v805 = vunpack.c.h.b16 %v720
        %v806 = vunpack.c.l.b16 %v721
        %v807 = vunpack.c.l.b16 %v722
        %v808 = vunpack.c.h.b16 %v722
        %v809 = vunpack.c.l.b16 %v723
        %v810 = vunpack.c.l.b16 %v724
        %v811 = vunpack.c.h.b16 %v724
        %v812 = vunpack.c.l.b16 %v725
        %v813 = vunpack.c.l.b16 %v726
        %v814 = vunpack.c.h.b16 %v726
        %v815 = vunpack.c.l.b16 %v727
        %v816 = vunpack.c.l.b16 %v728
        %v817 = vunpack.c.h.b16 %v728
        %v818 = vunpack.c.l.b16 %v729
        %v819 = vunpack.c.l.b16 %v730
        %v820 = vunpack.c.h.b16 %v730
        %v821 = vunpack.c.l.b16 %v731
        %v822 = vunpack.c.l.b16 %v732
        %v823 = vunpack.c.h.b16 %v732
        %v824 = vunpack.c.l.b16 %v733
        %v825 = vunpack.c.l.b16 %v734
        %v826 = vunpack.c.h.b16 %v734
        %v827 = vunpack.c.l.b16 %v735
        %v828 = vunpack.c.l.b16 %v736
        %v829 = vunpack.c.h.b16 %v736
        %v830 = vunpack.c.l.b16 %v737
        %v831 = vunpack.c.l.b16 %v738
        %v832 = vunpack.c.h.b16 %v738
        %v833 = vunpack.c.l.b16 %v739
        %v834 = vunpack.c.l.b16 %v740
        %v835 = vunpack.c.h.b16 %v740
        %v836 = vunpack.c.l.b16 %v741
        %v837 = vunpack.c.l.b16 %v742
        %v838 = vunpack.c.h.b16 %v742
        %v839 = vunpack.c.l.b16 %v743
        %v840 = vunpack.c.l.b16 %v744
        %v841 = vunpack.c.h.b16 %v744
        %v842 = vunpack.c.l.b16 %v745
        %v843 = vunpack.c.l.b16 %v746
        %v844 = vunpack.c.h.b16 %v746
        %v845 = vunpack.c.l.b16 %v747
        %v846 = vpack.c.b16 %v801, %v798
        %v847 = vpack.c.b16 %v802, %v799
        %v848 = vpack.c.b16 %v803, %v800
        %v849 = vpack.c.b16 %v807, %v804
        %v850 = vpack.c.b16 %v808, %v805
        %v851 = vpack.c.b16 %v809, %v806
        %v852 = vpack.c.b16 %v813, %v810
        %v853 = vpack.c.b16 %v814, %v811
        %v854 = vpack.c.b16 %v815, %v812
        %v855 = vpack.c.b16 %v819, %v816
        %v856 = vpack.c.b16 %v820, %v817
        %v857 = vpack.c.b16 %v821, %v818
        %v858 = vpack.c.b16 %v825, %v822
        %v859 = vpack.c.b16 %v826, %v823
        %v860 = vpack.c.b16 %v827, %v824
        %v861 = vpack.c.b16 %v831, %v828
        %v862 = vpack.c.b16 %v832, %v829
        %v863 = vpack.c.b16 %v833, %v830
        %v864 = vpack.c.b16 %v837, %v834
        %v865 = vpack.c.b16 %v838, %v835
        %v866 = vpack.c.b16 %v839, %v836
        %v867 = vpack.c.b16 %v843, %v840
        %v868 = vpack.c.b16 %v844, %v841
        %v869 = vpack.c.b16 %v845, %v842
        %894 = vmatprep.subr.bf16.mxu0 %v868
        %895 = vmatpush1.bf16.msra.mxu0 %v867
        %896 = vmatprep.subr.bf16.mxu0 %v865
        %897 = vmatpush1.bf16.msra.mxu0 %v864
        %898 = vmatprep.subr.bf16.mxu0 %v862
        %899 = vmatpush1.bf16.msra.mxu0 %v861
        %900 = vmatprep.subr.bf16.mxu0 %v859
        %901 = vmatpush1.bf16.msra.mxu0 %v858
        %902 = vmatprep.subr.bf16.mxu0 %v856
        %903 = vmatpush1.bf16.msra.mxu0 %v855
        %904 = vmatprep.subr.bf16.mxu0 %v853
        %905 = vmatpush1.bf16.msra.mxu0 %v852
        %906 = vmatprep.subr.bf16.mxu0 %v850
        %907 = vmatpush1.bf16.msra.mxu0 %v849
        %908 = vmatprep.subr.bf16.mxu0 %v847
        %909 = vmatpush1.bf16.msra.mxu0 %v846
        %910 = vmatprep.subr.bf16.mxu0 0
        %911 = vmatpush2.bf16.msra.mxu0 0
        %912 = vmatprep.subr.bf16.mxu0 0
        %913 = vmatpush2.bf16.msra.mxu0 0
        %914 = vmatprep.subr.bf16.mxu0 0
        %915 = vmatpush2.bf16.msra.mxu0 0
        %916 = vmatprep.subr.bf16.mxu0 0
        %917 = vmatpush2.bf16.msra.mxu0 0
        %918 = vmatprep.subr.bf16.mxu0 0
        %919 = vmatpush2.bf16.msra.mxu0 0
        %920 = vmatprep.subr.bf16.mxu0 0
        %921 = vmatpush2.bf16.msra.mxu0 0
        %922 = vmatprep.subr.bf16.mxu0 0
        %923 = vmatpush2.bf16.msra.mxu0 0
        %924 = vmatprep.subr.bf16.mxu0 0
        %925 = vmatpush2.bf16.msra.mxu0 0
        %926 = vmatprep.mubr.bf16.mxu0 0
        %927 = vmatmul.mubr.bf16.gmra.mxu0 %v715
        %v928 = vpop.f32.mrf.mxu0
        %v929 = vadd.f32 %v754, %v928
        %v930 = vpop.f32.mrf.mxu0
        %v931 = vadd.f32 %v758, %v930
        %v932 = vpop.f32.mrf.mxu0
        %v933 = vadd.f32 %v754, %v932
        %v934 = vpop.f32.mrf.mxu0
        %v935 = vadd.f32 %v758, %v934
        %936 = vdwg.mxu0
        %937 = vmatprep.subr.bf16.mxu0 0
        %938 = vmatpush1.bf16.msra.mxu0 %v869
        %939 = vmatprep.subr.bf16.mxu0 0
        %940 = vmatpush1.bf16.msra.mxu0 %v866
        %941 = vmatprep.subr.bf16.mxu0 0
        %942 = vmatpush1.bf16.msra.mxu0 %v863
        %943 = vmatprep.subr.bf16.mxu0 0
        %944 = vmatpush1.bf16.msra.mxu0 %v860
        %945 = vmatprep.subr.bf16.mxu0 0
        %946 = vmatpush1.bf16.msra.mxu0 %v857
        %947 = vmatprep.subr.bf16.mxu0 0
        %948 = vmatpush1.bf16.msra.mxu0 %v854
        %949 = vmatprep.subr.bf16.mxu0 0
        %950 = vmatpush1.bf16.msra.mxu0 %v851
        %951 = vmatprep.subr.bf16.mxu0 0
        %952 = vmatpush1.bf16.msra.mxu0 %v848
        %953 = vmatprep.subr.bf16.mxu0 0
        %954 = vmatpush2.bf16.msra.mxu0 0
        %955 = vmatprep.subr.bf16.mxu0 0
        %956 = vmatpush2.bf16.msra.mxu0 0
        %957 = vmatprep.subr.bf16.mxu0 0
        %958 = vmatpush2.bf16.msra.mxu0 0
        %959 = vmatprep.subr.bf16.mxu0 0
        %960 = vmatpush2.bf16.msra.mxu0 0
        %961 = vmatprep.subr.bf16.mxu0 0
        %962 = vmatpush2.bf16.msra.mxu0 0
        %963 = vmatprep.subr.bf16.mxu0 0
        %964 = vmatpush2.bf16.msra.mxu0 0
        %965 = vmatprep.subr.bf16.mxu0 0
        %966 = vmatpush2.bf16.msra.mxu0 0
        %967 = vmatprep.subr.bf16.mxu0 0
        %968 = vmatpush2.bf16.msra.mxu0 0
        %969 = vmatprep.mubr.bf16.mxu0 0
        %970 = vmatmul.mubr.bf16.gmra.mxu0 %v715
        %v971 = vpop.f32.mrf.mxu0
        %v972 = vadd.f32 %v762, %v971
        %v973 = vpop.f32.mrf.mxu0
        %v974 = vpop.f32.mrf.mxu0
        %v975 = vadd.f32 %v762, %v974
        %v976 = vpop.f32.mrf.mxu0
        %977 = vdwg.mxu0
        %v978 = vld [vmem:[#allocation7 + $0x180] sm:$0xff]
        %v979 = vld [vmem:[#allocation7 + $0x18c] sm:$0xff]
        %v980 = vld [vmem:[#allocation7 + $0x198] sm:$0xff]
        %v981 = vld [vmem:[#allocation7 + $0x1a4] sm:$0xff]
        %v982 = vld [vmem:[#allocation7 + $0x1b0] sm:$0xff]
        %v983 = vld [vmem:[#allocation7 + $0x1bc] sm:$0xff]
        %v984 = vld [vmem:[#allocation7 + $0x1c8] sm:$0xff]
        %v985 = vld [vmem:[#allocation7 + $0x1d4] sm:$0xff]
        %v986 = vld [vmem:[#allocation7 + $0x1e0] sm:$0xff]
        %v987 = vld [vmem:[#allocation7 + $0x1ec] sm:$0xff]
        %v988 = vld [vmem:[#allocation7 + $0x1f8] sm:$0xff]
        %v989 = vld [vmem:[#allocation7 + $0x204] sm:$0xff]
        %v990 = vld [vmem:[#allocation7 + $0x210] sm:$0xff]
        %v991 = vld [vmem:[#allocation7 + $0x21c] sm:$0xff]
        %v992 = vld [vmem:[#allocation7 + $0x228] sm:$0xff]
        %v993 = vld [vmem:[#allocation7 + $0x234] sm:$0xff]
        %s994 = scalar_lea.vmem [#allocation10], 4
        %v995 = vld [vmem:[%s994] ss:$8 sm:$0x3]
        %v997 = vlaneseq
        %v998 = vshrl.u32 %v997, 7
        %v999 = vsub.s32 0, %v998
        %v1000 = vrot.slane %v995, %v999
        %v1001 = vlaneseq
        %v1002 = vshrl.u32 %v1001, 7
        %v1003 = vsub.s32 1, %v1002
        %v1004 = vrot.slane %v995, %v1003
        %v1009 = vunpack.c.l.b16 %v332
        %v1010 = vunpack.c.l.b16 %v333
        %v1011 = vpack.c.b16 %v1010, %v1009
        %v1029 = vunpack.c.l.b16 %v978
        %v1030 = vunpack.c.h.b16 %v978
        %v1031 = vunpack.c.l.b16 %v979
        %v1032 = vunpack.c.h.b16 %v979
        %v1033 = vunpack.c.l.b16 %v980
        %v1034 = vunpack.c.h.b16 %v980
        %v1035 = vunpack.c.l.b16 %v981
        %v1036 = vunpack.c.h.b16 %v981
        %v1037 = vunpack.c.l.b16 %v982
        %v1038 = vunpack.c.h.b16 %v982
        %v1039 = vunpack.c.l.b16 %v983
        %v1040 = vunpack.c.h.b16 %v983
        %v1041 = vunpack.c.l.b16 %v984
        %v1042 = vunpack.c.h.b16 %v984
        %v1043 = vunpack.c.l.b16 %v985
        %v1044 = vunpack.c.h.b16 %v985
        %v1045 = vunpack.c.l.b16 %v986
        %v1046 = vunpack.c.h.b16 %v986
        %v1047 = vunpack.c.l.b16 %v987
        %v1048 = vunpack.c.h.b16 %v987
        %v1049 = vunpack.c.l.b16 %v988
        %v1050 = vunpack.c.h.b16 %v988
        %v1051 = vunpack.c.l.b16 %v989
        %v1052 = vunpack.c.h.b16 %v989
        %v1053 = vunpack.c.l.b16 %v990
        %v1054 = vunpack.c.h.b16 %v990
        %v1055 = vunpack.c.l.b16 %v991
        %v1056 = vunpack.c.h.b16 %v991
        %v1057 = vunpack.c.l.b16 %v992
        %v1058 = vunpack.c.h.b16 %v992
        %v1059 = vunpack.c.l.b16 %v993
        %v1060 = vunpack.c.h.b16 %v993
        %v1061 = vpack.c.b16 %v1031, %v1029
        %v1062 = vpack.c.b16 %v1032, %v1030
        %v1063 = vpack.c.b16 %v1035, %v1033
        %v1064 = vpack.c.b16 %v1036, %v1034
        %v1065 = vpack.c.b16 %v1039, %v1037
        %v1066 = vpack.c.b16 %v1040, %v1038
        %v1067 = vpack.c.b16 %v1043, %v1041
        %v1068 = vpack.c.b16 %v1044, %v1042
        %v1069 = vpack.c.b16 %v1047, %v1045
        %v1070 = vpack.c.b16 %v1048, %v1046
        %v1071 = vpack.c.b16 %v1051, %v1049
        %v1072 = vpack.c.b16 %v1052, %v1050
        %v1073 = vpack.c.b16 %v1055, %v1053
        %v1074 = vpack.c.b16 %v1056, %v1054
        %v1075 = vpack.c.b16 %v1059, %v1057
        %v1076 = vpack.c.b16 %v1060, %v1058
        %1093 = vmatprep.subr.bf16.mxu0 %v1076
        %1094 = vmatpush1.bf16.msra.mxu0 %v1075
        %1095 = vmatprep.subr.bf16.mxu0 %v1074
        %1096 = vmatpush1.bf16.msra.mxu0 %v1073
        %1097 = vmatprep.subr.bf16.mxu0 %v1072
        %1098 = vmatpush1.bf16.msra.mxu0 %v1071
        %1099 = vmatprep.subr.bf16.mxu0 %v1070
        %1100 = vmatpush1.bf16.msra.mxu0 %v1069
        %1101 = vmatprep.subr.bf16.mxu0 %v1068
        %1102 = vmatpush1.bf16.msra.mxu0 %v1067
        %1103 = vmatprep.subr.bf16.mxu0 %v1066
        %1104 = vmatpush1.bf16.msra.mxu0 %v1065
        %1105 = vmatprep.subr.bf16.mxu0 %v1064
        %1106 = vmatpush1.bf16.msra.mxu0 %v1063
        %1107 = vmatprep.subr.bf16.mxu0 %v1062
        %1108 = vmatpush1.bf16.msra.mxu0 %v1061
        %1109 = vmatprep.subr.bf16.mxu0 0
        %1110 = vmatpush2.bf16.msra.mxu0 0
        %1111 = vmatprep.subr.bf16.mxu0 0
        %1112 = vmatpush2.bf16.msra.mxu0 0
        %1113 = vmatprep.subr.bf16.mxu0 0
        %1114 = vmatpush2.bf16.msra.mxu0 0
        %1115 = vmatprep.subr.bf16.mxu0 0
        %1116 = vmatpush2.bf16.msra.mxu0 0
        %1117 = vmatprep.subr.bf16.mxu0 0
        %1118 = vmatpush2.bf16.msra.mxu0 0
        %1119 = vmatprep.subr.bf16.mxu0 0
        %1120 = vmatpush2.bf16.msra.mxu0 0
        %1121 = vmatprep.subr.bf16.mxu0 0
        %1122 = vmatpush2.bf16.msra.mxu0 0
        %1123 = vmatprep.subr.bf16.mxu0 0
        %1124 = vmatpush2.bf16.msra.mxu0 0
        %1125 = vmatprep.mubr.bf16.mxu0 0
        %1126 = vmatmul.mubr.bf16.gmra.mxu0 %v1011
        %v1127 = vpop.f32.mrf.mxu0
        %v1128 = vadd.f32 %v1000, %v1127
        %v1129 = vpop.f32.mrf.mxu0
        %v1130 = vadd.f32 %v1004, %v1129
        %v1131 = vpop.f32.mrf.mxu0
        %v1132 = vadd.f32 %v1000, %v1131
        %v1133 = vpop.f32.mrf.mxu0
        %v1134 = vadd.f32 %v1004, %v1133
        %1135 = vdwg.mxu0
        %v1136 = vmax.f32 %v929, 0.0
        %v1137 = vmax.f32 %v933, 0.0
        %v1138 = vpack.c.bf16 %v1137, %v1136
        %v1139 = vld [vmem:[#allocation8 + $0x80] sm:$0xf]
        %v1140 = vld [vmem:[#allocation8 + $0x84] sm:$0xf]
        %v1141 = vld [vmem:[#allocation8 + $0x88] sm:$0xf]
        %v1142 = vld [vmem:[#allocation8 + $0x8c] sm:$0xf]
        %v1143 = vld [vmem:[#allocation8 + $0x90] sm:$0xf]
        %v1144 = vld [vmem:[#allocation8 + $0x94] sm:$0xf]
        %v1145 = vld [vmem:[#allocation8 + $0x98] sm:$0xf]
        %v1146 = vld [vmem:[#allocation8 + $0x9c] sm:$0xf]
        %v1147 = vld [vmem:[#allocation8 + $0xa0] sm:$0xf]
        %v1148 = vld [vmem:[#allocation8 + $0xa4] sm:$0xf]
        %v1149 = vld [vmem:[#allocation8 + $0xa8] sm:$0xf]
        %v1150 = vld [vmem:[#allocation8 + $0xac] sm:$0xf]
        %v1151 = vld [vmem:[#allocation8 + $0xb0] sm:$0xf]
        %v1152 = vld [vmem:[#allocation8 + $0xb4] sm:$0xf]
        %v1153 = vld [vmem:[#allocation8 + $0xb8] sm:$0xf]
        %v1154 = vld [vmem:[#allocation8 + $0xbc] sm:$0xf]
        %v1155 = vld [vmem:[#allocation10 + $0x5] ss:$0 sm:$0xff]
        %v1172 = vunpack.c.l.b16 %v1139
        %v1173 = vunpack.c.l.b16 %v1140
        %v1174 = vunpack.c.l.b16 %v1141
        %v1175 = vunpack.c.l.b16 %v1142
        %v1176 = vunpack.c.l.b16 %v1143
        %v1177 = vunpack.c.l.b16 %v1144
        %v1178 = vunpack.c.l.b16 %v1145
        %v1179 = vunpack.c.l.b16 %v1146
        %v1180 = vunpack.c.l.b16 %v1147
        %v1181 = vunpack.c.l.b16 %v1148
        %v1182 = vunpack.c.l.b16 %v1149
        %v1183 = vunpack.c.l.b16 %v1150
        %v1184 = vunpack.c.l.b16 %v1151
        %v1185 = vunpack.c.l.b16 %v1152
        %v1186 = vunpack.c.l.b16 %v1153
        %v1187 = vunpack.c.l.b16 %v1154
        %v1188 = vpack.c.b16 %v1173, %v1172
        %v1189 = vpack.c.b16 %v1175, %v1174
        %v1190 = vpack.c.b16 %v1177, %v1176
        %v1191 = vpack.c.b16 %v1179, %v1178
        %v1192 = vpack.c.b16 %v1181, %v1180
        %v1193 = vpack.c.b16 %v1183, %v1182
        %v1194 = vpack.c.b16 %v1185, %v1184
        %v1195 = vpack.c.b16 %v1187, %v1186
        %1204 = vmatprep.subr.bf16.mxu0 0
        %1205 = vmatpush1.bf16.msra.mxu0 %v1195
        %1206 = vmatprep.subr.bf16.mxu0 0
        %1207 = vmatpush1.bf16.msra.mxu0 %v1194
        %1208 = vmatprep.subr.bf16.mxu0 0
        %1209 = vmatpush1.bf16.msra.mxu0 %v1193
        %1210 = vmatprep.subr.bf16.mxu0 0
        %1211 = vmatpush1.bf16.msra.mxu0 %v1192
        %1212 = vmatprep.subr.bf16.mxu0 0
        %1213 = vmatpush1.bf16.msra.mxu0 %v1191
        %1214 = vmatprep.subr.bf16.mxu0 0
        %1215 = vmatpush1.bf16.msra.mxu0 %v1190
        %1216 = vmatprep.subr.bf16.mxu0 0
        %1217 = vmatpush1.bf16.msra.mxu0 %v1189
        %1218 = vmatprep.subr.bf16.mxu0 0
        %1219 = vmatpush1.bf16.msra.mxu0 %v1188
        %1220 = vmatprep.subr.bf16.mxu0 0
        %1221 = vmatpush2.bf16.msra.mxu0 0
        %1222 = vmatprep.subr.bf16.mxu0 0
        %1223 = vmatpush2.bf16.msra.mxu0 0
        %1224 = vmatprep.subr.bf16.mxu0 0
        %1225 = vmatpush2.bf16.msra.mxu0 0
        %1226 = vmatprep.subr.bf16.mxu0 0
        %1227 = vmatpush2.bf16.msra.mxu0 0
        %1228 = vmatprep.subr.bf16.mxu0 0
        %1229 = vmatpush2.bf16.msra.mxu0 0
        %1230 = vmatprep.subr.bf16.mxu0 0
        %1231 = vmatpush2.bf16.msra.mxu0 0
        %1232 = vmatprep.subr.bf16.mxu0 0
        %1233 = vmatpush2.bf16.msra.mxu0 0
        %1234 = vmatprep.subr.bf16.mxu0 0
        %1235 = vmatpush2.bf16.msra.mxu0 0
        %1236 = vmatprep.mubr.bf16.mxu0 0
        %1237 = vmatmul.mubr.bf16.gmra.mxu0 %v1138
        %v1238 = vpop.f32.mrf.mxu0
        %v1239 = vadd.f32 %v1155, %v1238
        %v1240 = vpop.f32.mrf.mxu0
        %v1241 = vpop.f32.mrf.mxu0
        %v1242 = vadd.f32 %v1155, %v1241
        %v1243 = vpop.f32.mrf.mxu0
        %1244 = vdwg.mxu0
        %v1245 = vmax.f32 %v1239, 0.0
        %v1246 = vmax.f32 %v1242, 0.0
        %v1247 = vpack.c.bf16 %v1246, %v1245
        %v1248 = vld [vmem:[#allocation8 + $0xc0] sm:$0xf]
        %v1249 = vld [vmem:[#allocation8 + $0xc4] sm:$0xf]
        %v1250 = vld [vmem:[#allocation8 + $0xc8] sm:$0xf]
        %v1251 = vld [vmem:[#allocation8 + $0xcc] sm:$0xf]
        %v1252 = vld [vmem:[#allocation8 + $0xd0] sm:$0xf]
        %v1253 = vld [vmem:[#allocation8 + $0xd4] sm:$0xf]
        %v1254 = vld [vmem:[#allocation8 + $0xd8] sm:$0xf]
        %v1255 = vld [vmem:[#allocation8 + $0xdc] sm:$0xf]
        %v1256 = vld [vmem:[#allocation8 + $0xe0] sm:$0xf]
        %v1257 = vld [vmem:[#allocation8 + $0xe4] sm:$0xf]
        %v1258 = vld [vmem:[#allocation8 + $0xe8] sm:$0xf]
        %v1259 = vld [vmem:[#allocation8 + $0xec] sm:$0xf]
        %v1260 = vld [vmem:[#allocation8 + $0xf0] sm:$0xf]
        %v1261 = vld [vmem:[#allocation8 + $0xf4] sm:$0xf]
        %v1262 = vld [vmem:[#allocation8 + $0xf8] sm:$0xf]
        %v1263 = vld [vmem:[#allocation8 + $0xfc] sm:$0xf]
        %v1264 = vld [vmem:[#allocation10 + $0x6] ss:$0 sm:$0xff]
        %v1281 = vunpack.c.l.b16 %v1248
        %v1282 = vunpack.c.l.b16 %v1249
        %v1283 = vunpack.c.l.b16 %v1250
        %v1284 = vunpack.c.l.b16 %v1251
        %v1285 = vunpack.c.l.b16 %v1252
        %v1286 = vunpack.c.l.b16 %v1253
        %v1287 = vunpack.c.l.b16 %v1254
        %v1288 = vunpack.c.l.b16 %v1255
        %v1289 = vunpack.c.l.b16 %v1256
        %v1290 = vunpack.c.l.b16 %v1257
        %v1291 = vunpack.c.l.b16 %v1258
        %v1292 = vunpack.c.l.b16 %v1259
        %v1293 = vunpack.c.l.b16 %v1260
        %v1294 = vunpack.c.l.b16 %v1261
        %v1295 = vunpack.c.l.b16 %v1262
        %v1296 = vunpack.c.l.b16 %v1263
        %v1297 = vpack.c.b16 %v1282, %v1281
        %v1298 = vpack.c.b16 %v1284, %v1283
        %v1299 = vpack.c.b16 %v1286, %v1285
        %v1300 = vpack.c.b16 %v1288, %v1287
        %v1301 = vpack.c.b16 %v1290, %v1289
        %v1302 = vpack.c.b16 %v1292, %v1291
        %v1303 = vpack.c.b16 %v1294, %v1293
        %v1304 = vpack.c.b16 %v1296, %v1295
        %1313 = vmatprep.subr.bf16.mxu0 0
        %1314 = vmatpush1.bf16.msra.mxu0 %v1304
        %1315 = vmatprep.subr.bf16.mxu0 0
        %1316 = vmatpush1.bf16.msra.mxu0 %v1303
        %1317 = vmatprep.subr.bf16.mxu0 0
        %1318 = vmatpush1.bf16.msra.mxu0 %v1302
        %1319 = vmatprep.subr.bf16.mxu0 0
        %1320 = vmatpush1.bf16.msra.mxu0 %v1301
        %1321 = vmatprep.subr.bf16.mxu0 0
        %1322 = vmatpush1.bf16.msra.mxu0 %v1300
        %1323 = vmatprep.subr.bf16.mxu0 0
        %1324 = vmatpush1.bf16.msra.mxu0 %v1299
        %1325 = vmatprep.subr.bf16.mxu0 0
        %1326 = vmatpush1.bf16.msra.mxu0 %v1298
        %1327 = vmatprep.subr.bf16.mxu0 0
        %1328 = vmatpush1.bf16.msra.mxu0 %v1297
        %1329 = vmatprep.subr.bf16.mxu0 0
        %1330 = vmatpush2.bf16.msra.mxu0 0
        %1331 = vmatprep.subr.bf16.mxu0 0
        %1332 = vmatpush2.bf16.msra.mxu0 0
        %1333 = vmatprep.subr.bf16.mxu0 0
        %1334 = vmatpush2.bf16.msra.mxu0 0
        %1335 = vmatprep.subr.bf16.mxu0 0
        %1336 = vmatpush2.bf16.msra.mxu0 0
        %1337 = vmatprep.subr.bf16.mxu0 0
        %1338 = vmatpush2.bf16.msra.mxu0 0
        %1339 = vmatprep.subr.bf16.mxu0 0
        %1340 = vmatpush2.bf16.msra.mxu0 0
        %1341 = vmatprep.subr.bf16.mxu0 0
        %1342 = vmatpush2.bf16.msra.mxu0 0
        %1343 = vmatprep.subr.bf16.mxu0 0
        %1344 = vmatpush2.bf16.msra.mxu0 0
        %1345 = vmatprep.mubr.bf16.mxu0 0
        %1346 = vmatmul.mubr.bf16.gmra.mxu0 %v1247
        %v1347 = vpop.f32.mrf.mxu0
        %v1348 = vadd.f32 %v1264, %v1347
        %v1349 = vpop.f32.mrf.mxu0
        %v1350 = vpop.f32.mrf.mxu0
        %v1351 = vadd.f32 %v1264, %v1350
        %v1352 = vpop.f32.mrf.mxu0
        %1353 = vdwg.mxu0
        %1354 = vst [vmem:[%s325 + $0x10] sm:$0xff] %v1348
        %1355 = vst [vmem:[%s325 + $0x30] sm:$0xff] %v1351
        %v1356 = vadd.f32 %v931, %v1128
        %v1357 = vadd.f32 %v935, %v1132
        %v1358 = vmax.f32 %v1356, 0.0
        %v1359 = vmax.f32 %v1357, 0.0
        %v1360 = vpack.c.bf16 %v1359, %v1358
        %v1361 = vld [vmem:[#allocation8 + $0x100] sm:$0xf]
        %v1362 = vld [vmem:[#allocation8 + $0x104] sm:$0xf]
        %v1363 = vld [vmem:[#allocation8 + $0x108] sm:$0xf]
        %v1364 = vld [vmem:[#allocation8 + $0x10c] sm:$0xf]
        %v1365 = vld [vmem:[#allocation8 + $0x110] sm:$0xf]
        %v1366 = vld [vmem:[#allocation8 + $0x114] sm:$0xf]
        %v1367 = vld [vmem:[#allocation8 + $0x118] sm:$0xf]
        %v1368 = vld [vmem:[#allocation8 + $0x11c] sm:$0xf]
        %v1369 = vld [vmem:[#allocation8 + $0x120] sm:$0xf]
        %v1370 = vld [vmem:[#allocation8 + $0x124] sm:$0xf]
        %v1371 = vld [vmem:[#allocation8 + $0x128] sm:$0xf]
        %v1372 = vld [vmem:[#allocation8 + $0x12c] sm:$0xf]
        %v1373 = vld [vmem:[#allocation8 + $0x130] sm:$0xf]
        %v1374 = vld [vmem:[#allocation8 + $0x134] sm:$0xf]
        %v1375 = vld [vmem:[#allocation8 + $0x138] sm:$0xf]
        %v1376 = vld [vmem:[#allocation8 + $0x13c] sm:$0xf]
        %v1377 = vld [vmem:[#allocation10 + $0x7] ss:$0 sm:$0xff]
        %v1394 = vunpack.c.l.b16 %v1361
        %v1395 = vunpack.c.l.b16 %v1362
        %v1396 = vunpack.c.l.b16 %v1363
        %v1397 = vunpack.c.l.b16 %v1364
        %v1398 = vunpack.c.l.b16 %v1365
        %v1399 = vunpack.c.l.b16 %v1366
        %v1400 = vunpack.c.l.b16 %v1367
        %v1401 = vunpack.c.l.b16 %v1368
        %v1402 = vunpack.c.l.b16 %v1369
        %v1403 = vunpack.c.l.b16 %v1370
        %v1404 = vunpack.c.l.b16 %v1371
        %v1405 = vunpack.c.l.b16 %v1372
        %v1406 = vunpack.c.l.b16 %v1373
        %v1407 = vunpack.c.l.b16 %v1374
        %v1408 = vunpack.c.l.b16 %v1375
        %v1409 = vunpack.c.l.b16 %v1376
        %v1410 = vpack.c.b16 %v1395, %v1394
        %v1411 = vpack.c.b16 %v1397, %v1396
        %v1412 = vpack.c.b16 %v1399, %v1398
        %v1413 = vpack.c.b16 %v1401, %v1400
        %v1414 = vpack.c.b16 %v1403, %v1402
        %v1415 = vpack.c.b16 %v1405, %v1404
        %v1416 = vpack.c.b16 %v1407, %v1406
        %v1417 = vpack.c.b16 %v1409, %v1408
        %1426 = vmatprep.subr.bf16.mxu0 0
        %1427 = vmatpush1.bf16.msra.mxu0 %v1417
        %1428 = vmatprep.subr.bf16.mxu0 0
        %1429 = vmatpush1.bf16.msra.mxu0 %v1416
        %1430 = vmatprep.subr.bf16.mxu0 0
        %1431 = vmatpush1.bf16.msra.mxu0 %v1415
        %1432 = vmatprep.subr.bf16.mxu0 0
        %1433 = vmatpush1.bf16.msra.mxu0 %v1414
        %1434 = vmatprep.subr.bf16.mxu0 0
        %1435 = vmatpush1.bf16.msra.mxu0 %v1413
        %1436 = vmatprep.subr.bf16.mxu0 0
        %1437 = vmatpush1.bf16.msra.mxu0 %v1412
        %1438 = vmatprep.subr.bf16.mxu0 0
        %1439 = vmatpush1.bf16.msra.mxu0 %v1411
        %1440 = vmatprep.subr.bf16.mxu0 0
        %1441 = vmatpush1.bf16.msra.mxu0 %v1410
        %1442 = vmatprep.subr.bf16.mxu0 0
        %1443 = vmatpush2.bf16.msra.mxu0 0
        %1444 = vmatprep.subr.bf16.mxu0 0
        %1445 = vmatpush2.bf16.msra.mxu0 0
        %1446 = vmatprep.subr.bf16.mxu0 0
        %1447 = vmatpush2.bf16.msra.mxu0 0
        %1448 = vmatprep.subr.bf16.mxu0 0
        %1449 = vmatpush2.bf16.msra.mxu0 0
        %1450 = vmatprep.subr.bf16.mxu0 0
        %1451 = vmatpush2.bf16.msra.mxu0 0
        %1452 = vmatprep.subr.bf16.mxu0 0
        %1453 = vmatpush2.bf16.msra.mxu0 0
        %1454 = vmatprep.subr.bf16.mxu0 0
        %1455 = vmatpush2.bf16.msra.mxu0 0
        %1456 = vmatprep.subr.bf16.mxu0 0
        %1457 = vmatpush2.bf16.msra.mxu0 0
        %1458 = vmatprep.mubr.bf16.mxu0 0
        %1459 = vmatmul.mubr.bf16.gmra.mxu0 %v1360
        %v1460 = vpop.f32.mrf.mxu0
        %v1461 = vadd.f32 %v1377, %v1460
        %v1462 = vpop.f32.mrf.mxu0
        %v1463 = vpop.f32.mrf.mxu0
        %v1464 = vadd.f32 %v1377, %v1463
        %v1465 = vpop.f32.mrf.mxu0
        %1466 = vdwg.mxu0
        %v1467 = vadd.f32 %v1461, %v972
        %v1468 = vadd.f32 %v1464, %v975
        %v1469 = vadd.f32 %v1467, %v1130
        %v1470 = vadd.f32 %v1468, %v1134
        %v1471 = vmax.f32 %v1469, 0.0
        %v1472 = vmax.f32 %v1470, 0.0
        %v1473 = vpack.c.bf16 %v1472, %v1471
        %v1474 = vld [vmem:[#allocation8 + $0x140] sm:$0xf]
        %v1475 = vld [vmem:[#allocation8 + $0x144] sm:$0xf]
        %v1476 = vld [vmem:[#allocation8 + $0x148] sm:$0xf]
        %v1477 = vld [vmem:[#allocation8 + $0x14c] sm:$0xf]
        %v1478 = vld [vmem:[#allocation8 + $0x150] sm:$0xf]
        %v1479 = vld [vmem:[#allocation8 + $0x154] sm:$0xf]
        %v1480 = vld [vmem:[#allocation8 + $0x158] sm:$0xf]
        %v1481 = vld [vmem:[#allocation8 + $0x15c] sm:$0xf]
        %v1482 = vld [vmem:[#allocation8 + $0x160] sm:$0xf]
        %v1483 = vld [vmem:[#allocation8 + $0x164] sm:$0xf]
        %v1484 = vld [vmem:[#allocation8 + $0x168] sm:$0xf]
        %v1485 = vld [vmem:[#allocation8 + $0x16c] sm:$0xf]
        %v1486 = vld [vmem:[#allocation8 + $0x170] sm:$0xf]
        %v1487 = vld [vmem:[#allocation8 + $0x174] sm:$0xf]
        %v1488 = vld [vmem:[#allocation8 + $0x178] sm:$0xf]
        %v1489 = vld [vmem:[#allocation8 + $0x17c] sm:$0xf]
        %v1490 = vld [vmem:[#allocation10 + $0x18] ss:$0 sm:$0xff]
        %v1507 = vunpack.c.l.b16 %v1474
        %v1508 = vunpack.c.l.b16 %v1475
        %v1509 = vunpack.c.l.b16 %v1476
        %v1510 = vunpack.c.l.b16 %v1477
        %v1511 = vunpack.c.l.b16 %v1478
        %v1512 = vunpack.c.l.b16 %v1479
        %v1513 = vunpack.c.l.b16 %v1480
        %v1514 = vunpack.c.l.b16 %v1481
        %v1515 = vunpack.c.l.b16 %v1482
        %v1516 = vunpack.c.l.b16 %v1483
        %v1517 = vunpack.c.l.b16 %v1484
        %v1518 = vunpack.c.l.b16 %v1485
        %v1519 = vunpack.c.l.b16 %v1486
        %v1520 = vunpack.c.l.b16 %v1487
        %v1521 = vunpack.c.l.b16 %v1488
        %v1522 = vunpack.c.l.b16 %v1489
        %v1523 = vpack.c.b16 %v1508, %v1507
        %v1524 = vpack.c.b16 %v1510, %v1509
        %v1525 = vpack.c.b16 %v1512, %v1511
        %v1526 = vpack.c.b16 %v1514, %v1513
        %v1527 = vpack.c.b16 %v1516, %v1515
        %v1528 = vpack.c.b16 %v1518, %v1517
        %v1529 = vpack.c.b16 %v1520, %v1519
        %v1530 = vpack.c.b16 %v1522, %v1521
        %1539 = vmatprep.subr.bf16.mxu0 0
        %1540 = vmatpush1.bf16.msra.mxu0 %v1530
        %1541 = vmatprep.subr.bf16.mxu0 0
        %1542 = vmatpush1.bf16.msra.mxu0 %v1529
        %1543 = vmatprep.subr.bf16.mxu0 0
        %1544 = vmatpush1.bf16.msra.mxu0 %v1528
        %1545 = vmatprep.subr.bf16.mxu0 0
        %1546 = vmatpush1.bf16.msra.mxu0 %v1527
        %1547 = vmatprep.subr.bf16.mxu0 0
        %1548 = vmatpush1.bf16.msra.mxu0 %v1526
        %1549 = vmatprep.subr.bf16.mxu0 0
        %1550 = vmatpush1.bf16.msra.mxu0 %v1525
        %1551 = vmatprep.subr.bf16.mxu0 0
        %1552 = vmatpush1.bf16.msra.mxu0 %v1524
        %1553 = vmatprep.subr.bf16.mxu0 0
        %1554 = vmatpush1.bf16.msra.mxu0 %v1523
        %1555 = vmatprep.subr.bf16.mxu0 0
        %1556 = vmatpush2.bf16.msra.mxu0 0
        %1557 = vmatprep.subr.bf16.mxu0 0
        %1558 = vmatpush2.bf16.msra.mxu0 0
        %1559 = vmatprep.subr.bf16.mxu0 0
        %1560 = vmatpush2.bf16.msra.mxu0 0
        %1561 = vmatprep.subr.bf16.mxu0 0
        %1562 = vmatpush2.bf16.msra.mxu0 0
        %1563 = vmatprep.subr.bf16.mxu0 0
        %1564 = vmatpush2.bf16.msra.mxu0 0
        %1565 = vmatprep.subr.bf16.mxu0 0
        %1566 = vmatpush2.bf16.msra.mxu0 0
        %1567 = vmatprep.subr.bf16.mxu0 0
        %1568 = vmatpush2.bf16.msra.mxu0 0
        %1569 = vmatprep.subr.bf16.mxu0 0
        %1570 = vmatpush2.bf16.msra.mxu0 0
        %1571 = vmatprep.mubr.bf16.mxu0 0
        %1572 = vmatmul.mubr.bf16.gmra.mxu0 %v1473
        %v1573 = vpop.f32.mrf.mxu0
        %v1574 = vadd.f32 %v1490, %v1573
        %v1575 = vpop.f32.mrf.mxu0
        %v1576 = vpop.f32.mrf.mxu0
        %v1577 = vadd.f32 %v1490, %v1576
        %v1578 = vpop.f32.mrf.mxu0
        %1579 = vdwg.mxu0
        %v1580 = vmax.f32 %v1574, 0.0
        %v1581 = vmax.f32 %v1577, 0.0
        %v1582 = vpack.c.bf16 %v1581, %v1580
        %v1583 = vld [vmem:[#allocation8 + $0x180] sm:$0xf]
        %v1584 = vld [vmem:[#allocation8 + $0x184] sm:$0xf]
        %v1585 = vld [vmem:[#allocation8 + $0x188] sm:$0xf]
        %v1586 = vld [vmem:[#allocation8 + $0x18c] sm:$0xf]
        %v1587 = vld [vmem:[#allocation8 + $0x190] sm:$0xf]
        %v1588 = vld [vmem:[#allocation8 + $0x194] sm:$0xf]
        %v1589 = vld [vmem:[#allocation8 + $0x198] sm:$0xf]
        %v1590 = vld [vmem:[#allocation8 + $0x19c] sm:$0xf]
        %v1591 = vld [vmem:[#allocation8 + $0x1a0] sm:$0xf]
        %v1592 = vld [vmem:[#allocation8 + $0x1a4] sm:$0xf]
        %v1593 = vld [vmem:[#allocation8 + $0x1a8] sm:$0xf]
        %v1594 = vld [vmem:[#allocation8 + $0x1ac] sm:$0xf]
        %v1595 = vld [vmem:[#allocation8 + $0x1b0] sm:$0xf]
        %v1596 = vld [vmem:[#allocation8 + $0x1b4] sm:$0xf]
        %v1597 = vld [vmem:[#allocation8 + $0x1b8] sm:$0xf]
        %v1598 = vld [vmem:[#allocation8 + $0x1bc] sm:$0xf]
        %v1599 = vld [vmem:[#allocation10 + $0x19] ss:$0 sm:$0xff]
        %v1616 = vunpack.c.l.b16 %v1583
        %v1617 = vunpack.c.l.b16 %v1584
        %v1618 = vunpack.c.l.b16 %v1585
        %v1619 = vunpack.c.l.b16 %v1586
        %v1620 = vunpack.c.l.b16 %v1587
        %v1621 = vunpack.c.l.b16 %v1588
        %v1622 = vunpack.c.l.b16 %v1589
        %v1623 = vunpack.c.l.b16 %v1590
        %v1624 = vunpack.c.l.b16 %v1591
        %v1625 = vunpack.c.l.b16 %v1592
        %v1626 = vunpack.c.l.b16 %v1593
        %v1627 = vunpack.c.l.b16 %v1594
        %v1628 = vunpack.c.l.b16 %v1595
        %v1629 = vunpack.c.l.b16 %v1596
        %v1630 = vunpack.c.l.b16 %v1597
        %v1631 = vunpack.c.l.b16 %v1598
        %v1632 = vpack.c.b16 %v1617, %v1616
        %v1633 = vpack.c.b16 %v1619, %v1618
        %v1634 = vpack.c.b16 %v1621, %v1620
        %v1635 = vpack.c.b16 %v1623, %v1622
        %v1636 = vpack.c.b16 %v1625, %v1624
        %v1637 = vpack.c.b16 %v1627, %v1626
        %v1638 = vpack.c.b16 %v1629, %v1628
        %v1639 = vpack.c.b16 %v1631, %v1630
        %1648 = vmatprep.subr.bf16.mxu0 0
        %1649 = vmatpush1.bf16.msra.mxu0 %v1639
        %1650 = vmatprep.subr.bf16.mxu0 0
        %1651 = vmatpush1.bf16.msra.mxu0 %v1638
        %1652 = vmatprep.subr.bf16.mxu0 0
        %1653 = vmatpush1.bf16.msra.mxu0 %v1637
        %1654 = vmatprep.subr.bf16.mxu0 0
        %1655 = vmatpush1.bf16.msra.mxu0 %v1636
        %1656 = vmatprep.subr.bf16.mxu0 0
        %1657 = vmatpush1.bf16.msra.mxu0 %v1635
        %1658 = vmatprep.subr.bf16.mxu0 0
        %1659 = vmatpush1.bf16.msra.mxu0 %v1634
        %1660 = vmatprep.subr.bf16.mxu0 0
        %1661 = vmatpush1.bf16.msra.mxu0 %v1633
        %1662 = vmatprep.subr.bf16.mxu0 0
        %1663 = vmatpush1.bf16.msra.mxu0 %v1632
        %1664 = vmatprep.subr.bf16.mxu0 0
        %1665 = vmatpush2.bf16.msra.mxu0 0
        %1666 = vmatprep.subr.bf16.mxu0 0
        %1667 = vmatpush2.bf16.msra.mxu0 0
        %1668 = vmatprep.subr.bf16.mxu0 0
        %1669 = vmatpush2.bf16.msra.mxu0 0
        %1670 = vmatprep.subr.bf16.mxu0 0
        %1671 = vmatpush2.bf16.msra.mxu0 0
        %1672 = vmatprep.subr.bf16.mxu0 0
        %1673 = vmatpush2.bf16.msra.mxu0 0
        %1674 = vmatprep.subr.bf16.mxu0 0
        %1675 = vmatpush2.bf16.msra.mxu0 0
        %1676 = vmatprep.subr.bf16.mxu0 0
        %1677 = vmatpush2.bf16.msra.mxu0 0
        %1678 = vmatprep.subr.bf16.mxu0 0
        %1679 = vmatpush2.bf16.msra.mxu0 0
        %1680 = vmatprep.mubr.bf16.mxu0 0
        %1681 = vmatmul.mubr.bf16.gmra.mxu0 %v1582
        %v1682 = vpop.f32.mrf.mxu0
        %v1683 = vadd.f32 %v1599, %v1682
        %v1684 = vpop.f32.mrf.mxu0
        %v1685 = vpop.f32.mrf.mxu0
        %v1686 = vadd.f32 %v1599, %v1685
        %v1687 = vpop.f32.mrf.mxu0
        %1688 = vdwg.mxu0
        %v1689 = vadd.f32 %v1683, %v1471
        %v1690 = vadd.f32 %v1686, %v1472
        %v1691 = vmax.f32 %v1689, 0.0
        %v1692 = vmax.f32 %v1690, 0.0
        %v1693 = vpack.c.bf16 %v1692, %v1691
        %v1694 = vld [vmem:[#allocation8 + $0x1c0] sm:$0xf]
        %v1695 = vld [vmem:[#allocation8 + $0x1c4] sm:$0xf]
        %v1696 = vld [vmem:[#allocation8 + $0x1c8] sm:$0xf]
        %v1697 = vld [vmem:[#allocation8 + $0x1cc] sm:$0xf]
        %v1698 = vld [vmem:[#allocation8 + $0x1d0] sm:$0xf]
        %v1699 = vld [vmem:[#allocation8 + $0x1d4] sm:$0xf]
        %v1700 = vld [vmem:[#allocation8 + $0x1d8] sm:$0xf]
        %v1701 = vld [vmem:[#allocation8 + $0x1dc] sm:$0xf]
        %v1702 = vld [vmem:[#allocation8 + $0x1e0] sm:$0xf]
        %v1703 = vld [vmem:[#allocation8 + $0x1e4] sm:$0xf]
        %v1704 = vld [vmem:[#allocation8 + $0x1e8] sm:$0xf]
        %v1705 = vld [vmem:[#allocation8 + $0x1ec] sm:$0xf]
        %v1706 = vld [vmem:[#allocation8 + $0x1f0] sm:$0xf]
        %v1707 = vld [vmem:[#allocation8 + $0x1f4] sm:$0xf]
        %v1708 = vld [vmem:[#allocation8 + $0x1f8] sm:$0xf]
        %v1709 = vld [vmem:[#allocation8 + $0x1fc] sm:$0xf]
        %v1710 = vld [vmem:[#allocation10 + $0x1a] ss:$0 sm:$0xff]
        %v1727 = vunpack.c.l.b16 %v1694
        %v1728 = vunpack.c.l.b16 %v1695
        %v1729 = vunpack.c.l.b16 %v1696
        %v1730 = vunpack.c.l.b16 %v1697
        %v1731 = vunpack.c.l.b16 %v1698
        %v1732 = vunpack.c.l.b16 %v1699
        %v1733 = vunpack.c.l.b16 %v1700
        %v1734 = vunpack.c.l.b16 %v1701
        %v1735 = vunpack.c.l.b16 %v1702
        %v1736 = vunpack.c.l.b16 %v1703
        %v1737 = vunpack.c.l.b16 %v1704
        %v1738 = vunpack.c.l.b16 %v1705
        %v1739 = vunpack.c.l.b16 %v1706
        %v1740 = vunpack.c.l.b16 %v1707
        %v1741 = vunpack.c.l.b16 %v1708
        %v1742 = vunpack.c.l.b16 %v1709
        %v1743 = vpack.c.b16 %v1728, %v1727
        %v1744 = vpack.c.b16 %v1730, %v1729
        %v1745 = vpack.c.b16 %v1732, %v1731
        %v1746 = vpack.c.b16 %v1734, %v1733
        %v1747 = vpack.c.b16 %v1736, %v1735
        %v1748 = vpack.c.b16 %v1738, %v1737
        %v1749 = vpack.c.b16 %v1740, %v1739
        %v1750 = vpack.c.b16 %v1742, %v1741
        %1759 = vmatprep.subr.bf16.mxu0 0
        %1760 = vmatpush1.bf16.msra.mxu0 %v1750
        %1761 = vmatprep.subr.bf16.mxu0 0
        %1762 = vmatpush1.bf16.msra.mxu0 %v1749
        %1763 = vmatprep.subr.bf16.mxu0 0
        %1764 = vmatpush1.bf16.msra.mxu0 %v1748
        %1765 = vmatprep.subr.bf16.mxu0 0
        %1766 = vmatpush1.bf16.msra.mxu0 %v1747
        %1767 = vmatprep.subr.bf16.mxu0 0
        %1768 = vmatpush1.bf16.msra.mxu0 %v1746
        %1769 = vmatprep.subr.bf16.mxu0 0
        %1770 = vmatpush1.bf16.msra.mxu0 %v1745
        %1771 = vmatprep.subr.bf16.mxu0 0
        %1772 = vmatpush1.bf16.msra.mxu0 %v1744
        %1773 = vmatprep.subr.bf16.mxu0 0
        %1774 = vmatpush1.bf16.msra.mxu0 %v1743
        %1775 = vmatprep.subr.bf16.mxu0 0
        %1776 = vmatpush2.bf16.msra.mxu0 0
        %1777 = vmatprep.subr.bf16.mxu0 0
        %1778 = vmatpush2.bf16.msra.mxu0 0
        %1779 = vmatprep.subr.bf16.mxu0 0
        %1780 = vmatpush2.bf16.msra.mxu0 0
        %1781 = vmatprep.subr.bf16.mxu0 0
        %1782 = vmatpush2.bf16.msra.mxu0 0
        %1783 = vmatprep.subr.bf16.mxu0 0
        %1784 = vmatpush2.bf16.msra.mxu0 0
        %1785 = vmatprep.subr.bf16.mxu0 0
        %1786 = vmatpush2.bf16.msra.mxu0 0
        %1787 = vmatprep.subr.bf16.mxu0 0
        %1788 = vmatpush2.bf16.msra.mxu0 0
        %1789 = vmatprep.subr.bf16.mxu0 0
        %1790 = vmatpush2.bf16.msra.mxu0 0
        %1791 = vmatprep.mubr.bf16.mxu0 0
        %1792 = vmatmul.mubr.bf16.gmra.mxu0 %v1693
        %v1793 = vpop.f32.mrf.mxu0
        %v1794 = vadd.f32 %v1710, %v1793
        %v1795 = vpop.f32.mrf.mxu0
        %v1796 = vpop.f32.mrf.mxu0
        %v1797 = vadd.f32 %v1710, %v1796
        %v1798 = vpop.f32.mrf.mxu0
        %1799 = vdwg.mxu0
        %1800 = vst [vmem:[%s325] sm:$0xff] %v1794
        %1801 = vst [vmem:[%s325 + $0x20] sm:$0xff] %v1797
        %s1802 = sand.u32 %s149, 1
        %s1803 = scalar_lea.sflag [#allocation4], %s1802
        %s1804 = sand.u32 %s149, 1
        %s1805 = smul.addr %s1804, 64
        %s1806 = scalar_lea.vmem [#allocation11], %s1805
        // Predicated region
        $region61: #{tpu_custom_call.1} parent=39 // pred_check
          %p1807 = pneg %p159
        $region62: #{tpu_custom_call.1} parent=39 // pred_check_branch
          %1809 = sbr.rel (%p1807) target = $region64
        $region63: #{tpu_custom_call.1} parent=39 // pred_region
          %s1810 = smul.u32 2, %s26
          %s1812 = ssub.s32 1024, 1024
          %1813 = vsyncadd %s1803, %s1812
          %s1814 = smul.addr %s1810, 4
          %s1815 = smul.addr %s1814, 128
          %s1816 = scalar_lea.hbm %s5, %s1815
          %s1817 = sshll.u32 %s1806, 4
          %s1818 = int_to_ptr.vmem [resolvable:$true] %s1817
          %1823 = dma.vmem_to_hbm [thread:$0]  %s1818, 1024, %s1816, %s1803, 512, 512, 32
        $region64: #{tpu_custom_call.1} parent=39 // pred_fallthru
          _
      $region40: #{tpu_custom_call.1} parent=5 // pred_fallthru
        _
      %p1824 = scmp.le.s32.totalorder 2, %s21
      // Predicated region
      $region65: #{tpu_custom_call.1} parent=5 // pred_check
        %p1825 = pneg %p1824
      $region66: #{tpu_custom_call.1} parent=5 // pred_check_branch
        %1827 = sbr.rel (%p1825) target = $region68
      $region67: #{tpu_custom_call.1} parent=5 // pred_region
        %s1828 = ssub.s32 %s21, 2
        // Predicated region
        $region69: #{tpu_custom_call.1} parent=67 // pred_check
          %p1829 = pneg %p165
        $region70: #{tpu_custom_call.1} parent=67 // pred_check_branch
          %1831 = sbr.rel (%p1829) target = $region72
        $region71: #{tpu_custom_call.1} parent=67 // pred_region
          %s1832 = sand.u32 %s150, 1
          %s1833 = scalar_lea.sflag [#allocation4], %s1832
          %s1834 = sand.u32 %s150, 1
          %s1835 = smul.addr %s1834, 64
          %s1836 = scalar_lea.vmem [#allocation11], %s1835
          %1837 = dma.done %s1833, 1024
        $region72: #{tpu_custom_call.1} parent=67 // pred_fallthru
          _
      $region68: #{tpu_custom_call.1} parent=5 // pred_fallthru
        _
    $region6: #{tpu_custom_call.1} parent=1 // loop_footer
      %s25 = sadd.s32 1, %s21
    $region7: #{tpu_custom_call.1} parent=1 // loop_footer_branch
      %20 = sbr.rel target = $region3
    $region8: #{tpu_custom_call.1} parent=1 // loop_exit
      _
    %1838 = vsyncpa [#allocation3], 1
    %s1839 = scalar_lea.sflag [#allocation3], 1
    %1840 = vsyncpa %s1839, 1
    %1841 = vsyncpa [#allocation6], 1
    %s1842 = scalar_lea.sflag [#allocation6], 1
    %1843 = vsyncpa %s1842, 1
    %1844 = vsyncpa [#allocation9], 1
    %1845 = vsyncpa [#allocation4], 1
    %s1846 = scalar_lea.sflag [#allocation4], 1
    %1847 = vsyncpa %s1846, 1

// kernel: tpu_custom_call.1
$region0: #{tpu_custom_call.1}
  #allocation0 [shape = 'u32[]', space=smem, size = 0x4, offset = 0x4, fixed_abs, tag = 'smem constant byte address 0x4 - core index']
  #allocation1 [shape = 'u32[144,128]{1,0:T(1,128)}', space=vmem, size = 0x12000, scoped, tag = 'internal scratch']
  %s0 = inlined_call_operand.hbm [shape: bf16[32,128], index: 0, kind: input, shape index: {}]
  %s1 = inlined_call_operand.hbm [shape: bf16[32,128], index: 1, kind: input, shape index: {}]
  %s2 = inlined_call_operand.hbm [shape: bf16[384,384], index: 2, kind: input, shape index: {}]
  %s3 = inlined_call_operand.hbm [shape: bf16[1024,128], index: 3, kind: input, shape index: {}]
  %s4 = inlined_call_operand.hbm [shape: f32[16,384], index: 4, kind: input, shape index: {}]
  %s5 = inlined_call_operand.hbm [shape: f32[32,512], index: 5, kind: output, shape index: {}]
  %s6 = sld [smem:[#allocation0]]
  $region73: #{tpu_custom_call.1} parent=0
    _
  %s8 = ssub.s32 1, %s6
  %s9 = scalar_select 0, %s8, %s6
  $region1: #{tpu_custom_call.1} parent=0
    #allocation2 [shape = 'u8[8192]{0}', space=vmem, size = 0x2000, scoped, tag = 'input window, operand 0']
    #allocation3 [shape = 's32[2]{0}', space=sflag, size = 0x8, scoped, tag = 'scoped memory for tpu_custom_call.1']
    #allocation4 [shape = 's32[2]{0}', space=sflag, size = 0x8, scoped, tag = 'scoped memory for tpu_custom_call.1']
    #allocation5 [shape = 'u8[8192]{0}', space=vmem, size = 0x2000, scoped, tag = 'input window, operand 1']
    #allocation6 [shape = 's32[2]{0}', space=sflag, size = 0x8, scoped, tag = 'scoped memory for tpu_custom_call.1']
    #allocation7 [shape = 'u8[294912]{0}', space=vmem, size = 0x48000, scoped, tag = 'input window, operand 2, single buffered']
    #allocation8 [shape = 'u8[262144]{0}', space=vmem, size = 0x40000, scoped, tag = 'input window, operand 3, single buffered']
    #allocation9 [shape = 's32[1]{0}', space=sflag, size = 0x4, scoped, tag = 'scoped memory for tpu_custom_call.1']
    #allocation10 [shape = 'u8[24576]{0}', space=vmem, size = 0x6000, scoped, tag = 'input window, operand 4, single buffered']
    #allocation11 [shape = 'u8[65536]{0}', space=vmem, size = 0x10000, scoped, tag = 'output window, operand 0']
    %10 = vsyncpa [#allocation3], 0
    %s11 = scalar_lea.sflag [#allocation3], 1
    %12 = vsyncpa %s11, 0
    %13 = vsyncpa [#allocation6], 0
    %s14 = scalar_lea.sflag [#allocation6], 1
    %15 = vsyncpa %s14, 0
    %16 = vsyncpa [#allocation9], 0
    %17 = vsyncpa [#allocation4], 0
    %s18 = scalar_lea.sflag [#allocation4], 1
    %19 = vsyncpa %s18, 0
    loop: start=0, step=1, limit=4
    $region2: #{tpu_custom_call.1} parent=1 // loop_pre_header
      _
    $region3: #{tpu_custom_call.1} parent=1 // loop_header
      %s21 = sphi 0, %s25
      %p22 = scmp.ge.s32.totalorder %s21, 4
      %s31 = sphi 0, %s33
      %s34 = sphi 0, %s31
      %s35 = sphi 0, %s34
      %s51 = sphi 0, %s35
      %s57 = sphi 0, %s59
      %s60 = sphi 0, %s57
      %s61 = sphi 0, %s60
      %s77 = sphi 0, %s61
      %s81 = sphi 0, %s81
      %s83 = sphi 0, %s81
      %s84 = sphi 0, %s83
      %s98 = sphi 0, %s84
      %s102 = sphi 0, %s102
      %s104 = sphi 0, %s102
      %s105 = sphi 0, %s104
      %s119 = sphi 0, %s105
      %s123 = sphi 0, %s123
      %s125 = sphi 0, %s123
      %s126 = sphi 0, %s125
      %s140 = sphi 0, %s126
      %s146 = sphi 0, %s148
      %s149 = sphi 0, %s146
      %s150 = sphi 0, %s149
      %s166 = sphi 0, %s150
    $region4: #{tpu_custom_call.1} parent=1 // loop_header_branch
      %24 = sbr.rel (%p22) target = $region8
    $region5: #{tpu_custom_call.1} parent=1 // loop_body
      %s26 = ssub.s32 %s21, 1
      %s27 = ssub.s32 %s21, 2
      %s28 = sadd.s32 %s21, 1
      %s29 = ssub.s32 %s21, %s28
      %p30 = scmp.eq.s32.totalorder %s29, 0
      %s32 = sadd.s32 %s31, 1
      %s33 = scalar_select %p30, %s31, %s32
      %p36 = pneg %p30
      %p37 = scmp.eq.s32.totalorder %s21, 1
      %p38 = por %p36, %p37
      %p39 = scmp.ne.s32.totalorder %s31, %s34
      %p40 = scmp.eq.s32.totalorder %s21, 0
      %p41 = por %p39, %p40
      %p42 = scmp.ne.s32.totalorder %s31, %s34
      %p43 = scmp.eq.s32.totalorder %s26, 1
      %p44 = por %p42, %p43
      %p45 = scmp.ne.s32.totalorder %s34, %s35
      %p46 = scmp.eq.s32.totalorder %s26, 0
      %p47 = por %p45, %p46
      %p48 = scmp.ne.s32.totalorder %s34, %s35
      %p49 = scmp.eq.s32.totalorder %s27, 1
      %p50 = por %p48, %p49
      %p52 = scmp.ne.s32.totalorder %s35, %s51
      %p53 = scmp.eq.s32.totalorder %s27, 0
      %p54 = por %p52, %p53
      %s55 = ssub.s32 %s21, %s28
      %p56 = scmp.eq.s32.totalorder %s55, 0
      %s58 = sadd.s32 %s57, 1
      %s59 = scalar_select %p56, %s57, %s58
      %p62 = pneg %p56
      %p63 = scmp.eq.s32.totalorder %s21, 1
      %p64 = por %p62, %p63
      %p65 = scmp.ne.s32.totalorder %s57, %s60
      %p66 = scmp.eq.s32.totalorder %s21, 0
      %p67 = por %p65, %p66
      %p68 = scmp.ne.s32.totalorder %s57, %s60
      %p69 = scmp.eq.s32.totalorder %s26, 1
      %p70 = por %p68, %p69
      %p71 = scmp.ne.s32.totalorder %s60, %s61
      %p72 = scmp.eq.s32.totalorder %s26, 0
      %p73 = por %p71, %p72
      %p74 = scmp.ne.s32.totalorder %s60, %s61
      %p75 = scmp.eq.s32.totalorder %s27, 1
      %p76 = por %p74, %p75
      %p78 = scmp.ne.s32.totalorder %s61, %s77
      %p79 = scmp.eq.s32.totalorder %s27, 0
      %p80 = por %p78, %p79
      %s82 = sadd.s32 %s81, 1
      %p85 = scmp.eq.s32.totalorder %s21, 1
      %p86 = scmp.ne.s32.totalorder %s81, %s83
      %p87 = scmp.eq.s32.totalorder %s21, 0
      %p88 = por %p86, %p87
      %p89 = scmp.ne.s32.totalorder %s81, %s83
      %p90 = scmp.eq.s32.totalorder %s26, 1
      %p91 = por %p89, %p90
      %p92 = scmp.ne.s32.totalorder %s83, %s84
      %p93 = scmp.eq.s32.totalorder %s26, 0
      %p94 = por %p92, %p93
      %p95 = scmp.ne.s32.totalorder %s83, %s84
      %p96 = scmp.eq.s32.totalorder %s27, 1
      %p97 = por %p95, %p96
      %p99 = scmp.ne.s32.totalorder %s84, %s98
      %p100 = scmp.eq.s32.totalorder %s27, 0
      %p101 = por %p99, %p100
      %s103 = sadd.s32 %s102, 1
      %p106 = scmp.eq.s32.totalorder %s21, 1
      %p107 = scmp.ne.s32.totalorder %s102, %s104
      %p108 = scmp.eq.s32.totalorder %s21, 0
      %p109 = por %p107, %p108
      %p110 = scmp.ne.s32.totalorder %s102, %s104
      %p111 = scmp.eq.s32.totalorder %s26, 1
      %p112 = por %p110, %p111
      %p113 = scmp.ne.s32.totalorder %s104, %s105
      %p114 = scmp.eq.s32.totalorder %s26, 0
      %p115 = por %p113, %p114
      %p116 = scmp.ne.s32.totalorder %s104, %s105
      %p117 = scmp.eq.s32.totalorder %s27, 1
      %p118 = por %p116, %p117
      %p120 = scmp.ne.s32.totalorder %s105, %s119
      %p121 = scmp.eq.s32.totalorder %s27, 0
      %p122 = por %p120, %p121
      %s124 = sadd.s32 %s123, 1
      %p127 = scmp.eq.s32.totalorder %s21, 1
      %p128 = scmp.ne.s32.totalorder %s123, %s125
      %p129 = scmp.eq.s32.totalorder %s21, 0
      %p130 = por %p128, %p129
      %p131 = scmp.ne.s32.totalorder %s123, %s125
      %p132 = scmp.eq.s32.totalorder %s26, 1
      %p133 = por %p131, %p132
      %p134 = scmp.ne.s32.totalorder %s125, %s126
      %p135 = scmp.eq.s32.totalorder %s26, 0
      %p136 = por %p134, %p135
      %p137 = scmp.ne.s32.totalorder %s125, %s126
      %p138 = scmp.eq.s32.totalorder %s27, 1
      %p139 = por %p137, %p138
      %p141 = scmp.ne.s32.totalorder %s126, %s140
      %p142 = scmp.eq.s32.totalorder %s27, 0
      %p143 = por %p141, %p142
      %s144 = ssub.s32 %s21, %s28
      %p145 = scmp.eq.s32.totalorder %s144, 0
      %s147 = sadd.s32 %s146, 1
      %s148 = scalar_select %p145, %s146, %s147
      %p151 = pneg %p145
      %p152 = scmp.eq.s32.totalorder %s21, 1
      %p153 = por %p151, %p152
      %p154 = scmp.ne.s32.totalorder %s146, %s149
      %p155 = scmp.eq.s32.totalorder %s21, 0
      %p156 = por %p154, %p155
      %p157 = scmp.ne.s32.totalorder %s146, %s149
      %p158 = scmp.eq.s32.totalorder %s26, 1
      %p159 = por %p157, %p158
      %p160 = scmp.ne.s32.totalorder %s149, %s150
      %p161 = scmp.eq.s32.totalorder %s26, 0
      %p162 = por %p160, %p161
      %p163 = scmp.ne.s32.totalorder %s149, %s150
      %p164 = scmp.eq.s32.totalorder %s27, 1
      %p165 = por %p163, %p164
      %p167 = scmp.ne.s32.totalorder %s150, %s166
      %p168 = scmp.eq.s32.totalorder %s27, 0
      %p169 = por %p167, %p168
      %p170 = scmp.le.s32.totalorder 1, %s21
      %p171 = scmp.lt.s32.totalorder %s21, 3
      %p172 = pnand %p170, %p171
      %p173 = pneg %p172
      // Predicated region
      $region9: #{tpu_custom_call.1} parent=5 // pred_check
        _
      $region10: #{tpu_custom_call.1} parent=5 // pred_check_branch
        %175 = sbr.rel (%p172) target = $region12
      $region11: #{tpu_custom_call.1} parent=5 // pred_region
        %s176 = ssub.s32 %s21, 1
        // Predicated region
        $region13: #{tpu_custom_call.1} parent=11 // pred_check
          %p177 = pneg %p94
        $region14: #{tpu_custom_call.1} parent=11 // pred_check_branch
          %179 = sbr.rel (%p177) target = $region16
        $region15: #{tpu_custom_call.1} parent=11 // pred_region
          %s181 = ssub.s32 9216, 9216
          %182 = vsyncadd [#allocation6], %s181
          %s183 = sshll.u32 [#allocation7], 4
          %s184 = int_to_ptr.vmem [resolvable:$true] %s183
          %189 = dma.hbm_to_vmem [thread:$0]  %s2, 9216, %s184, [#allocation6], 192, 192, 12
        $region16: #{tpu_custom_call.1} parent=11 // pred_fallthru
          _
        // Predicated region
        $region17: #{tpu_custom_call.1} parent=11 // pred_check
          %p190 = pneg %p115
        $region18: #{tpu_custom_call.1} parent=11 // pred_check_branch
          %192 = sbr.rel (%p190) target = $region20
        $region19: #{tpu_custom_call.1} parent=11 // pred_region
          %s194 = ssub.s32 8192, 8192
          %195 = vsyncadd [#allocation9], %s194
          %s196 = sshll.u32 [#allocation8], 4
          %s197 = int_to_ptr.vmem [resolvable:$true] %s196
          %202 = dma.hbm_to_vmem [thread:$0]  %s3, 8192, %s197, [#allocation9], 64, 64, 4
        $region20: #{tpu_custom_call.1} parent=11 // pred_fallthru
          _
        // Predicated region
        $region21: #{tpu_custom_call.1} parent=11 // pred_check
          %p203 = pneg %p136
        $region22: #{tpu_custom_call.1} parent=11 // pred_check_branch
          %205 = sbr.rel (%p203) target = $region24
        $region23: #{tpu_custom_call.1} parent=11 // pred_region
          %s207 = ssub.s32 768, 768
          %208 = vsyncadd [#allocation9], %s207
          %s209 = sshll.u32 [#allocation10], 4
          %s210 = int_to_ptr.vmem [resolvable:$true] %s209
          %215 = dma.hbm_to_vmem [thread:$0]  %s4, 768, %s210, [#allocation9], 384, 384, 24
        $region24: #{tpu_custom_call.1} parent=11 // pred_fallthru
          _
      $region12: #{tpu_custom_call.1} parent=5 // pred_fallthru
        _
      %p216 = scmp.lt.s32.totalorder %s21, 2
      // Predicated region
      $region25: #{tpu_custom_call.1} parent=5 // pred_check
        %p217 = pneg %p216
      $region26: #{tpu_custom_call.1} parent=5 // pred_check_branch
        %219 = sbr.rel (%p217) target = $region28
      $region27: #{tpu_custom_call.1} parent=5 // pred_region
        // Predicated region
        $region29: #{tpu_custom_call.1} parent=27 // pred_check
          %p220 = pneg %p41
        $region30: #{tpu_custom_call.1} parent=27 // pred_check_branch
          %222 = sbr.rel (%p220) target = $region32
        $region31: #{tpu_custom_call.1} parent=27 // pred_region
          %s223 = sand.u32 %s31, 1
          %s224 = scalar_lea.sflag [#allocation3], %s223
          %s225 = sand.u32 %s31, 1
          %s226 = smul.addr %s225, 8
          %s227 = scalar_lea.vmem [#allocation2], %s226
          %s228 = smul.u32 2, %s21
          %s230 = ssub.s32 128, 128
          %231 = vsyncadd %s224, %s230
          %s232 = smul.addr %s228, 64
          %s233 = scalar_lea.hbm %s0, %s232
          %s234 = sshll.u32 %s227, 4
          %s235 = int_to_ptr.vmem [resolvable:$true] %s234
          %240 = dma.hbm_to_vmem [thread:$0]  %s233, 128, %s235, %s224, 64, 64, 4
        $region32: #{tpu_custom_call.1} parent=27 // pred_fallthru
          _
        // Predicated region
        $region33: #{tpu_custom_call.1} parent=27 // pred_check
          %p241 = pneg %p67
        $region34: #{tpu_custom_call.1} parent=27 // pred_check_branch
          %243 = sbr.rel (%p241) target = $region36
        $region35: #{tpu_custom_call.1} parent=27 // pred_region
          %s244 = sand.u32 %s21, 1
          %s245 = scalar_lea.sflag [#allocation6], %s244
          %s246 = sand.u32 %s57, 1
          %s247 = smul.addr %s246, 8
          %s248 = scalar_lea.vmem [#allocation5], %s247
          %s249 = smul.u32 2, %s21
          %s251 = ssub.s32 128, 128
          %252 = vsyncadd %s245, %s251
          %s253 = smul.addr %s249, 64
          %s254 = scalar_lea.hbm %s1, %s253
          %s255 = sshll.u32 %s248, 4
          %s256 = int_to_ptr.vmem [resolvable:$true] %s255
          %261 = dma.hbm_to_vmem [thread:$0]  %s254, 128, %s256, %s245, 64, 64, 4
        $region36: #{tpu_custom_call.1} parent=27 // pred_fallthru
          _
      $region28: #{tpu_custom_call.1} parent=5 // pred_fallthru
        _
      %p262 = scmp.le.s32.totalorder 1, %s21
      %p263 = scmp.lt.s32.totalorder %s21, 3
      %p264 = pnand %p262, %p263
      %p265 = pneg %p264
      // Predicated region
      $region37: #{tpu_custom_call.1} parent=5 // pred_check
        _
      $region38: #{tpu_custom_call.1} parent=5 // pred_check_branch
        %267 = sbr.rel (%p264) target = $region40
      $region39: #{tpu_custom_call.1} parent=5 // pred_region
        %s268 = ssub.s32 %s21, 1
        %s269 = sand.u32 %s34, 1
        %s270 = scalar_lea.sflag [#allocation3], %s269
        %s271 = sand.u32 %s34, 1
        %s272 = smul.addr %s271, 8
        %s273 = scalar_lea.vmem [#allocation2], %s272
        // Predicated region
        $region41: #{tpu_custom_call.1} parent=39 // pred_check
          %p274 = pneg %p47
        $region42: #{tpu_custom_call.1} parent=39 // pred_check_branch
          %276 = sbr.rel (%p274) target = $region44
        $region43: #{tpu_custom_call.1} parent=39 // pred_region
          %277 = dma.done %s270, 128
        $region44: #{tpu_custom_call.1} parent=39 // pred_fallthru
          _
        %s278 = sand.u32 %s26, 1
        %s279 = scalar_lea.sflag [#allocation6], %s278
        %s280 = sand.u32 %s60, 1
        %s281 = smul.addr %s280, 8
        %s282 = scalar_lea.vmem [#allocation5], %s281
        // Predicated region
        $region45: #{tpu_custom_call.1} parent=39 // pred_check
          %p283 = pneg %p73
        $region46: #{tpu_custom_call.1} parent=39 // pred_check_branch
          %285 = sbr.rel (%p283) target = $region48
        $region47: #{tpu_custom_call.1} parent=39 // pred_region
          %286 = dma.done %s279, 128
        $region48: #{tpu_custom_call.1} parent=39 // pred_fallthru
          _
        // Predicated region
        $region49: #{tpu_custom_call.1} parent=39 // pred_check
          %p287 = pneg %p94
        $region50: #{tpu_custom_call.1} parent=39 // pred_check_branch
          %289 = sbr.rel (%p287) target = $region52
        $region51: #{tpu_custom_call.1} parent=39 // pred_region
          %290 = dma.done [#allocation6], 9216
        $region52: #{tpu_custom_call.1} parent=39 // pred_fallthru
          _
        // Predicated region
        $region53: #{tpu_custom_call.1} parent=39 // pred_check
          %p291 = pneg %p115
        $region54: #{tpu_custom_call.1} parent=39 // pred_check_branch
          %293 = sbr.rel (%p291) target = $region56
        $region55: #{tpu_custom_call.1} parent=39 // pred_region
          %294 = dma.done [#allocation9], 8192
        $region56: #{tpu_custom_call.1} parent=39 // pred_fallthru
          _
        // Predicated region
        $region57: #{tpu_custom_call.1} parent=39 // pred_check
          %p295 = pneg %p136
        $region58: #{tpu_custom_call.1} parent=39 // pred_check_branch
          %297 = sbr.rel (%p295) target = $region60
        $region59: #{tpu_custom_call.1} parent=39 // pred_region
          %298 = dma.done [#allocation9], 768
        $region60: #{tpu_custom_call.1} parent=39 // pred_fallthru
          _
        %s299 = sand.u32 %s34, 1
        %s300 = scalar_lea.sflag [#allocation3], %s299
        %s301 = sand.u32 %s34, 1
        %s302 = smul.addr %s301, 8
        %s303 = scalar_lea.vmem [#allocation2], %s302
        %p304 = pneg %p47
        %p305 = pneg %p44
        %s306 = sand.u32 %s26, 1
        %s307 = scalar_lea.sflag [#allocation6], %s306
        %s308 = sand.u32 %s60, 1
        %s309 = smul.addr %s308, 8
        %s310 = scalar_lea.vmem [#allocation5], %s309
        %p311 = pneg %p73
        %p312 = pneg %p70
        %p313 = pneg %p94
        %p314 = pneg %p91
        %p315 = pneg %p115
        %p316 = pneg %p112
        %p317 = pneg %p136
        %p318 = pneg %p133
        %p319 = pneg %p162
        %p320 = pneg %p159
        %s321 = sand.u32 %s149, 1
        %s322 = scalar_lea.sflag [#allocation4], %s321
        %s323 = sand.u32 %s149, 1
        %s324 = smul.addr %s323, 64
        %s325 = scalar_lea.vmem [#allocation11], %s324
        %s326 = smul.u32 2, %s26
        %s327 = smul.u32 2, %s26
        %s328 = smul.u32 2, %s26
        %v330 = vld [vmem:[%s273] sm:$0xf]
        %v331 = vld [vmem:[%s273 + $0x4] sm:$0xf]
        %v332 = vld [vmem:[%s282] sm:$0xf]
        %v333 = vld [vmem:[%s282 + $0x4] sm:$0xf]
        %v334 = vld [vmem:[#allocation7] sm:$0xff]
        %v335 = vld [vmem:[#allocation7 + $0xc] sm:$0xff]
        %v336 = vld [vmem:[#allocation7 + $0x18] sm:$0xff]
        %v337 = vld [vmem:[#allocation7 + $0x24] sm:$0xff]
        %v338 = vld [vmem:[#allocation7 + $0x30] sm:$0xff]
        %v339 = vld [vmem:[#allocation7 + $0x3c] sm:$0xff]
        %v340 = vld [vmem:[#allocation7 + $0x48] sm:$0xff]
        %v341 = vld [vmem:[#allocation7 + $0x54] sm:$0xff]
        %v342 = vld [vmem:[#allocation7 + $0x60] sm:$0xff]
        %v343 = vld [vmem:[#allocation7 + $0x6c] sm:$0xff]
        %v344 = vld [vmem:[#allocation7 + $0x78] sm:$0xff]
        %v345 = vld [vmem:[#allocation7 + $0x84] sm:$0xff]
        %v346 = vld [vmem:[#allocation7 + $0x90] sm:$0xff]
        %v347 = vld [vmem:[#allocation7 + $0x9c] sm:$0xff]
        %v348 = vld [vmem:[#allocation7 + $0xa8] sm:$0xff]
        %v349 = vld [vmem:[#allocation7 + $0xb4] sm:$0xff]
        %v350 = vld [vmem:[#allocation10] ss:$8 sm:$0x3]
        %v352 = vlaneseq
        %v353 = vshrl.u32 %v352, 7
        %v354 = vsub.s32 0, %v353
        %v355 = vrot.slane %v350, %v354
        %v356 = vlaneseq
        %v357 = vshrl.u32 %v356, 7
        %v358 = vsub.s32 1, %v357
        %v359 = vrot.slane %v350, %v358
        %v364 = vunpack.c.l.b16 %v330
        %v365 = vunpack.c.l.b16 %v331
        %v366 = vpack.c.b16 %v365, %v364
        %v384 = vunpack.c.l.b16 %v334
        %v385 = vunpack.c.h.b16 %v334
        %v386 = vunpack.c.l.b16 %v335
        %v387 = vunpack.c.h.b16 %v335
        %v388 = vunpack.c.l.b16 %v336
        %v389 = vunpack.c.h.b16 %v336
        %v390 = vunpack.c.l.b16 %v337
        %v391 = vunpack.c.h.b16 %v337
        %v392 = vunpack.c.l.b16 %v338
        %v393 = vunpack.c.h.b16 %v338
        %v394 = vunpack.c.l.b16 %v339
        %v395 = vunpack.c.h.b16 %v339
        %v396 = vunpack.c.l.b16 %v340
        %v397 = vunpack.c.h.b16 %v340
        %v398 = vunpack.c.l.b16 %v341
        %v399 = vunpack.c.h.b16 %v341
        %v400 = vunpack.c.l.b16 %v342
        %v401 = vunpack.c.h.b16 %v342
        %v402 = vunpack.c.l.b16 %v343
        %v403 = vunpack.c.h.b16 %v343
        %v404 = vunpack.c.l.b16 %v344
        %v405 = vunpack.c.h.b16 %v344
        %v406 = vunpack.c.l.b16 %v345
        %v407 = vunpack.c.h.b16 %v345
        %v408 = vunpack.c.l.b16 %v346
        %v409 = vunpack.c.h.b16 %v346
        %v410 = vunpack.c.l.b16 %v347
        %v411 = vunpack.c.h.b16 %v347
        %v412 = vunpack.c.l.b16 %v348
        %v413 = vunpack.c.h.b16 %v348
        %v414 = vunpack.c.l.b16 %v349
        %v415 = vunpack.c.h.b16 %v349
        %v416 = vpack.c.b16 %v386, %v384
        %v417 = vpack.c.b16 %v387, %v385
        %v418 = vpack.c.b16 %v390, %v388
        %v419 = vpack.c.b16 %v391, %v389
        %v420 = vpack.c.b16 %v394, %v392
        %v421 = vpack.c.b16 %v395, %v393
        %v422 = vpack.c.b16 %v398, %v396
        %v423 = vpack.c.b16 %v399, %v397
        %v424 = vpack.c.b16 %v402, %v400
        %v425 = vpack.c.b16 %v403, %v401
        %v426 = vpack.c.b16 %v406, %v404
        %v427 = vpack.c.b16 %v407, %v405
        %v428 = vpack.c.b16 %v410, %v408
        %v429 = vpack.c.b16 %v411, %v409
        %v430 = vpack.c.b16 %v414, %v412
        %v431 = vpack.c.b16 %v415, %v413
        %448 = vmatprep.subr.bf16.mxu0 %v431
        %449 = vmatpush1.bf16.msra.mxu0 %v430
        %450 = vmatprep.subr.bf16.mxu0 %v429
        %451 = vmatpush1.bf16.msra.mxu0 %v428
        %452 = vmatprep.subr.bf16.mxu0 %v427
        %453 = vmatpush1.bf16.msra.mxu0 %v426
        %454 = vmatprep.subr.bf16.mxu0 %v425
        %455 = vmatpush1.bf16.msra.mxu0 %v424
        %456 = vmatprep.subr.bf16.mxu0 %v423
        %457 = vmatpush1.bf16.msra.mxu0 %v422
        %458 = vmatprep.subr.bf16.mxu0 %v421
        %459 = vmatpush1.bf16.msra.mxu0 %v420
        %460 = vmatprep.subr.bf16.mxu0 %v419
        %461 = vmatpush1.bf16.msra.mxu0 %v418
        %462 = vmatprep.subr.bf16.mxu0 %v417
        %463 = vmatpush1.bf16.msra.mxu0 %v416
        %464 = vmatprep.subr.bf16.mxu0 0
        %465 = vmatpush2.bf16.msra.mxu0 0
        %466 = vmatprep.subr.bf16.mxu0 0
        %467 = vmatpush2.bf16.msra.mxu0 0
        %468 = vmatprep.subr.bf16.mxu0 0
        %469 = vmatpush2.bf16.msra.mxu0 0
        %470 = vmatprep.subr.bf16.mxu0 0
        %471 = vmatpush2.bf16.msra.mxu0 0
        %472 = vmatprep.subr.bf16.mxu0 0
        %473 = vmatpush2.bf16.msra.mxu0 0
        %474 = vmatprep.subr.bf16.mxu0 0
        %475 = vmatpush2.bf16.msra.mxu0 0
        %476 = vmatprep.subr.bf16.mxu0 0
        %477 = vmatpush2.bf16.msra.mxu0 0
        %478 = vmatprep.subr.bf16.mxu0 0
        %479 = vmatpush2.bf16.msra.mxu0 0
        %480 = vmatprep.mubr.bf16.mxu0 0
        %481 = vmatmul.mubr.bf16.gmra.mxu0 %v366
        %v482 = vpop.f32.mrf.mxu0
        %v483 = vadd.f32 %v355, %v482
        %v484 = vpop.f32.mrf.mxu0
        %v485 = vadd.f32 %v359, %v484
        %v486 = vpop.f32.mrf.mxu0
        %v487 = vadd.f32 %v355, %v486
        %v488 = vpop.f32.mrf.mxu0
        %v489 = vadd.f32 %v359, %v488
        %490 = vdwg.mxu0
        %491 = vst [vmem:[%s325 + $0x18] sm:$0xff] %v485
        %492 = vst [vmem:[%s325 + $0x38] sm:$0xff] %v489
        %v493 = vmax.f32 %v483, 0.0
        %v494 = vmax.f32 %v487, 0.0
        %v495 = vpack.c.bf16 %v494, %v493
        %v496 = vld [vmem:[#allocation8] sm:$0xf]
        %v497 = vld [vmem:[#allocation8 + $0x4] sm:$0xf]
        %v498 = vld [vmem:[#allocation8 + $0x8] sm:$0xf]
        %v499 = vld [vmem:[#allocation8 + $0xc] sm:$0xf]
        %v500 = vld [vmem:[#allocation8 + $0x10] sm:$0xf]
        %v501 = vld [vmem:[#allocation8 + $0x14] sm:$0xf]
        %v502 = vld [vmem:[#allocation8 + $0x18] sm:$0xf]
        %v503 = vld [vmem:[#allocation8 + $0x1c] sm:$0xf]
        %v504 = vld [vmem:[#allocation8 + $0x20] sm:$0xf]
        %v505 = vld [vmem:[#allocation8 + $0x24] sm:$0xf]
        %v506 = vld [vmem:[#allocation8 + $0x28] sm:$0xf]
        %v507 = vld [vmem:[#allocation8 + $0x2c] sm:$0xf]
        %v508 = vld [vmem:[#allocation8 + $0x30] sm:$0xf]
        %v509 = vld [vmem:[#allocation8 + $0x34] sm:$0xf]
        %v510 = vld [vmem:[#allocation8 + $0x38] sm:$0xf]
        %v511 = vld [vmem:[#allocation8 + $0x3c] sm:$0xf]
        %v512 = vld [vmem:[#allocation10 + $0x1] ss:$0 sm:$0xff]
        %v529 = vunpack.c.l.b16 %v496
        %v530 = vunpack.c.l.b16 %v497
        %v531 = vunpack.c.l.b16 %v498
        %v532 = vunpack.c.l.b16 %v499
        %v533 = vunpack.c.l.b16 %v500
        %v534 = vunpack.c.l.b16 %v501
        %v535 = vunpack.c.l.b16 %v502
        %v536 = vunpack.c.l.b16 %v503
        %v537 = vunpack.c.l.b16 %v504
        %v538 = vunpack.c.l.b16 %v505
        %v539 = vunpack.c.l.b16 %v506
        %v540 = vunpack.c.l.b16 %v507
        %v541 = vunpack.c.l.b16 %v508
        %v542 = vunpack.c.l.b16 %v509
        %v543 = vunpack.c.l.b16 %v510
        %v544 = vunpack.c.l.b16 %v511
        %v545 = vpack.c.b16 %v530, %v529
        %v546 = vpack.c.b16 %v532, %v531
        %v547 = vpack.c.b16 %v534, %v533
        %v548 = vpack.c.b16 %v536, %v535
        %v549 = vpack.c.b16 %v538, %v537
        %v550 = vpack.c.b16 %v540, %v539
        %v551 = vpack.c.b16 %v542, %v541
        %v552 = vpack.c.b16 %v544, %v543
        %561 = vmatprep.subr.bf16.mxu0 0
        %562 = vmatpush1.bf16.msra.mxu0 %v552
        %563 = vmatprep.subr.bf16.mxu0 0
        %564 = vmatpush1.bf16.msra.mxu0 %v551
        %565 = vmatprep.subr.bf16.mxu0 0
        %566 = vmatpush1.bf16.msra.mxu0 %v550
        %567 = vmatprep.subr.bf16.mxu0 0
        %568 = vmatpush1.bf16.msra.mxu0 %v549
        %569 = vmatprep.subr.bf16.mxu0 0
        %570 = vmatpush1.bf16.msra.mxu0 %v548
        %571 = vmatprep.subr.bf16.mxu0 0
        %572 = vmatpush1.bf16.msra.mxu0 %v547
        %573 = vmatprep.subr.bf16.mxu0 0
        %574 = vmatpush1.bf16.msra.mxu0 %v546
        %575 = vmatprep.subr.bf16.mxu0 0
        %576 = vmatpush1.bf16.msra.mxu0 %v545
        %577 = vmatprep.subr.bf16.mxu0 0
        %578 = vmatpush2.bf16.msra.mxu0 0
        %579 = vmatprep.subr.bf16.mxu0 0
        %580 = vmatpush2.bf16.msra.mxu0 0
        %581 = vmatprep.subr.bf16.mxu0 0
        %582 = vmatpush2.bf16.msra.mxu0 0
        %583 = vmatprep.subr.bf16.mxu0 0
        %584 = vmatpush2.bf16.msra.mxu0 0
        %585 = vmatprep.subr.bf16.mxu0 0
        %586 = vmatpush2.bf16.msra.mxu0 0
        %587 = vmatprep.subr.bf16.mxu0 0
        %588 = vmatpush2.bf16.msra.mxu0 0
        %589 = vmatprep.subr.bf16.mxu0 0
        %590 = vmatpush2.bf16.msra.mxu0 0
        %591 = vmatprep.subr.bf16.mxu0 0
        %592 = vmatpush2.bf16.msra.mxu0 0
        %593 = vmatprep.mubr.bf16.mxu0 0
        %594 = vmatmul.mubr.bf16.gmra.mxu0 %v495
        %v595 = vpop.f32.mrf.mxu0
        %v596 = vadd.f32 %v512, %v595
        %v597 = vpop.f32.mrf.mxu0
        %v598 = vpop.f32.mrf.mxu0
        %v599 = vadd.f32 %v512, %v598
        %v600 = vpop.f32.mrf.mxu0
        %601 = vdwg.mxu0
        %v602 = vmax.f32 %v596, 0.0
        %v603 = vmax.f32 %v599, 0.0
        %v604 = vpack.c.bf16 %v603, %v602
        %v605 = vld [vmem:[#allocation8 + $0x40] sm:$0xf]
        %v606 = vld [vmem:[#allocation8 + $0x44] sm:$0xf]
        %v607 = vld [vmem:[#allocation8 + $0x48] sm:$0xf]
        %v608 = vld [vmem:[#allocation8 + $0x4c] sm:$0xf]
        %v609 = vld [vmem:[#allocation8 + $0x50] sm:$0xf]
        %v610 = vld [vmem:[#allocation8 + $0x54] sm:$0xf]
        %v611 = vld [vmem:[#allocation8 + $0x58] sm:$0xf]
        %v612 = vld [vmem:[#allocation8 + $0x5c] sm:$0xf]
        %v613 = vld [vmem:[#allocation8 + $0x60] sm:$0xf]
        %v614 = vld [vmem:[#allocation8 + $0x64] sm:$0xf]
        %v615 = vld [vmem:[#allocation8 + $0x68] sm:$0xf]
        %v616 = vld [vmem:[#allocation8 + $0x6c] sm:$0xf]
        %v617 = vld [vmem:[#allocation8 + $0x70] sm:$0xf]
        %v618 = vld [vmem:[#allocation8 + $0x74] sm:$0xf]
        %v619 = vld [vmem:[#allocation8 + $0x78] sm:$0xf]
        %v620 = vld [vmem:[#allocation8 + $0x7c] sm:$0xf]
        %v621 = vld [vmem:[#allocation10 + $0x2] ss:$0 sm:$0xff]
        %v638 = vunpack.c.l.b16 %v605
        %v639 = vunpack.c.l.b16 %v606
        %v640 = vunpack.c.l.b16 %v607
        %v641 = vunpack.c.l.b16 %v608
        %v642 = vunpack.c.l.b16 %v609
        %v643 = vunpack.c.l.b16 %v610
        %v644 = vunpack.c.l.b16 %v611
        %v645 = vunpack.c.l.b16 %v612
        %v646 = vunpack.c.l.b16 %v613
        %v647 = vunpack.c.l.b16 %v614
        %v648 = vunpack.c.l.b16 %v615
        %v649 = vunpack.c.l.b16 %v616
        %v650 = vunpack.c.l.b16 %v617
        %v651 = vunpack.c.l.b16 %v618
        %v652 = vunpack.c.l.b16 %v619
        %v653 = vunpack.c.l.b16 %v620
        %v654 = vpack.c.b16 %v639, %v638
        %v655 = vpack.c.b16 %v641, %v640
        %v656 = vpack.c.b16 %v643, %v642
        %v657 = vpack.c.b16 %v645, %v644
        %v658 = vpack.c.b16 %v647, %v646
        %v659 = vpack.c.b16 %v649, %v648
        %v660 = vpack.c.b16 %v651, %v650
        %v661 = vpack.c.b16 %v653, %v652
        %670 = vmatprep.subr.bf16.mxu0 0
        %671 = vmatpush1.bf16.msra.mxu0 %v661
        %672 = vmatprep.subr.bf16.mxu0 0
        %673 = vmatpush1.bf16.msra.mxu0 %v660
        %674 = vmatprep.subr.bf16.mxu0 0
        %675 = vmatpush1.bf16.msra.mxu0 %v659
        %676 = vmatprep.subr.bf16.mxu0 0
        %677 = vmatpush1.bf16.msra.mxu0 %v658
        %678 = vmatprep.subr.bf16.mxu0 0
        %679 = vmatpush1.bf16.msra.mxu0 %v657
        %680 = vmatprep.subr.bf16.mxu0 0
        %681 = vmatpush1.bf16.msra.mxu0 %v656
        %682 = vmatprep.subr.bf16.mxu0 0
        %683 = vmatpush1.bf16.msra.mxu0 %v655
        %684 = vmatprep.subr.bf16.mxu0 0
        %685 = vmatpush1.bf16.msra.mxu0 %v654
        %686 = vmatprep.subr.bf16.mxu0 0
        %687 = vmatpush2.bf16.msra.mxu0 0
        %688 = vmatprep.subr.bf16.mxu0 0
        %689 = vmatpush2.bf16.msra.mxu0 0
        %690 = vmatprep.subr.bf16.mxu0 0
        %691 = vmatpush2.bf16.msra.mxu0 0
        %692 = vmatprep.subr.bf16.mxu0 0
        %693 = vmatpush2.bf16.msra.mxu0 0
        %694 = vmatprep.subr.bf16.mxu0 0
        %695 = vmatpush2.bf16.msra.mxu0 0
        %696 = vmatprep.subr.bf16.mxu0 0
        %697 = vmatpush2.bf16.msra.mxu0 0
        %698 = vmatprep.subr.bf16.mxu0 0
        %699 = vmatpush2.bf16.msra.mxu0 0
        %700 = vmatprep.subr.bf16.mxu0 0
        %701 = vmatpush2.bf16.msra.mxu0 0
        %702 = vmatprep.mubr.bf16.mxu0 0
        %703 = vmatmul.mubr.bf16.gmra.mxu0 %v604
        %v704 = vpop.f32.mrf.mxu0
        %v705 = vadd.f32 %v621, %v704
        %v706 = vpop.f32.mrf.mxu0
        %v707 = vpop.f32.mrf.mxu0
        %v708 = vadd.f32 %v621, %v707
        %v709 = vpop.f32.mrf.mxu0
        %710 = vdwg.mxu0
        %v711 = vmax.f32 %v705, 0.0
        %v712 = vmax.f32 %v708, 0.0
        %713 = vst [vmem:[%s325 + $0x8] sm:$0xff] %v711
        %714 = vst [vmem:[%s325 + $0x28] sm:$0xff] %v712
        %v715 = vpack.c.bf16 %v712, %v711
        %v716 = vld [vmem:[#allocation7 + $0xc0] sm:$0xff]
        %v717 = vld [vmem:[#allocation7 + $0xc8] sm:$0xf]
        %v718 = vld [vmem:[#allocation7 + $0xcc] sm:$0xff]
        %v719 = vld [vmem:[#allocation7 + $0xd4] sm:$0xf]
        %v720 = vld [vmem:[#allocation7 + $0xd8] sm:$0xff]
        %v721 = vld [vmem:[#allocation7 + $0xe0] sm:$0xf]
        %v722 = vld [vmem:[#allocation7 + $0xe4] sm:$0xff]
        %v723 = vld [vmem:[#allocation7 + $0xec] sm:$0xf]
        %v724 = vld [vmem:[#allocation7 + $0xf0] sm:$0xff]
        %v725 = vld [vmem:[#allocation7 + $0xf8] sm:$0xf]
        %v726 = vld [vmem:[#allocation7 + $0xfc] sm:$0xff]
        %v727 = vld [vmem:[#allocation7 + $0x104] sm:$0xf]
        %v728 = vld [vmem:[#allocation7 + $0x108] sm:$0xff]
        %v729 = vld [vmem:[#allocation7 + $0x110] sm:$0xf]
        %v730 = vld [vmem:[#allocation7 + $0x114] sm:$0xff]
        %v731 = vld [vmem:[#allocation7 + $0x11c] sm:$0xf]
        %v732 = vld [vmem:[#allocation7 + $0x120] sm:$0xff]
        %v733 = vld [vmem:[#allocation7 + $0x128] sm:$0xf]
        %v734 = vld [vmem:[#allocation7 + $0x12c] sm:$0xff]
        %v735 = vld [vmem:[#allocation7 + $0x134] sm:$0xf]
        %v736 = vld [vmem:[#allocation7 + $0x138] sm:$0xff]
        %v737 = vld [vmem:[#allocation7 + $0x140] sm:$0xf]
        %v738 = vld [vmem:[#allocation7 + $0x144] sm:$0xff]
        %v739 = vld [vmem:[#allocation7 + $0x14c] sm:$0xf]
        %v740 = vld [vmem:[#allocation7 + $0x150] sm:$0xff]
        %v741 = vld [vmem:[#allocation7 + $0x158] sm:$0xf]
        %v742 = vld [vmem:[#allocation7 + $0x15c] sm:$0xff]
        %v743 = vld [vmem:[#allocation7 + $0x164] sm:$0xf]
        %v744 = vld [vmem:[#allocation7 + $0x168] sm:$0xff]
        %v745 = vld [vmem:[#allocation7 + $0x170] sm:$0xf]
        %v746 = vld [vmem:[#allocation7 + $0x174] sm:$0xff]
        %v747 = vld [vmem:[#allocation7 + $0x17c] sm:$0xf]
        %s748 = scalar_lea.vmem [#allocation10], 3
        %v749 = vld [vmem:[%s748] ss:$8 sm:$0x7]
        %v751 = vlaneseq
        %v752 = vshrl.u32 %v751, 7
        %v753 = vsub.s32 0, %v752
        %v754 = vrot.slane %v749, %v753
        %v755 = vlaneseq
        %v756 = vshrl.u32 %v755, 7
        %v757 = vsub.s32 1, %v756
        %v758 = vrot.slane %v749, %v757
        %v759 = vlaneseq
        %v760 = vshrl.u32 %v759, 7
        %v761 = vsub.s32 2, %v760
        %v762 = vrot.slane %v749, %v761
        %v798 = vunpack.c.l.b16 %v716
        %v799 = vunpack.c.h.b16 %v716
        %v800 = vunpack.c.l.b16 %v717
        %v801 = vunpack.c.l.b16 %v718
        %v802 = vunpack.c.h.b16 %v718
        %v803 = vunpack.c.l.b16 %v719
        %v804 = vunpack.c.l.b16 %v720
        %v805 = vunpack.c.h.b16 %v720
        %v806 = vunpack.c.l.b16 %v721
        %v807 = vunpack.c.l.b16 %v722
        %v808 = vunpack.c.h.b16 %v722
        %v809 = vunpack.c.l.b16 %v723
        %v810 = vunpack.c.l.b16 %v724
        %v811 = vunpack.c.h.b16 %v724
        %v812 = vunpack.c.l.b16 %v725
        %v813 = vunpack.c.l.b16 %v726
        %v814 = vunpack.c.h.b16 %v726
        %v815 = vunpack.c.l.b16 %v727
        %v816 = vunpack.c.l.b16 %v728
        %v817 = vunpack.c.h.b16 %v728
        %v818 = vunpack.c.l.b16 %v729
        %v819 = vunpack.c.l.b16 %v730
        %v820 = vunpack.c.h.b16 %v730
        %v821 = vunpack.c.l.b16 %v731
        %v822 = vunpack.c.l.b16 %v732
        %v823 = vunpack.c.h.b16 %v732
        %v824 = vunpack.c.l.b16 %v733
        %v825 = vunpack.c.l.b16 %v734
        %v826 = vunpack.c.h.b16 %v734
        %v827 = vunpack.c.l.b16 %v735
        %v828 = vunpack.c.l.b16 %v736
        %v829 = vunpack.c.h.b16 %v736
        %v830 = vunpack.c.l.b16 %v737
        %v831 = vunpack.c.l.b16 %v738
        %v832 = vunpack.c.h.b16 %v738
        %v833 = vunpack.c.l.b16 %v739
        %v834 = vunpack.c.l.b16 %v740
        %v835 = vunpack.c.h.b16 %v740
        %v836 = vunpack.c.l.b16 %v741
        %v837 = vunpack.c.l.b16 %v742
        %v838 = vunpack.c.h.b16 %v742
        %v839 = vunpack.c.l.b16 %v743
        %v840 = vunpack.c.l.b16 %v744
        %v841 = vunpack.c.h.b16 %v744
        %v842 = vunpack.c.l.b16 %v745
        %v843 = vunpack.c.l.b16 %v746
        %v844 = vunpack.c.h.b16 %v746
        %v845 = vunpack.c.l.b16 %v747
        %v846 = vpack.c.b16 %v801, %v798
        %v847 = vpack.c.b16 %v802, %v799
        %v848 = vpack.c.b16 %v803, %v800
        %v849 = vpack.c.b16 %v807, %v804
        %v850 = vpack.c.b16 %v808, %v805
        %v851 = vpack.c.b16 %v809, %v806
        %v852 = vpack.c.b16 %v813, %v810
        %v853 = vpack.c.b16 %v814, %v811
        %v854 = vpack.c.b16 %v815, %v812
        %v855 = vpack.c.b16 %v819, %v816
        %v856 = vpack.c.b16 %v820, %v817
        %v857 = vpack.c.b16 %v821, %v818
        %v858 = vpack.c.b16 %v825, %v822
        %v859 = vpack.c.b16 %v826, %v823
        %v860 = vpack.c.b16 %v827, %v824
        %v861 = vpack.c.b16 %v831, %v828
        %v862 = vpack.c.b16 %v832, %v829
        %v863 = vpack.c.b16 %v833, %v830
        %v864 = vpack.c.b16 %v837, %v834
        %v865 = vpack.c.b16 %v838, %v835
        %v866 = vpack.c.b16 %v839, %v836
        %v867 = vpack.c.b16 %v843, %v840
        %v868 = vpack.c.b16 %v844, %v841
        %v869 = vpack.c.b16 %v845, %v842
        %894 = vmatprep.subr.bf16.mxu0 %v868
        %895 = vmatpush1.bf16.msra.mxu0 %v867
        %896 = vmatprep.subr.bf16.mxu0 %v865
        %897 = vmatpush1.bf16.msra.mxu0 %v864
        %898 = vmatprep.subr.bf16.mxu0 %v862
        %899 = vmatpush1.bf16.msra.mxu0 %v861
        %900 = vmatprep.subr.bf16.mxu0 %v859
        %901 = vmatpush1.bf16.msra.mxu0 %v858
        %902 = vmatprep.subr.bf16.mxu0 %v856
        %903 = vmatpush1.bf16.msra.mxu0 %v855
        %904 = vmatprep.subr.bf16.mxu0 %v853
        %905 = vmatpush1.bf16.msra.mxu0 %v852
        %906 = vmatprep.subr.bf16.mxu0 %v850
        %907 = vmatpush1.bf16.msra.mxu0 %v849
        %908 = vmatprep.subr.bf16.mxu0 %v847
        %909 = vmatpush1.bf16.msra.mxu0 %v846
        %910 = vmatprep.subr.bf16.mxu0 0
        %911 = vmatpush2.bf16.msra.mxu0 0
        %912 = vmatprep.subr.bf16.mxu0 0
        %913 = vmatpush2.bf16.msra.mxu0 0
        %914 = vmatprep.subr.bf16.mxu0 0
        %915 = vmatpush2.bf16.msra.mxu0 0
        %916 = vmatprep.subr.bf16.mxu0 0
        %917 = vmatpush2.bf16.msra.mxu0 0
        %918 = vmatprep.subr.bf16.mxu0 0
        %919 = vmatpush2.bf16.msra.mxu0 0
        %920 = vmatprep.subr.bf16.mxu0 0
        %921 = vmatpush2.bf16.msra.mxu0 0
        %922 = vmatprep.subr.bf16.mxu0 0
        %923 = vmatpush2.bf16.msra.mxu0 0
        %924 = vmatprep.subr.bf16.mxu0 0
        %925 = vmatpush2.bf16.msra.mxu0 0
        %926 = vmatprep.mubr.bf16.mxu0 0
        %927 = vmatmul.mubr.bf16.gmra.mxu0 %v715
        %v928 = vpop.f32.mrf.mxu0
        %v929 = vadd.f32 %v754, %v928
        %v930 = vpop.f32.mrf.mxu0
        %v931 = vadd.f32 %v758, %v930
        %v932 = vpop.f32.mrf.mxu0
        %v933 = vadd.f32 %v754, %v932
        %v934 = vpop.f32.mrf.mxu0
        %v935 = vadd.f32 %v758, %v934
        %936 = vdwg.mxu0
        %937 = vmatprep.subr.bf16.mxu0 0
        %938 = vmatpush1.bf16.msra.mxu0 %v869
        %939 = vmatprep.subr.bf16.mxu0 0
        %940 = vmatpush1.bf16.msra.mxu0 %v866
        %941 = vmatprep.subr.bf16.mxu0 0
        %942 = vmatpush1.bf16.msra.mxu0 %v863
        %943 = vmatprep.subr.bf16.mxu0 0
        %944 = vmatpush1.bf16.msra.mxu0 %v860
        %945 = vmatprep.subr.bf16.mxu0 0
        %946 = vmatpush1.bf16.msra.mxu0 %v857
        %947 = vmatprep.subr.bf16.mxu0 0
        %948 = vmatpush1.bf16.msra.mxu0 %v854
        %949 = vmatprep.subr.bf16.mxu0 0
        %950 = vmatpush1.bf16.msra.mxu0 %v851
        %951 = vmatprep.subr.bf16.mxu0 0
        %952 = vmatpush1.bf16.msra.mxu0 %v848
        %953 = vmatprep.subr.bf16.mxu0 0
        %954 = vmatpush2.bf16.msra.mxu0 0
        %955 = vmatprep.subr.bf16.mxu0 0
        %956 = vmatpush2.bf16.msra.mxu0 0
        %957 = vmatprep.subr.bf16.mxu0 0
        %958 = vmatpush2.bf16.msra.mxu0 0
        %959 = vmatprep.subr.bf16.mxu0 0
        %960 = vmatpush2.bf16.msra.mxu0 0
        %961 = vmatprep.subr.bf16.mxu0 0
        %962 = vmatpush2.bf16.msra.mxu0 0
        %963 = vmatprep.subr.bf16.mxu0 0
        %964 = vmatpush2.bf16.msra.mxu0 0
        %965 = vmatprep.subr.bf16.mxu0 0
        %966 = vmatpush2.bf16.msra.mxu0 0
        %967 = vmatprep.subr.bf16.mxu0 0
        %968 = vmatpush2.bf16.msra.mxu0 0
        %969 = vmatprep.mubr.bf16.mxu0 0
        %970 = vmatmul.mubr.bf16.gmra.mxu0 %v715
        %v971 = vpop.f32.mrf.mxu0
        %v972 = vadd.f32 %v762, %v971
        %v973 = vpop.f32.mrf.mxu0
        %v974 = vpop.f32.mrf.mxu0
        %v975 = vadd.f32 %v762, %v974
        %v976 = vpop.f32.mrf.mxu0
        %977 = vdwg.mxu0
        %v978 = vld [vmem:[#allocation7 + $0x180] sm:$0xff]
        %v979 = vld [vmem:[#allocation7 + $0x18c] sm:$0xff]
        %v980 = vld [vmem:[#allocation7 + $0x198] sm:$0xff]
        %v981 = vld [vmem:[#allocation7 + $0x1a4] sm:$0xff]
        %v982 = vld [vmem:[#allocation7 + $0x1b0] sm:$0xff]
        %v983 = vld [vmem:[#allocation7 + $0x1bc] sm:$0xff]
        %v984 = vld [vmem:[#allocation7 + $0x1c8] sm:$0xff]
        %v985 = vld [vmem:[#allocation7 + $0x1d4] sm:$0xff]
        %v986 = vld [vmem:[#allocation7 + $0x1e0] sm:$0xff]
        %v987 = vld [vmem:[#allocation7 + $0x1ec] sm:$0xff]
        %v988 = vld [vmem:[#allocation7 + $0x1f8] sm:$0xff]
        %v989 = vld [vmem:[#allocation7 + $0x204] sm:$0xff]
        %v990 = vld [vmem:[#allocation7 + $0x210] sm:$0xff]
        %v991 = vld [vmem:[#allocation7 + $0x21c] sm:$0xff]
        %v992 = vld [vmem:[#allocation7 + $0x228] sm:$0xff]
        %v993 = vld [vmem:[#allocation7 + $0x234] sm:$0xff]
        %s994 = scalar_lea.vmem [#allocation10], 4
        %v995 = vld [vmem:[%s994] ss:$8 sm:$0x3]
        %v997 = vlaneseq
        %v998 = vshrl.u32 %v997, 7
        %v999 = vsub.s32 0, %v998
        %v1000 = vrot.slane %v995, %v999
        %v1001 = vlaneseq
        %v1002 = vshrl.u32 %v1001, 7
        %v1003 = vsub.s32 1, %v1002
        %v1004 = vrot.slane %v995, %v1003
        %v1009 = vunpack.c.l.b16 %v332
        %v1010 = vunpack.c.l.b16 %v333
        %v1011 = vpack.c.b16 %v1010, %v1009
        %v1029 = vunpack.c.l.b16 %v978
        %v1030 = vunpack.c.h.b16 %v978
        %v1031 = vunpack.c.l.b16 %v979
        %v1032 = vunpack.c.h.b16 %v979
        %v1033 = vunpack.c.l.b16 %v980
        %v1034 = vunpack.c.h.b16 %v980
        %v1035 = vunpack.c.l.b16 %v981
        %v1036 = vunpack.c.h.b16 %v981
        %v1037 = vunpack.c.l.b16 %v982
        %v1038 = vunpack.c.h.b16 %v982
        %v1039 = vunpack.c.l.b16 %v983
        %v1040 = vunpack.c.h.b16 %v983
        %v1041 = vunpack.c.l.b16 %v984
        %v1042 = vunpack.c.h.b16 %v984
        %v1043 = vunpack.c.l.b16 %v985
        %v1044 = vunpack.c.h.b16 %v985
        %v1045 = vunpack.c.l.b16 %v986
        %v1046 = vunpack.c.h.b16 %v986
        %v1047 = vunpack.c.l.b16 %v987
        %v1048 = vunpack.c.h.b16 %v987
        %v1049 = vunpack.c.l.b16 %v988
        %v1050 = vunpack.c.h.b16 %v988
        %v1051 = vunpack.c.l.b16 %v989
        %v1052 = vunpack.c.h.b16 %v989
        %v1053 = vunpack.c.l.b16 %v990
        %v1054 = vunpack.c.h.b16 %v990
        %v1055 = vunpack.c.l.b16 %v991
        %v1056 = vunpack.c.h.b16 %v991
        %v1057 = vunpack.c.l.b16 %v992
        %v1058 = vunpack.c.h.b16 %v992
        %v1059 = vunpack.c.l.b16 %v993
        %v1060 = vunpack.c.h.b16 %v993
        %v1061 = vpack.c.b16 %v1031, %v1029
        %v1062 = vpack.c.b16 %v1032, %v1030
        %v1063 = vpack.c.b16 %v1035, %v1033
        %v1064 = vpack.c.b16 %v1036, %v1034
        %v1065 = vpack.c.b16 %v1039, %v1037
        %v1066 = vpack.c.b16 %v1040, %v1038
        %v1067 = vpack.c.b16 %v1043, %v1041
        %v1068 = vpack.c.b16 %v1044, %v1042
        %v1069 = vpack.c.b16 %v1047, %v1045
        %v1070 = vpack.c.b16 %v1048, %v1046
        %v1071 = vpack.c.b16 %v1051, %v1049
        %v1072 = vpack.c.b16 %v1052, %v1050
        %v1073 = vpack.c.b16 %v1055, %v1053
        %v1074 = vpack.c.b16 %v1056, %v1054
        %v1075 = vpack.c.b16 %v1059, %v1057
        %v1076 = vpack.c.b16 %v1060, %v1058
        %1093 = vmatprep.subr.bf16.mxu0 %v1076
        %1094 = vmatpush1.bf16.msra.mxu0 %v1075
        %1095 = vmatprep.subr.bf16.mxu0 %v1074
        %1096 = vmatpush1.bf16.msra.mxu0 %v1073
        %1097 = vmatprep.subr.bf16.mxu0 %v1072
        %1098 = vmatpush1.bf16.msra.mxu0 %v1071
        %1099 = vmatprep.subr.bf16.mxu0 %v1070
        %1100 = vmatpush1.bf16.msra.mxu0 %v1069
        %1101 = vmatprep.subr.bf16.mxu0 %v1068
        %1102 = vmatpush1.bf16.msra.mxu0 %v1067
        %1103 = vmatprep.subr.bf16.mxu0 %v1066
        %1104 = vmatpush1.bf16.msra.mxu0 %v1065
        %1105 = vmatprep.subr.bf16.mxu0 %v1064
        %1106 = vmatpush1.bf16.msra.mxu0 %v1063
        %1107 = vmatprep.subr.bf16.mxu0 %v1062
        %1108 = vmatpush1.bf16.msra.mxu0 %v1061
        %1109 = vmatprep.subr.bf16.mxu0 0
        %1110 = vmatpush2.bf16.msra.mxu0 0
        %1111 = vmatprep.subr.bf16.mxu0 0
        %1112 = vmatpush2.bf16.msra.mxu0 0
        %1113 = vmatprep.subr.bf16.mxu0 0
        %1114 = vmatpush2.bf16.msra.mxu0 0
        %1115 = vmatprep.subr.bf16.mxu0 0
        %1116 = vmatpush2.bf16.msra.mxu0 0
        %1117 = vmatprep.subr.bf16.mxu0 0
        %1118 = vmatpush2.bf16.msra.mxu0 0
        %1119 = vmatprep.subr.bf16.mxu0 0
        %1120 = vmatpush2.bf16.msra.mxu0 0
        %1121 = vmatprep.subr.bf16.mxu0 0
        %1122 = vmatpush2.bf16.msra.mxu0 0
        %1123 = vmatprep.subr.bf16.mxu0 0
        %1124 = vmatpush2.bf16.msra.mxu0 0
        %1125 = vmatprep.mubr.bf16.mxu0 0
        %1126 = vmatmul.mubr.bf16.gmra.mxu0 %v1011
        %v1127 = vpop.f32.mrf.mxu0
        %v1128 = vadd.f32 %v1000, %v1127
        %v1129 = vpop.f32.mrf.mxu0
        %v1130 = vadd.f32 %v1004, %v1129
        %v1131 = vpop.f32.mrf.mxu0
        %v1132 = vadd.f32 %v1000, %v1131
        %v1133 = vpop.f32.mrf.mxu0
        %v1134 = vadd.f32 %v1004, %v1133
        %1135 = vdwg.mxu0
        %v1136 = vmax.f32 %v929, 0.0
        %v1137 = vmax.f32 %v933, 0.0
        %v1138 = vpack.c.bf16 %v1137, %v1136
        %v1139 = vld [vmem:[#allocation8 + $0x80] sm:$0xf]
        %v1140 = vld [vmem:[#allocation8 + $0x84] sm:$0xf]
        %v1141 = vld [vmem:[#allocation8 + $0x88] sm:$0xf]
        %v1142 = vld [vmem:[#allocation8 + $0x8c] sm:$0xf]
        %v1143 = vld [vmem:[#allocation8 + $0x90] sm:$0xf]
        %v1144 = vld [vmem:[#allocation8 + $0x94] sm:$0xf]
        %v1145 = vld [vmem:[#allocation8 + $0x98] sm:$0xf]
        %v1146 = vld [vmem:[#allocation8 + $0x9c] sm:$0xf]
        %v1147 = vld [vmem:[#allocation8 + $0xa0] sm:$0xf]
        %v1148 = vld [vmem:[#allocation8 + $0xa4] sm:$0xf]
        %v1149 = vld [vmem:[#allocation8 + $0xa8] sm:$0xf]
        %v1150 = vld [vmem:[#allocation8 + $0xac] sm:$0xf]
        %v1151 = vld [vmem:[#allocation8 + $0xb0] sm:$0xf]
        %v1152 = vld [vmem:[#allocation8 + $0xb4] sm:$0xf]
        %v1153 = vld [vmem:[#allocation8 + $0xb8] sm:$0xf]
        %v1154 = vld [vmem:[#allocation8 + $0xbc] sm:$0xf]
        %v1155 = vld [vmem:[#allocation10 + $0x5] ss:$0 sm:$0xff]
        %v1172 = vunpack.c.l.b16 %v1139
        %v1173 = vunpack.c.l.b16 %v1140
        %v1174 = vunpack.c.l.b16 %v1141
        %v1175 = vunpack.c.l.b16 %v1142
        %v1176 = vunpack.c.l.b16 %v1143
        %v1177 = vunpack.c.l.b16 %v1144
        %v1178 = vunpack.c.l.b16 %v1145
        %v1179 = vunpack.c.l.b16 %v1146
        %v1180 = vunpack.c.l.b16 %v1147
        %v1181 = vunpack.c.l.b16 %v1148
        %v1182 = vunpack.c.l.b16 %v1149
        %v1183 = vunpack.c.l.b16 %v1150
        %v1184 = vunpack.c.l.b16 %v1151
        %v1185 = vunpack.c.l.b16 %v1152
        %v1186 = vunpack.c.l.b16 %v1153
        %v1187 = vunpack.c.l.b16 %v1154
        %v1188 = vpack.c.b16 %v1173, %v1172
        %v1189 = vpack.c.b16 %v1175, %v1174
        %v1190 = vpack.c.b16 %v1177, %v1176
        %v1191 = vpack.c.b16 %v1179, %v1178
        %v1192 = vpack.c.b16 %v1181, %v1180
        %v1193 = vpack.c.b16 %v1183, %v1182
        %v1194 = vpack.c.b16 %v1185, %v1184
        %v1195 = vpack.c.b16 %v1187, %v1186
        %1204 = vmatprep.subr.bf16.mxu0 0
        %1205 = vmatpush1.bf16.msra.mxu0 %v1195
        %1206 = vmatprep.subr.bf16.mxu0 0
        %1207 = vmatpush1.bf16.msra.mxu0 %v1194
        %1208 = vmatprep.subr.bf16.mxu0 0
        %1209 = vmatpush1.bf16.msra.mxu0 %v1193
        %1210 = vmatprep.subr.bf16.mxu0 0
        %1211 = vmatpush1.bf16.msra.mxu0 %v1192
        %1212 = vmatprep.subr.bf16.mxu0 0
        %1213 = vmatpush1.bf16.msra.mxu0 %v1191
        %1214 = vmatprep.subr.bf16.mxu0 0
        %1215 = vmatpush1.bf16.msra.mxu0 %v1190
        %1216 = vmatprep.subr.bf16.mxu0 0
        %1217 = vmatpush1.bf16.msra.mxu0 %v1189
        %1218 = vmatprep.subr.bf16.mxu0 0
        %1219 = vmatpush1.bf16.msra.mxu0 %v1188
        %1220 = vmatprep.subr.bf16.mxu0 0
        %1221 = vmatpush2.bf16.msra.mxu0 0
        %1222 = vmatprep.subr.bf16.mxu0 0
        %1223 = vmatpush2.bf16.msra.mxu0 0
        %1224 = vmatprep.subr.bf16.mxu0 0
        %1225 = vmatpush2.bf16.msra.mxu0 0
        %1226 = vmatprep.subr.bf16.mxu0 0
        %1227 = vmatpush2.bf16.msra.mxu0 0
        %1228 = vmatprep.subr.bf16.mxu0 0
        %1229 = vmatpush2.bf16.msra.mxu0 0
        %1230 = vmatprep.subr.bf16.mxu0 0
        %1231 = vmatpush2.bf16.msra.mxu0 0
        %1232 = vmatprep.subr.bf16.mxu0 0
        %1233 = vmatpush2.bf16.msra.mxu0 0
        %1234 = vmatprep.subr.bf16.mxu0 0
        %1235 = vmatpush2.bf16.msra.mxu0 0
        %1236 = vmatprep.mubr.bf16.mxu0 0
        %1237 = vmatmul.mubr.bf16.gmra.mxu0 %v1138
        %v1238 = vpop.f32.mrf.mxu0
        %v1239 = vadd.f32 %v1155, %v1238
        %v1240 = vpop.f32.mrf.mxu0
        %v1241 = vpop.f32.mrf.mxu0
        %v1242 = vadd.f32 %v1155, %v1241
        %v1243 = vpop.f32.mrf.mxu0
        %1244 = vdwg.mxu0
        %v1245 = vmax.f32 %v1239, 0.0
        %v1246 = vmax.f32 %v1242, 0.0
        %v1247 = vpack.c.bf16 %v1246, %v1245
        %v1248 = vld [vmem:[#allocation8 + $0xc0] sm:$0xf]
        %v1249 = vld [vmem:[#allocation8 + $0xc4] sm:$0xf]
        %v1250 = vld [vmem:[#allocation8 + $0xc8] sm:$0xf]
        %v1251 = vld [vmem:[#allocation8 + $0xcc] sm:$0xf]
        %v1252 = vld [vmem:[#allocation8 + $0xd0] sm:$0xf]
        %v1253 = vld [vmem:[#allocation8 + $0xd4] sm:$0xf]
        %v1254 = vld [vmem:[#allocation8 + $0xd8] sm:$0xf]
        %v1255 = vld [vmem:[#allocation8 + $0xdc] sm:$0xf]
        %v1256 = vld [vmem:[#allocation8 + $0xe0] sm:$0xf]
        %v1257 = vld [vmem:[#allocation8 + $0xe4] sm:$0xf]
        %v1258 = vld [vmem:[#allocation8 + $0xe8] sm:$0xf]
        %v1259 = vld [vmem:[#allocation8 + $0xec] sm:$0xf]
        %v1260 = vld [vmem:[#allocation8 + $0xf0] sm:$0xf]
        %v1261 = vld [vmem:[#allocation8 + $0xf4] sm:$0xf]
        %v1262 = vld [vmem:[#allocation8 + $0xf8] sm:$0xf]
        %v1263 = vld [vmem:[#allocation8 + $0xfc] sm:$0xf]
        %v1264 = vld [vmem:[#allocation10 + $0x6] ss:$0 sm:$0xff]
        %v1281 = vunpack.c.l.b16 %v1248
        %v1282 = vunpack.c.l.b16 %v1249
        %v1283 = vunpack.c.l.b16 %v1250
        %v1284 = vunpack.c.l.b16 %v1251
        %v1285 = vunpack.c.l.b16 %v1252
        %v1286 = vunpack.c.l.b16 %v1253
        %v1287 = vunpack.c.l.b16 %v1254
        %v1288 = vunpack.c.l.b16 %v1255
        %v1289 = vunpack.c.l.b16 %v1256
        %v1290 = vunpack.c.l.b16 %v1257
        %v1291 = vunpack.c.l.b16 %v1258
        %v1292 = vunpack.c.l.b16 %v1259
        %v1293 = vunpack.c.l.b16 %v1260
        %v1294 = vunpack.c.l.b16 %v1261
        %v1295 = vunpack.c.l.b16 %v1262
        %v1296 = vunpack.c.l.b16 %v1263
        %v1297 = vpack.c.b16 %v1282, %v1281
        %v1298 = vpack.c.b16 %v1284, %v1283
        %v1299 = vpack.c.b16 %v1286, %v1285
        %v1300 = vpack.c.b16 %v1288, %v1287
        %v1301 = vpack.c.b16 %v1290, %v1289
        %v1302 = vpack.c.b16 %v1292, %v1291
        %v1303 = vpack.c.b16 %v1294, %v1293
        %v1304 = vpack.c.b16 %v1296, %v1295
        %1313 = vmatprep.subr.bf16.mxu0 0
        %1314 = vmatpush1.bf16.msra.mxu0 %v1304
        %1315 = vmatprep.subr.bf16.mxu0 0
        %1316 = vmatpush1.bf16.msra.mxu0 %v1303
        %1317 = vmatprep.subr.bf16.mxu0 0
        %1318 = vmatpush1.bf16.msra.mxu0 %v1302
        %1319 = vmatprep.subr.bf16.mxu0 0
        %1320 = vmatpush1.bf16.msra.mxu0 %v1301
        %1321 = vmatprep.subr.bf16.mxu0 0
        %1322 = vmatpush1.bf16.msra.mxu0 %v1300
        %1323 = vmatprep.subr.bf16.mxu0 0
        %1324 = vmatpush1.bf16.msra.mxu0 %v1299
        %1325 = vmatprep.subr.bf16.mxu0 0
        %1326 = vmatpush1.bf16.msra.mxu0 %v1298
        %1327 = vmatprep.subr.bf16.mxu0 0
        %1328 = vmatpush1.bf16.msra.mxu0 %v1297
        %1329 = vmatprep.subr.bf16.mxu0 0
        %1330 = vmatpush2.bf16.msra.mxu0 0
        %1331 = vmatprep.subr.bf16.mxu0 0
        %1332 = vmatpush2.bf16.msra.mxu0 0
        %1333 = vmatprep.subr.bf16.mxu0 0
        %1334 = vmatpush2.bf16.msra.mxu0 0
        %1335 = vmatprep.subr.bf16.mxu0 0
        %1336 = vmatpush2.bf16.msra.mxu0 0
        %1337 = vmatprep.subr.bf16.mxu0 0
        %1338 = vmatpush2.bf16.msra.mxu0 0
        %1339 = vmatprep.subr.bf16.mxu0 0
        %1340 = vmatpush2.bf16.msra.mxu0 0
        %1341 = vmatprep.subr.bf16.mxu0 0
        %1342 = vmatpush2.bf16.msra.mxu0 0
        %1343 = vmatprep.subr.bf16.mxu0 0
        %1344 = vmatpush2.bf16.msra.mxu0 0
        %1345 = vmatprep.mubr.bf16.mxu0 0
        %1346 = vmatmul.mubr.bf16.gmra.mxu0 %v1247
        %v1347 = vpop.f32.mrf.mxu0
        %v1348 = vadd.f32 %v1264, %v1347
        %v1349 = vpop.f32.mrf.mxu0
        %v1350 = vpop.f32.mrf.mxu0
        %v1351 = vadd.f32 %v1264, %v1350
        %v1352 = vpop.f32.mrf.mxu0
        %1353 = vdwg.mxu0
        %1354 = vst [vmem:[%s325 + $0x10] sm:$0xff] %v1348
        %1355 = vst [vmem:[%s325 + $0x30] sm:$0xff] %v1351
        %v1356 = vadd.f32 %v931, %v1128
        %v1357 = vadd.f32 %v935, %v1132
        %v1358 = vmax.f32 %v1356, 0.0
        %v1359 = vmax.f32 %v1357, 0.0
        %v1360 = vpack.c.bf16 %v1359, %v1358
        %v1361 = vld [vmem:[#allocation8 + $0x100] sm:$0xf]
        %v1362 = vld [vmem:[#allocation8 + $0x104] sm:$0xf]
        %v1363 = vld [vmem:[#allocation8 + $0x108] sm:$0xf]
        %v1364 = vld [vmem:[#allocation8 + $0x10c] sm:$0xf]
        %v1365 = vld [vmem:[#allocation8 + $0x110] sm:$0xf]
        %v1366 = vld [vmem:[#allocation8 + $0x114] sm:$0xf]
        %v1367 = vld [vmem:[#allocation8 + $0x118] sm:$0xf]
        %v1368 = vld [vmem:[#allocation8 + $0x11c] sm:$0xf]
        %v1369 = vld [vmem:[#allocation8 + $0x120] sm:$0xf]
        %v1370 = vld [vmem:[#allocation8 + $0x124] sm:$0xf]
        %v1371 = vld [vmem:[#allocation8 + $0x128] sm:$0xf]
        %v1372 = vld [vmem:[#allocation8 + $0x12c] sm:$0xf]
        %v1373 = vld [vmem:[#allocation8 + $0x130] sm:$0xf]
        %v1374 = vld [vmem:[#allocation8 + $0x134] sm:$0xf]
        %v1375 = vld [vmem:[#allocation8 + $0x138] sm:$0xf]
        %v1376 = vld [vmem:[#allocation8 + $0x13c] sm:$0xf]
        %v1377 = vld [vmem:[#allocation10 + $0x7] ss:$0 sm:$0xff]
        %v1394 = vunpack.c.l.b16 %v1361
        %v1395 = vunpack.c.l.b16 %v1362
        %v1396 = vunpack.c.l.b16 %v1363
        %v1397 = vunpack.c.l.b16 %v1364
        %v1398 = vunpack.c.l.b16 %v1365
        %v1399 = vunpack.c.l.b16 %v1366
        %v1400 = vunpack.c.l.b16 %v1367
        %v1401 = vunpack.c.l.b16 %v1368
        %v1402 = vunpack.c.l.b16 %v1369
        %v1403 = vunpack.c.l.b16 %v1370
        %v1404 = vunpack.c.l.b16 %v1371
        %v1405 = vunpack.c.l.b16 %v1372
        %v1406 = vunpack.c.l.b16 %v1373
        %v1407 = vunpack.c.l.b16 %v1374
        %v1408 = vunpack.c.l.b16 %v1375
        %v1409 = vunpack.c.l.b16 %v1376
        %v1410 = vpack.c.b16 %v1395, %v1394
        %v1411 = vpack.c.b16 %v1397, %v1396
        %v1412 = vpack.c.b16 %v1399, %v1398
        %v1413 = vpack.c.b16 %v1401, %v1400
        %v1414 = vpack.c.b16 %v1403, %v1402
        %v1415 = vpack.c.b16 %v1405, %v1404
        %v1416 = vpack.c.b16 %v1407, %v1406
        %v1417 = vpack.c.b16 %v1409, %v1408
        %1426 = vmatprep.subr.bf16.mxu0 0
        %1427 = vmatpush1.bf16.msra.mxu0 %v1417
        %1428 = vmatprep.subr.bf16.mxu0 0
        %1429 = vmatpush1.bf16.msra.mxu0 %v1416
        %1430 = vmatprep.subr.bf16.mxu0 0
        %1431 = vmatpush1.bf16.msra.mxu0 %v1415
        %1432 = vmatprep.subr.bf16.mxu0 0
        %1433 = vmatpush1.bf16.msra.mxu0 %v1414
        %1434 = vmatprep.subr.bf16.mxu0 0
        %1435 = vmatpush1.bf16.msra.mxu0 %v1413
        %1436 = vmatprep.subr.bf16.mxu0 0
        %1437 = vmatpush1.bf16.msra.mxu0 %v1412
        %1438 = vmatprep.subr.bf16.mxu0 0
        %1439 = vmatpush1.bf16.msra.mxu0 %v1411
        %1440 = vmatprep.subr.bf16.mxu0 0
        %1441 = vmatpush1.bf16.msra.mxu0 %v1410
        %1442 = vmatprep.subr.bf16.mxu0 0
        %1443 = vmatpush2.bf16.msra.mxu0 0
        %1444 = vmatprep.subr.bf16.mxu0 0
        %1445 = vmatpush2.bf16.msra.mxu0 0
        %1446 = vmatprep.subr.bf16.mxu0 0
        %1447 = vmatpush2.bf16.msra.mxu0 0
        %1448 = vmatprep.subr.bf16.mxu0 0
        %1449 = vmatpush2.bf16.msra.mxu0 0
        %1450 = vmatprep.subr.bf16.mxu0 0
        %1451 = vmatpush2.bf16.msra.mxu0 0
        %1452 = vmatprep.subr.bf16.mxu0 0
        %1453 = vmatpush2.bf16.msra.mxu0 0
        %1454 = vmatprep.subr.bf16.mxu0 0
        %1455 = vmatpush2.bf16.msra.mxu0 0
        %1456 = vmatprep.subr.bf16.mxu0 0
        %1457 = vmatpush2.bf16.msra.mxu0 0
        %1458 = vmatprep.mubr.bf16.mxu0 0
        %1459 = vmatmul.mubr.bf16.gmra.mxu0 %v1360
        %v1460 = vpop.f32.mrf.mxu0
        %v1461 = vadd.f32 %v1377, %v1460
        %v1462 = vpop.f32.mrf.mxu0
        %v1463 = vpop.f32.mrf.mxu0
        %v1464 = vadd.f32 %v1377, %v1463
        %v1465 = vpop.f32.mrf.mxu0
        %1466 = vdwg.mxu0
        %v1467 = vadd.f32 %v1461, %v972
        %v1468 = vadd.f32 %v1464, %v975
        %v1469 = vadd.f32 %v1467, %v1130
        %v1470 = vadd.f32 %v1468, %v1134
        %v1471 = vmax.f32 %v1469, 0.0
        %v1472 = vmax.f32 %v1470, 0.0
        %v1473 = vpack.c.bf16 %v1472, %v1471
        %v1474 = vld [vmem:[#allocation8 + $0x140] sm:$0xf]
        %v1475 = vld [vmem:[#allocation8 + $0x144] sm:$0xf]
        %v1476 = vld [vmem:[#allocation8 + $0x148] sm:$0xf]
        %v1477 = vld [vmem:[#allocation8 + $0x14c] sm:$0xf]
        %v1478 = vld [vmem:[#allocation8 + $0x150] sm:$0xf]
        %v1479 = vld [vmem:[#allocation8 + $0x154] sm:$0xf]
        %v1480 = vld [vmem:[#allocation8 + $0x158] sm:$0xf]
        %v1481 = vld [vmem:[#allocation8 + $0x15c] sm:$0xf]
        %v1482 = vld [vmem:[#allocation8 + $0x160] sm:$0xf]
        %v1483 = vld [vmem:[#allocation8 + $0x164] sm:$0xf]
        %v1484 = vld [vmem:[#allocation8 + $0x168] sm:$0xf]
        %v1485 = vld [vmem:[#allocation8 + $0x16c] sm:$0xf]
        %v1486 = vld [vmem:[#allocation8 + $0x170] sm:$0xf]
        %v1487 = vld [vmem:[#allocation8 + $0x174] sm:$0xf]
        %v1488 = vld [vmem:[#allocation8 + $0x178] sm:$0xf]
        %v1489 = vld [vmem:[#allocation8 + $0x17c] sm:$0xf]
        %v1490 = vld [vmem:[#allocation10 + $0x18] ss:$0 sm:$0xff]
        %v1507 = vunpack.c.l.b16 %v1474
        %v1508 = vunpack.c.l.b16 %v1475
        %v1509 = vunpack.c.l.b16 %v1476
        %v1510 = vunpack.c.l.b16 %v1477
        %v1511 = vunpack.c.l.b16 %v1478
        %v1512 = vunpack.c.l.b16 %v1479
        %v1513 = vunpack.c.l.b16 %v1480
        %v1514 = vunpack.c.l.b16 %v1481
        %v1515 = vunpack.c.l.b16 %v1482
        %v1516 = vunpack.c.l.b16 %v1483
        %v1517 = vunpack.c.l.b16 %v1484
        %v1518 = vunpack.c.l.b16 %v1485
        %v1519 = vunpack.c.l.b16 %v1486
        %v1520 = vunpack.c.l.b16 %v1487
        %v1521 = vunpack.c.l.b16 %v1488
        %v1522 = vunpack.c.l.b16 %v1489
        %v1523 = vpack.c.b16 %v1508, %v1507
        %v1524 = vpack.c.b16 %v1510, %v1509
        %v1525 = vpack.c.b16 %v1512, %v1511
        %v1526 = vpack.c.b16 %v1514, %v1513
        %v1527 = vpack.c.b16 %v1516, %v1515
        %v1528 = vpack.c.b16 %v1518, %v1517
        %v1529 = vpack.c.b16 %v1520, %v1519
        %v1530 = vpack.c.b16 %v1522, %v1521
        %1539 = vmatprep.subr.bf16.mxu0 0
        %1540 = vmatpush1.bf16.msra.mxu0 %v1530
        %1541 = vmatprep.subr.bf16.mxu0 0
        %1542 = vmatpush1.bf16.msra.mxu0 %v1529
        %1543 = vmatprep.subr.bf16.mxu0 0
        %1544 = vmatpush1.bf16.msra.mxu0 %v1528
        %1545 = vmatprep.subr.bf16.mxu0 0
        %1546 = vmatpush1.bf16.msra.mxu0 %v1527
        %1547 = vmatprep.subr.bf16.mxu0 0
        %1548 = vmatpush1.bf16.msra.mxu0 %v1526
        %1549 = vmatprep.subr.bf16.mxu0 0
        %1550 = vmatpush1.bf16.msra.mxu0 %v1525
        %1551 = vmatprep.subr.bf16.mxu0 0
        %1552 = vmatpush1.bf16.msra.mxu0 %v1524
        %1553 = vmatprep.subr.bf16.mxu0 0
        %1554 = vmatpush1.bf16.msra.mxu0 %v1523
        %1555 = vmatprep.subr.bf16.mxu0 0
        %1556 = vmatpush2.bf16.msra.mxu0 0
        %1557 = vmatprep.subr.bf16.mxu0 0
        %1558 = vmatpush2.bf16.msra.mxu0 0
        %1559 = vmatprep.subr.bf16.mxu0 0
        %1560 = vmatpush2.bf16.msra.mxu0 0
        %1561 = vmatprep.subr.bf16.mxu0 0
        %1562 = vmatpush2.bf16.msra.mxu0 0
        %1563 = vmatprep.subr.bf16.mxu0 0
        %1564 = vmatpush2.bf16.msra.mxu0 0
        %1565 = vmatprep.subr.bf16.mxu0 0
        %1566 = vmatpush2.bf16.msra.mxu0 0
        %1567 = vmatprep.subr.bf16.mxu0 0
        %1568 = vmatpush2.bf16.msra.mxu0 0
        %1569 = vmatprep.subr.bf16.mxu0 0
        %1570 = vmatpush2.bf16.msra.mxu0 0
        %1571 = vmatprep.mubr.bf16.mxu0 0
        %1572 = vmatmul.mubr.bf16.gmra.mxu0 %v1473
        %v1573 = vpop.f32.mrf.mxu0
        %v1574 = vadd.f32 %v1490, %v1573
        %v1575 = vpop.f32.mrf.mxu0
        %v1576 = vpop.f32.mrf.mxu0
        %v1577 = vadd.f32 %v1490, %v1576
        %v1578 = vpop.f32.mrf.mxu0
        %1579 = vdwg.mxu0
        %v1580 = vmax.f32 %v1574, 0.0
        %v1581 = vmax.f32 %v1577, 0.0
        %v1582 = vpack.c.bf16 %v1581, %v1580
        %v1583 = vld [vmem:[#allocation8 + $0x180] sm:$0xf]
        %v1584 = vld [vmem:[#allocation8 + $0x184] sm:$0xf]
        %v1585 = vld [vmem:[#allocation8 + $0x188] sm:$0xf]
        %v1586 = vld [vmem:[#allocation8 + $0x18c] sm:$0xf]
        %v1587 = vld [vmem:[#allocation8 + $0x190] sm:$0xf]
        %v1588 = vld [vmem:[#allocation8 + $0x194] sm:$0xf]
        %v1589 = vld [vmem:[#allocation8 + $0x198] sm:$0xf]
        %v1590 = vld [vmem:[#allocation8 + $0x19c] sm:$0xf]
        %v1591 = vld [vmem:[#allocation8 + $0x1a0] sm:$0xf]
        %v1592 = vld [vmem:[#allocation8 + $0x1a4] sm:$0xf]
        %v1593 = vld [vmem:[#allocation8 + $0x1a8] sm:$0xf]
        %v1594 = vld [vmem:[#allocation8 + $0x1ac] sm:$0xf]
        %v1595 = vld [vmem:[#allocation8 + $0x1b0] sm:$0xf]
        %v1596 = vld [vmem:[#allocation8 + $0x1b4] sm:$0xf]
        %v1597 = vld [vmem:[#allocation8 + $0x1b8] sm:$0xf]
        %v1598 = vld [vmem:[#allocation8 + $0x1bc] sm:$0xf]
        %v1599 = vld [vmem:[#allocation10 + $0x19] ss:$0 sm:$0xff]
        %v1616 = vunpack.c.l.b16 %v1583
        %v1617 = vunpack.c.l.b16 %v1584
        %v1618 = vunpack.c.l.b16 %v1585
        %v1619 = vunpack.c.l.b16 %v1586
        %v1620 = vunpack.c.l.b16 %v1587
        %v1621 = vunpack.c.l.b16 %v1588
        %v1622 = vunpack.c.l.b16 %v1589
        %v1623 = vunpack.c.l.b16 %v1590
        %v1624 = vunpack.c.l.b16 %v1591
        %v1625 = vunpack.c.l.b16 %v1592
        %v1626 = vunpack.c.l.b16 %v1593
        %v1627 = vunpack.c.l.b16 %v1594
        %v1628 = vunpack.c.l.b16 %v1595
        %v1629 = vunpack.c.l.b16 %v1596
        %v1630 = vunpack.c.l.b16 %v1597
        %v1631 = vunpack.c.l.b16 %v1598
        %v1632 = vpack.c.b16 %v1617, %v1616
        %v1633 = vpack.c.b16 %v1619, %v1618
        %v1634 = vpack.c.b16 %v1621, %v1620
        %v1635 = vpack.c.b16 %v1623, %v1622
        %v1636 = vpack.c.b16 %v1625, %v1624
        %v1637 = vpack.c.b16 %v1627, %v1626
        %v1638 = vpack.c.b16 %v1629, %v1628
        %v1639 = vpack.c.b16 %v1631, %v1630
        %1648 = vmatprep.subr.bf16.mxu0 0
        %1649 = vmatpush1.bf16.msra.mxu0 %v1639
        %1650 = vmatprep.subr.bf16.mxu0 0
        %1651 = vmatpush1.bf16.msra.mxu0 %v1638
        %1652 = vmatprep.subr.bf16.mxu0 0
        %1653 = vmatpush1.bf16.msra.mxu0 %v1637
        %1654 = vmatprep.subr.bf16.mxu0 0
        %1655 = vmatpush1.bf16.msra.mxu0 %v1636
        %1656 = vmatprep.subr.bf16.mxu0 0
        %1657 = vmatpush1.bf16.msra.mxu0 %v1635
        %1658 = vmatprep.subr.bf16.mxu0 0
        %1659 = vmatpush1.bf16.msra.mxu0 %v1634
        %1660 = vmatprep.subr.bf16.mxu0 0
        %1661 = vmatpush1.bf16.msra.mxu0 %v1633
        %1662 = vmatprep.subr.bf16.mxu0 0
        %1663 = vmatpush1.bf16.msra.mxu0 %v1632
        %1664 = vmatprep.subr.bf16.mxu0 0
        %1665 = vmatpush2.bf16.msra.mxu0 0
        %1666 = vmatprep.subr.bf16.mxu0 0
        %1667 = vmatpush2.bf16.msra.mxu0 0
        %1668 = vmatprep.subr.bf16.mxu0 0
        %1669 = vmatpush2.bf16.msra.mxu0 0
        %1670 = vmatprep.subr.bf16.mxu0 0
        %1671 = vmatpush2.bf16.msra.mxu0 0
        %1672 = vmatprep.subr.bf16.mxu0 0
        %1673 = vmatpush2.bf16.msra.mxu0 0
        %1674 = vmatprep.subr.bf16.mxu0 0
        %1675 = vmatpush2.bf16.msra.mxu0 0
        %1676 = vmatprep.subr.bf16.mxu0 0
        %1677 = vmatpush2.bf16.msra.mxu0 0
        %1678 = vmatprep.subr.bf16.mxu0 0
        %1679 = vmatpush2.bf16.msra.mxu0 0
        %1680 = vmatprep.mubr.bf16.mxu0 0
        %1681 = vmatmul.mubr.bf16.gmra.mxu0 %v1582
        %v1682 = vpop.f32.mrf.mxu0
        %v1683 = vadd.f32 %v1599, %v1682
        %v1684 = vpop.f32.mrf.mxu0
        %v1685 = vpop.f32.mrf.mxu0
        %v1686 = vadd.f32 %v1599, %v1685
        %v1687 = vpop.f32.mrf.mxu0
        %1688 = vdwg.mxu0
        %v1689 = vadd.f32 %v1683, %v1471
        %v1690 = vadd.f32 %v1686, %v1472
        %v1691 = vmax.f32 %v1689, 0.0
        %v1692 = vmax.f32 %v1690, 0.0
        %v1693 = vpack.c.bf16 %v1692, %v1691
        %v1694 = vld [vmem:[#allocation8 + $0x1c0] sm:$0xf]
        %v1695 = vld [vmem:[#allocation8 + $0x1c4] sm:$0xf]
        %v1696 = vld [vmem:[#allocation8 + $0x1c8] sm:$0xf]
        %v1697 = vld [vmem:[#allocation8 + $0x1cc] sm:$0xf]
        %v1698 = vld [vmem:[#allocation8 + $0x1d0] sm:$0xf]
        %v1699 = vld [vmem:[#allocation8 + $0x1d4] sm:$0xf]
        %v1700 = vld [vmem:[#allocation8 + $0x1d8] sm:$0xf]
        %v1701 = vld [vmem:[#allocation8 + $0x1dc] sm:$0xf]
        %v1702 = vld [vmem:[#allocation8 + $0x1e0] sm:$0xf]
        %v1703 = vld [vmem:[#allocation8 + $0x1e4] sm:$0xf]
        %v1704 = vld [vmem:[#allocation8 + $0x1e8] sm:$0xf]
        %v1705 = vld [vmem:[#allocation8 + $0x1ec] sm:$0xf]
        %v1706 = vld [vmem:[#allocation8 + $0x1f0] sm:$0xf]
        %v1707 = vld [vmem:[#allocation8 + $0x1f4] sm:$0xf]
        %v1708 = vld [vmem:[#allocation8 + $0x1f8] sm:$0xf]
        %v1709 = vld [vmem:[#allocation8 + $0x1fc] sm:$0xf]
        %v1710 = vld [vmem:[#allocation10 + $0x1a] ss:$0 sm:$0xff]
        %v1727 = vunpack.c.l.b16 %v1694
        %v1728 = vunpack.c.l.b16 %v1695
        %v1729 = vunpack.c.l.b16 %v1696
        %v1730 = vunpack.c.l.b16 %v1697
        %v1731 = vunpack.c.l.b16 %v1698
        %v1732 = vunpack.c.l.b16 %v1699
        %v1733 = vunpack.c.l.b16 %v1700
        %v1734 = vunpack.c.l.b16 %v1701
        %v1735 = vunpack.c.l.b16 %v1702
        %v1736 = vunpack.c.l.b16 %v1703
        %v1737 = vunpack.c.l.b16 %v1704
        %v1738 = vunpack.c.l.b16 %v1705
        %v1739 = vunpack.c.l.b16 %v1706
        %v1740 = vunpack.c.l.b16 %v1707
        %v1741 = vunpack.c.l.b16 %v1708
        %v1742 = vunpack.c.l.b16 %v1709
        %v1743 = vpack.c.b16 %v1728, %v1727
        %v1744 = vpack.c.b16 %v1730, %v1729
        %v1745 = vpack.c.b16 %v1732, %v1731
        %v1746 = vpack.c.b16 %v1734, %v1733
        %v1747 = vpack.c.b16 %v1736, %v1735
        %v1748 = vpack.c.b16 %v1738, %v1737
        %v1749 = vpack.c.b16 %v1740, %v1739
        %v1750 = vpack.c.b16 %v1742, %v1741
        %1759 = vmatprep.subr.bf16.mxu0 0
        %1760 = vmatpush1.bf16.msra.mxu0 %v1750
        %1761 = vmatprep.subr.bf16.mxu0 0
        %1762 = vmatpush1.bf16.msra.mxu0 %v1749
        %1763 = vmatprep.subr.bf16.mxu0 0
        %1764 = vmatpush1.bf16.msra.mxu0 %v1748
        %1765 = vmatprep.subr.bf16.mxu0 0
        %1766 = vmatpush1.bf16.msra.mxu0 %v1747
        %1767 = vmatprep.subr.bf16.mxu0 0
        %1768 = vmatpush1.bf16.msra.mxu0 %v1746
        %1769 = vmatprep.subr.bf16.mxu0 0
        %1770 = vmatpush1.bf16.msra.mxu0 %v1745
        %1771 = vmatprep.subr.bf16.mxu0 0
        %1772 = vmatpush1.bf16.msra.mxu0 %v1744
        %1773 = vmatprep.subr.bf16.mxu0 0
        %1774 = vmatpush1.bf16.msra.mxu0 %v1743
        %1775 = vmatprep.subr.bf16.mxu0 0
        %1776 = vmatpush2.bf16.msra.mxu0 0
        %1777 = vmatprep.subr.bf16.mxu0 0
        %1778 = vmatpush2.bf16.msra.mxu0 0
        %1779 = vmatprep.subr.bf16.mxu0 0
        %1780 = vmatpush2.bf16.msra.mxu0 0
        %1781 = vmatprep.subr.bf16.mxu0 0
        %1782 = vmatpush2.bf16.msra.mxu0 0
        %1783 = vmatprep.subr.bf16.mxu0 0
        %1784 = vmatpush2.bf16.msra.mxu0 0
        %1785 = vmatprep.subr.bf16.mxu0 0
        %1786 = vmatpush2.bf16.msra.mxu0 0
        %1787 = vmatprep.subr.bf16.mxu0 0
        %1788 = vmatpush2.bf16.msra.mxu0 0
        %1789 = vmatprep.subr.bf16.mxu0 0
        %1790 = vmatpush2.bf16.msra.mxu0 0
        %1791 = vmatprep.mubr.bf16.mxu0 0
        %1792 = vmatmul.mubr.bf16.gmra.mxu0 %v1693
        %v1793 = vpop.f32.mrf.mxu0
        %v1794 = vadd.f32 %v1710, %v1793
        %v1795 = vpop.f32.mrf.mxu0
        %v1796 = vpop.f32.mrf.mxu0
        %v1797 = vadd.f32 %v1710, %v1796
        %v1798 = vpop.f32.mrf.mxu0
        %1799 = vdwg.mxu0
        %1800 = vst [vmem:[%s325] sm:$0xff] %v1794
        %1801 = vst [vmem:[%s325 + $0x20] sm:$0xff] %v1797
        %s1802 = sand.u32 %s149, 1
        %s1803 = scalar_lea.sflag [#allocation4], %s1802
        %s1804 = sand.u32 %s149, 1
        %s1805 = smul.addr %s1804, 64
        %s1806 = scalar_lea.vmem [#allocation11], %s1805
        // Predicated region
        $region61: #{tpu_custom_call.1} parent=39 // pred_check
          %p1807 = pneg %p159
        $region62: #{tpu_custom_call.1} parent=39 // pred_check_branch
          %1809 = sbr.rel (%p1807) target = $region64
        $region63: #{tpu_custom_call.1} parent=39 // pred_region
          %s1810 = smul.u32 2, %s26
          %s1812 = ssub.s32 1024, 1024
          %1813 = vsyncadd %s1803, %s1812
          %s1814 = smul.addr %s1810, 4
          %s1815 = smul.addr %s1814, 128
          %s1816 = scalar_lea.hbm %s5, %s1815
          %s1817 = sshll.u32 %s1806, 4
          %s1818 = int_to_ptr.vmem [resolvable:$true] %s1817
          %1823 = dma.vmem_to_hbm [thread:$0]  %s1818, 1024, %s1816, %s1803, 512, 512, 32
        $region64: #{tpu_custom_call.1} parent=39 // pred_fallthru
          _
      $region40: #{tpu_custom_call.1} parent=5 // pred_fallthru
        _
      %p1824 = scmp.le.s32.totalorder 2, %s21
      // Predicated region
      $region65: #{tpu_custom_call.1} parent=5 // pred_check
        %p1825 = pneg %p1824
      $region66: #{tpu_custom_call.1} parent=5 // pred_check_branch
        %1827 = sbr.rel (%p1825) target = $region68
      $region67: #{tpu_custom_call.1} parent=5 // pred_region
        %s1828 = ssub.s32 %s21, 2
        // Predicated region
        $region69: #{tpu_custom_call.1} parent=67 // pred_check
          %p1829 = pneg %p165
        $region70: #{tpu_custom_call.1} parent=67 // pred_check_branch
          %1831 = sbr.rel (%p1829) target = $region72
        $region71: #{tpu_custom_call.1} parent=67 // pred_region
          %s1832 = sand.u32 %s150, 1
          %s1833 = scalar_lea.sflag [#allocation4], %s1832
          %s1834 = sand.u32 %s150, 1
          %s1835 = smul.addr %s1834, 64
          %s1836 = scalar_lea.vmem [#allocation11], %s1835
          %1837 = dma.done %s1833, 1024
        $region72: #{tpu_custom_call.1} parent=67 // pred_fallthru
          _
      $region68: #{tpu_custom_call.1} parent=5 // pred_fallthru
        _
    $region6: #{tpu_custom_call.1} parent=1 // loop_footer
      %s25 = sadd.s32 1, %s21
    $region7: #{tpu_custom_call.1} parent=1 // loop_footer_branch
      %20 = sbr.rel target = $region3
    $region8: #{tpu_custom_call.1} parent=1 // loop_exit
      _
    %1838 = vsyncpa [#allocation3], 1
    %s1839 = scalar_lea.sflag [#allocation3], 1
    %1840 = vsyncpa %s1839, 1
    %1841 = vsyncpa [#allocation6], 1
    %s1842 = scalar_lea.sflag [#allocation6], 1
    %1843 = vsyncpa %s1842, 1
    %1844 = vsyncpa [#allocation9], 1
    %1845 = vsyncpa [#allocation4], 1
    %s1846 = scalar_lea.sflag [#allocation4], 1
    %1847 = vsyncpa %s1846, 1

</llo_original>
